<compile_context>
chip_gen: v5e
topology: v5e:2x2
jax: 0.10.0
libtpu: 0.0.40
codegen_flags: <defaults>
</compile_context>

<pallas_src>
import jax
import jax.numpy as jnp
from jax import lax
from jax.experimental import pallas as pl
from jax.experimental.pallas import tpu as pltpu


# ----------------------------------------------------------------------------
# helpers
# ----------------------------------------------------------------------------
def _round_up(x, m):
    return (x + m - 1) // m * m


def _pad_to(a, shape):
    return jnp.pad(a, [(0, s - d) for d, s in zip(a.shape, shape)])


def _vmem_capacity_bytes():
    try:
        return int(pltpu.get_tpu_info().vmem_capacity_bytes)
    except Exception:
        return 64 << 20  # conservative: v7x per-TC VMEM


_VMEM = pl.BlockSpec(memory_space=pltpu.MemorySpace.VMEM)


def _sigmoid(x):
    # exp on EUP + approximate reciprocal (EUP slot) instead of a VPU divide.
    return pl.reciprocal(1.0 + jnp.exp(-x), approx=True)


# ----------------------------------------------------------------------------
# fused kernel: all LSTM layers + final FC in one pallas_call
# ----------------------------------------------------------------------------
def _make_fused_lstm_kernel(num_layers, unroll, has_seq_scr):
    def kernel(*refs):
        x_ref = refs[0]                              # (T, Bp, Dp)  bf16
        layer_refs = refs[1:1 + 3 * num_layers]      # per layer: w_ih bf16, w_hh bf16, b f32
        fcw_ref = refs[1 + 3 * num_layers]           # (Hp, Cp)     f32
        fcb_ref = refs[2 + 3 * num_layers]           # (1, Cp)      f32
        out_ref = refs[3 + 3 * num_layers]           # (Bp, Cp)     f32
        scratch = refs[4 + 3 * num_layers:]
        if has_seq_scr:
            seq_scr, proj_scr = scratch              # bf16 inter-layer seq, f32 proj slab
        else:
            (proj_scr,) = scratch
            seq_scr = None

        T, Bp, _ = x_ref.shape
        Hp = proj_scr.shape[2] // 4

        h_last = None
        for layer in range(num_layers):              # static unroll over layers
            w_ih_ref = layer_refs[3 * layer + 0]
            w_hh_ref = layer_refs[3 * layer + 1]
            b_ref = layer_refs[3 * layer + 2]

            # ---- (1) time-parallel input projection: ONE big bf16 MXU matmul over
            #          all T, bias folded in (no per-step broadcast in the loop).
            if layer == 0:
                inp2d = x_ref[...].reshape(T * Bp, x_ref.shape[2])       # bf16
            else:
                inp2d = seq_scr[...].reshape(T * Bp, Hp)                 # already bf16
            proj_scr[...] = (
                jnp.dot(inp2d, w_ih_ref[...], preferred_element_type=jnp.float32)
                + b_ref[...]
            ).reshape(T, Bp, 4 * Hp)

            # ---- (2) recurrence: h/c live in vregs (fori_loop carry); small bf16
            #          recurrent matmul (f32 accumulate) + f32 gate math per step.
            write_seq = has_seq_scr and (layer < num_layers - 1)

            def step(t, carry, write_seq=write_seq, w_hh_ref=w_hh_ref):
                h, c = carry
                gates = proj_scr[t] + jnp.dot(
                    h.astype(jnp.bfloat16), w_hh_ref[...],
                    preferred_element_type=jnp.float32)
                # gate blocks are Hp(=multiple of 128)-lane aligned -> free slices
                i_g = _sigmoid(gates[:, 0 * Hp:1 * Hp])
                f_g = _sigmoid(gates[:, 1 * Hp:2 * Hp])
                g_g = jnp.tanh(gates[:, 2 * Hp:3 * Hp])
                o_g = _sigmoid(gates[:, 3 * Hp:4 * Hp])
                c_new = f_g * c + i_g * g_g
                h_new = o_g * jnp.tanh(c_new)
                if write_seq:
                    seq_scr[t] = h_new.astype(jnp.bfloat16)   # feeds next layer (VMEM only)
                return h_new, c_new

            zero = jnp.zeros((Bp, Hp), jnp.float32)            # h0 = c0 = 0 (PyTorch)
            h_last, _ = lax.fori_loop(0, T, step, (zero, zero), unroll=unroll)

        # ---- (3) final FC on the last hidden state; lane-dense (Bp, Cp) store.
        out_ref[...] = (
            jnp.dot(h_last, fcw_ref[...], preferred_element_type=jnp.float32)
            + fcb_ref[...]
        ).astype(out_ref.dtype)

    return kernel


# ----------------------------------------------------------------------------
# wrapper: pad/layout params, launch the fused kernel
# ----------------------------------------------------------------------------
def lstm_model_forward(x, params):
    """x: (B, T, input_size) batch-first (PyTorch convention) -> (B, num_classes)."""
    B, T, D = x.shape
    H = params["lstm"][0]["w_hh"].shape[0]
    C = params["fc_w"].shape[1]
    L = len(params["lstm"])

    Bp = _round_up(B, 8)           # f32 sublane pad for state/gates
    if (T * Bp) % 16 != 0:         # keep bf16 projection LHS leading dim tile-aligned
        Bp = _round_up(B, 16)
    Dp = _round_up(D, 128)         # lane pad of the input feature dim
    Hp = _round_up(H, 128)         # lane pad of EACH gate block
    Cp = _round_up(C, 128)         # lane pad of the FC output
    G = 4 * Hp

    # Time-major, zero-pad, bf16 operand for the big projection matmul.
    x_tm = jnp.transpose(x, (1, 0, 2))                               # (T, B, D)
    x_pad = _pad_to(x_tm, (T, Bp, Dp)).astype(jnp.bfloat16)

    kernel_args = [x_pad]
    for li, layer in enumerate(params["lstm"]):
        d_in = layer["w_ih"].shape[0]
        d_in_pad = Dp if li == 0 else Hp
        # per-gate lane padding: (d_in, 4H) -> (d_in_pad, 4, Hp) -> (d_in_pad, 4*Hp)
        w_ih = _pad_to(layer["w_ih"].reshape(d_in, 4, H),
                       (d_in_pad, 4, Hp)).reshape(d_in_pad, G).astype(jnp.bfloat16)
        w_hh = _pad_to(layer["w_hh"].reshape(H, 4, H),
                       (Hp, 4, Hp)).reshape(Hp, G).astype(jnp.bfloat16)
        b = _pad_to(layer["b"].reshape(1, 4, H), (1, 4, Hp)).reshape(1, G)
        kernel_args += [w_ih, w_hh, b]

    fc_w = _pad_to(params["fc_w"], (Hp, Cp))
    fc_b = _pad_to(params["fc_b"], (1, Cp))
    kernel_args += [fc_w, fc_b]

    has_seq_scr = L > 1
    scratch_shapes = []
    if has_seq_scr:
        scratch_shapes.append(pltpu.VMEM((T, Bp, Hp), jnp.bfloat16))  # inter-layer seq (bf16)
    scratch_shapes.append(pltpu.VMEM((T, Bp, G), jnp.float32))        # input projection slab

    # VMEM budget from actual residents + headroom, clamped by this generation's
    # physical VMEM (v7x has only 64 MiB per TC).
    scratch_bytes = 4 * T * Bp * G + (2 * T * Bp * Hp if has_seq_scr else 0)
    io_bytes = sum(int(a.size) * a.dtype.itemsize for a in kernel_args) + 4 * Bp * Cp
    resident = scratch_bytes + io_bytes
    headroom = 8 << 20
    vmem_budget = int(min(2 * resident + headroom, (3 * _vmem_capacity_bytes()) // 4))

    # TODO(synk): for long sequences / large batches, tile the time axis of the
    # projection with a grid ("arbitrary" time chunks, proj_scr sized to 2 chunks)
    # and add a "parallel" batch axis so v7x's second TensorCore contributes; at
    # these toy shapes everything (<1 MiB) is VMEM-resident, so one grid point wins.
    unroll = T if T <= 8 else 4

    out_pad = pl.pallas_call(
        _make_fused_lstm_kernel(L, unroll, has_seq_scr),
        out_shape=jax.ShapeDtypeStruct((Bp, Cp), jnp.float32),
        in_specs=[_VMEM] * len(kernel_args),
        out_specs=_VMEM,
        scratch_shapes=scratch_shapes,
        compiler_params=pltpu.CompilerParams(vmem_limit_bytes=vmem_budget),
    )(*kernel_args)

    return out_pad[:B, :C]


# ----------------------------------------------------------------------------
# parameter init (PyTorch-like U(-1/sqrt(H), 1/sqrt(H)), gate order i,f,g,o)
# ----------------------------------------------------------------------------
def init_params(key, input_size, hidden_size, num_layers, num_classes):
    params = {"lstm": [], "fc_w": None, "fc_b": None}
    scale = 1.0 / jnp.sqrt(hidden_size)
    for layer in range(num_layers):
        d_in = input_size if layer == 0 else hidden_size
        key, k1, k2, k3, k4 = jax.random.split(key, 5)
        w_ih = jax.random.uniform(k1, (d_in, 4 * hidden_size), jnp.float32, -scale, scale)
        w_hh = jax.random.uniform(k2, (hidden_size, 4 * hidden_size), jnp.float32, -scale, scale)
        b_ih = jax.random.uniform(k3, (1, 4 * hidden_size), jnp.float32, -scale, scale)
        b_hh = jax.random.uniform(k4, (1, 4 * hidden_size), jnp.float32, -scale, scale)
        params["lstm"].append({"w_ih": w_ih, "w_hh": w_hh, "b": b_ih + b_hh})
    key, k1, k2 = jax.random.split(key, 3)
    params["fc_w"] = jax.random.uniform(k1, (hidden_size, num_classes), jnp.float32, -scale, scale)
    params["fc_b"] = jax.random.uniform(k2, (1, num_classes), jnp.float32, -scale, scale)
    return params


# ----------------------------------------------------------------------------
# pure-JAX f32 reference (numerical sanity check vs. the bf16-matmul kernel)
# ----------------------------------------------------------------------------
def _reference_forward(x, params):
    h_seq = jnp.transpose(x, (1, 0, 2))                      # (T, B, D)
    B = h_seq.shape[1]
    for layer in params["lstm"]:
        w_ih, w_hh, b = layer["w_ih"], layer["w_hh"], layer["b"]
        H = w_hh.shape[0]

        def step(carry, x_t):
            h, c = carry
            gates = x_t @ w_ih + h @ w_hh + b
            i_g = jax.nn.sigmoid(gates[:, 0 * H:1 * H])
            f_g = jax.nn.sigmoid(gates[:, 1 * H:2 * H])
            g_g = jnp.tanh(gates[:, 2 * H:3 * H])
            o_g = jax.nn.sigmoid(gates[:, 3 * H:4 * H])
            c = f_g * c + i_g * g_g
            h = o_g * jnp.tanh(c)
            return (h, c), h

        init = (jnp.zeros((B, H), jnp.float32), jnp.zeros((B, H), jnp.float32))
        _, h_seq = lax.scan(step, init, h_seq)
    return h_seq[-1] @ params["fc_w"] + params["fc_b"]


if __name__ == "__main__":
    # Small, module-consistent shapes.
    batch, seq_len = 2, 8
    input_size, hidden_size, num_layers, num_classes = 16, 32, 2, 10

    key = jax.random.PRNGKey(0)
    key, xkey = jax.random.split(key)
    x = jax.random.normal(xkey, (batch, seq_len, input_size), jnp.float32)
    params = init_params(key, input_size, hidden_size, num_layers, num_classes)

    out = jax.jit(lstm_model_forward)(x, params)
    jax.block_until_ready(out)
    assert out.shape == (batch, num_classes)

    ref = _reference_forward(x, params)
    max_err = float(jnp.max(jnp.abs(out - ref)))
    # bf16 MXU operands (x@W_ih, h@W_hh) vs. f32 reference -> modest tolerance.
    assert jnp.allclose(out, ref, atol=5e-2, rtol=5e-2), max_err

    print("KERNEL_OK")
</pallas_src>

<mosaic_0001>
module attributes {stable_mosaic.version = 11 : i64} {
  func.func @kernel(%arg0: memref<8x8x128xbf16, #tpu.memory_space<vmem>>, %arg1: memref<128x512xbf16, #tpu.memory_space<vmem>>, %arg2: memref<128x512xbf16, #tpu.memory_space<vmem>>, %arg3: memref<1x512xf32, #tpu.memory_space<vmem>>, %arg4: memref<128x512xbf16, #tpu.memory_space<vmem>>, %arg5: memref<128x512xbf16, #tpu.memory_space<vmem>>, %arg6: memref<1x512xf32, #tpu.memory_space<vmem>>, %arg7: memref<128x128xf32, #tpu.memory_space<vmem>>, %arg8: memref<1x128xf32, #tpu.memory_space<vmem>>, %arg9: memref<8x128xf32, #tpu.memory_space<vmem>>, %arg10: memref<8x8x128xbf16, #tpu.memory_space<vmem>>, %arg11: memref<8x8x512xf32, #tpu.memory_space<vmem>>) attributes {dimension_semantics = [], scalar_prefetch = 0 : i64, scratch_operands = 2 : i64, tpu.core_type = #tpu.core_type<tc>} {
    %c0 = arith.constant 0 : index
    %c0_0 = arith.constant 0 : index
    %c0_1 = arith.constant 0 : index
    %0 = vector.load %arg0[%c0, %c0_0, %c0_1] : memref<8x8x128xbf16, #tpu.memory_space<vmem>>, vector<8x8x128xbf16>
    %1 = vector.shape_cast %0 : vector<8x8x128xbf16> to vector<64x128xbf16>
    %c0_2 = arith.constant 0 : index
    %c0_3 = arith.constant 0 : index
    %2 = vector.load %arg1[%c0_2, %c0_3] : memref<128x512xbf16, #tpu.memory_space<vmem>>, vector<128x512xbf16>
    %cst = arith.constant dense<0.000000e+00> : vector<64x512xf32>
    %3 = tpu.matmul %1, %2, %cst {dimension_numbers = #tpu.dot_dimension_numbers<[1], [0], [0], [1], [0, 0, 1, 1], [], []>} : vector<64x128xbf16>, vector<128x512xbf16>, vector<64x512xf32> -> vector<64x512xf32>
    %c0_4 = arith.constant 0 : index
    %c0_5 = arith.constant 0 : index
    %4 = vector.load %arg3[%c0_4, %c0_5] : memref<1x512xf32, #tpu.memory_space<vmem>>, vector<1x512xf32>
    %5 = vector.broadcast %4 : vector<1x512xf32> to vector<64x512xf32>
    %6 = arith.addf %3, %5 : vector<64x512xf32>
    %7 = vector.shape_cast %6 : vector<64x512xf32> to vector<8x8x512xf32>
    %c0_6 = arith.constant 0 : index
    %c0_7 = arith.constant 0 : index
    %c0_8 = arith.constant 0 : index
    %8 = vector.load %arg11[%c0_6, %c0_7, %c0_8] : memref<8x8x512xf32, #tpu.memory_space<vmem>>, vector<8x8x512xf32>
    tpu.vector_store %arg11[%c0_6, %c0_7, %c0_8], %7 {strides = array<i32>} : memref<8x8x512xf32, #tpu.memory_space<vmem>>, vector<8x8x512xf32>,
    %cst_9 = arith.constant 0.000000e+00 : f32
    %9 = vector.broadcast %cst_9 : f32 to vector<8x128xf32>
    %c0_i32 = arith.constant 0 : i32
    %10 = arith.index_cast %c0_i32 : i32 to index
    %c0_10 = arith.constant 0 : index
    %c0_11 = arith.constant 0 : index
    %11 = vector.load %arg11[%10, %c0_10, %c0_11] : memref<8x8x512xf32, #tpu.memory_space<vmem>>, vector<1x8x512xf32>
    %12 = vector.shape_cast %11 : vector<1x8x512xf32> to vector<8x512xf32>
    %13 = arith.truncf %9 : vector<8x128xf32> to vector<8x128xbf16>
    %c0_12 = arith.constant 0 : index
    %c0_13 = arith.constant 0 : index
    %14 = vector.load %arg2[%c0_12, %c0_13] : memref<128x512xbf16, #tpu.memory_space<vmem>>, vector<128x512xbf16>
    %cst_14 = arith.constant dense<0.000000e+00> : vector<8x512xf32>
    %15 = tpu.matmul %13, %14, %cst_14 {dimension_numbers = #tpu.dot_dimension_numbers<[1], [0], [0], [1], [0, 0, 1, 1], [], []>} : vector<8x128xbf16>, vector<128x512xbf16>, vector<8x512xf32> -> vector<8x512xf32>
    %16 = arith.addf %12, %15 : vector<8x512xf32>
    %17 = vector.extract_strided_slice %16 {offsets = [0, 0], sizes = [8, 128], strides = [1, 1]} : vector<8x512xf32> to vector<8x128xf32>
    %cst_15 = arith.constant 0.000000e+00 : f32
    %18 = vector.broadcast %cst_15 : f32 to vector<8x128xf32>
    %19 = arith.subf %18, %17 : vector<8x128xf32>
    %20 = math.exp %19 : vector<8x128xf32>
    %cst_16 = arith.constant 1.000000e+00 : f32
    %21 = vector.broadcast %cst_16 : f32 to vector<8x128xf32>
    %22 = arith.addf %21, %20 : vector<8x128xf32>
    %23 = tpu.reciprocal %22 {approx = true} : vector<8x128xf32> -> vector<8x128xf32>
    %24 = vector.extract_strided_slice %16 {offsets = [0, 128], sizes = [8, 128], strides = [1, 1]} : vector<8x512xf32> to vector<8x128xf32>
    %cst_17 = arith.constant 0.000000e+00 : f32
    %25 = vector.broadcast %cst_17 : f32 to vector<8x128xf32>
    %26 = arith.subf %25, %24 : vector<8x128xf32>
    %27 = math.exp %26 : vector<8x128xf32>
    %cst_18 = arith.constant 1.000000e+00 : f32
    %28 = vector.broadcast %cst_18 : f32 to vector<8x128xf32>
    %29 = arith.addf %28, %27 : vector<8x128xf32>
    %30 = tpu.reciprocal %29 {approx = true} : vector<8x128xf32> -> vector<8x128xf32>
    %31 = vector.extract_strided_slice %16 {offsets = [0, 256], sizes = [8, 128], strides = [1, 1]} : vector<8x512xf32> to vector<8x128xf32>
    %32 = math.tanh %31 : vector<8x128xf32>
    %33 = vector.extract_strided_slice %16 {offsets = [0, 384], sizes = [8, 128], strides = [1, 1]} : vector<8x512xf32> to vector<8x128xf32>
    %cst_19 = arith.constant 0.000000e+00 : f32
    %34 = vector.broadcast %cst_19 : f32 to vector<8x128xf32>
    %35 = arith.subf %34, %33 : vector<8x128xf32>
    %36 = math.exp %35 : vector<8x128xf32>
    %cst_20 = arith.constant 1.000000e+00 : f32
    %37 = vector.broadcast %cst_20 : f32 to vector<8x128xf32>
    %38 = arith.addf %37, %36 : vector<8x128xf32>
    %39 = tpu.reciprocal %38 {approx = true} : vector<8x128xf32> -> vector<8x128xf32>
    %40 = arith.mulf %30, %9 : vector<8x128xf32>
    %41 = arith.mulf %23, %32 : vector<8x128xf32>
    %42 = arith.addf %40, %41 : vector<8x128xf32>
    %43 = math.tanh %42 : vector<8x128xf32>
    %44 = arith.mulf %39, %43 : vector<8x128xf32>
    %45 = arith.truncf %44 : vector<8x128xf32> to vector<8x128xbf16>
    %46 = arith.index_cast %c0_i32 : i32 to index
    %c0_21 = arith.constant 0 : index
    %c0_22 = arith.constant 0 : index
    %47 = vector.load %arg10[%46, %c0_21, %c0_22] : memref<8x8x128xbf16, #tpu.memory_space<vmem>>, vector<1x8x128xbf16>
    %48 = vector.shape_cast %47 : vector<1x8x128xbf16> to vector<8x128xbf16>
    %49 = vector.shape_cast %45 : vector<8x128xbf16> to vector<1x8x128xbf16>
    tpu.vector_store %arg10[%46, %c0_21, %c0_22], %49 {strides = array<i32>} : memref<8x8x128xbf16, #tpu.memory_space<vmem>>, vector<1x8x128xbf16>,
    %c1_i32 = arith.constant 1 : i32
    %50 = arith.index_cast %c1_i32 : i32 to index
    %c0_23 = arith.constant 0 : index
    %c0_24 = arith.constant 0 : index
    %51 = vector.load %arg11[%50, %c0_23, %c0_24] : memref<8x8x512xf32, #tpu.memory_space<vmem>>, vector<1x8x512xf32>
    %52 = vector.shape_cast %51 : vector<1x8x512xf32> to vector<8x512xf32>
    %53 = arith.truncf %44 : vector<8x128xf32> to vector<8x128xbf16>
    %c0_25 = arith.constant 0 : index
    %c0_26 = arith.constant 0 : index
    %54 = vector.load %arg2[%c0_25, %c0_26] : memref<128x512xbf16, #tpu.memory_space<vmem>>, vector<128x512xbf16>
    %cst_27 = arith.constant dense<0.000000e+00> : vector<8x512xf32>
    %55 = tpu.matmul %53, %54, %cst_27 {dimension_numbers = #tpu.dot_dimension_numbers<[1], [0], [0], [1], [0, 0, 1, 1], [], []>} : vector<8x128xbf16>, vector<128x512xbf16>, vector<8x512xf32> -> vector<8x512xf32>
    %56 = arith.addf %52, %55 : vector<8x512xf32>
    %57 = vector.extract_strided_slice %56 {offsets = [0, 0], sizes = [8, 128], strides = [1, 1]} : vector<8x512xf32> to vector<8x128xf32>
    %cst_28 = arith.constant 0.000000e+00 : f32
    %58 = vector.broadcast %cst_28 : f32 to vector<8x128xf32>
    %59 = arith.subf %58, %57 : vector<8x128xf32>
    %60 = math.exp %59 : vector<8x128xf32>
    %cst_29 = arith.constant 1.000000e+00 : f32
    %61 = vector.broadcast %cst_29 : f32 to vector<8x128xf32>
    %62 = arith.addf %61, %60 : vector<8x128xf32>
    %63 = tpu.reciprocal %62 {approx = true} : vector<8x128xf32> -> vector<8x128xf32>
    %64 = vector.extract_strided_slice %56 {offsets = [0, 128], sizes = [8, 128], strides = [1, 1]} : vector<8x512xf32> to vector<8x128xf32>
    %cst_30 = arith.constant 0.000000e+00 : f32
    %65 = vector.broadcast %cst_30 : f32 to vector<8x128xf32>
    %66 = arith.subf %65, %64 : vector<8x128xf32>
    %67 = math.exp %66 : vector<8x128xf32>
    %cst_31 = arith.constant 1.000000e+00 : f32
    %68 = vector.broadcast %cst_31 : f32 to vector<8x128xf32>
    %69 = arith.addf %68, %67 : vector<8x128xf32>
    %70 = tpu.reciprocal %69 {approx = true} : vector<8x128xf32> -> vector<8x128xf32>
    %71 = vector.extract_strided_slice %56 {offsets = [0, 256], sizes = [8, 128], strides = [1, 1]} : vector<8x512xf32> to vector<8x128xf32>
    %72 = math.tanh %71 : vector<8x128xf32>
    %73 = vector.extract_strided_slice %56 {offsets = [0, 384], sizes = [8, 128], strides = [1, 1]} : vector<8x512xf32> to vector<8x128xf32>
    %cst_32 = arith.constant 0.000000e+00 : f32
    %74 = vector.broadcast %cst_32 : f32 to vector<8x128xf32>
    %75 = arith.subf %74, %73 : vector<8x128xf32>
    %76 = math.exp %75 : vector<8x128xf32>
    %cst_33 = arith.constant 1.000000e+00 : f32
    %77 = vector.broadcast %cst_33 : f32 to vector<8x128xf32>
    %78 = arith.addf %77, %76 : vector<8x128xf32>
    %79 = tpu.reciprocal %78 {approx = true} : vector<8x128xf32> -> vector<8x128xf32>
    %80 = arith.mulf %70, %42 : vector<8x128xf32>
    %81 = arith.mulf %63, %72 : vector<8x128xf32>
    %82 = arith.addf %80, %81 : vector<8x128xf32>
    %83 = math.tanh %82 : vector<8x128xf32>
    %84 = arith.mulf %79, %83 : vector<8x128xf32>
    %85 = arith.truncf %84 : vector<8x128xf32> to vector<8x128xbf16>
    %86 = arith.index_cast %c1_i32 : i32 to index
    %c0_34 = arith.constant 0 : index
    %c0_35 = arith.constant 0 : index
    %87 = vector.load %arg10[%86, %c0_34, %c0_35] : memref<8x8x128xbf16, #tpu.memory_space<vmem>>, vector<1x8x128xbf16>
    %88 = vector.shape_cast %87 : vector<1x8x128xbf16> to vector<8x128xbf16>
    %89 = vector.shape_cast %85 : vector<8x128xbf16> to vector<1x8x128xbf16>
    tpu.vector_store %arg10[%86, %c0_34, %c0_35], %89 {strides = array<i32>} : memref<8x8x128xbf16, #tpu.memory_space<vmem>>, vector<1x8x128xbf16>,
    %c2_i32 = arith.constant 2 : i32
    %90 = arith.index_cast %c2_i32 : i32 to index
    %c0_36 = arith.constant 0 : index
    %c0_37 = arith.constant 0 : index
    %91 = vector.load %arg11[%90, %c0_36, %c0_37] : memref<8x8x512xf32, #tpu.memory_space<vmem>>, vector<1x8x512xf32>
    %92 = vector.shape_cast %91 : vector<1x8x512xf32> to vector<8x512xf32>
    %93 = arith.truncf %84 : vector<8x128xf32> to vector<8x128xbf16>
    %c0_38 = arith.constant 0 : index
    %c0_39 = arith.constant 0 : index
    %94 = vector.load %arg2[%c0_38, %c0_39] : memref<128x512xbf16, #tpu.memory_space<vmem>>, vector<128x512xbf16>
    %cst_40 = arith.constant dense<0.000000e+00> : vector<8x512xf32>
    %95 = tpu.matmul %93, %94, %cst_40 {dimension_numbers = #tpu.dot_dimension_numbers<[1], [0], [0], [1], [0, 0, 1, 1], [], []>} : vector<8x128xbf16>, vector<128x512xbf16>, vector<8x512xf32> -> vector<8x512xf32>
    %96 = arith.addf %92, %95 : vector<8x512xf32>
    %97 = vector.extract_strided_slice %96 {offsets = [0, 0], sizes = [8, 128], strides = [1, 1]} : vector<8x512xf32> to vector<8x128xf32>
    %cst_41 = arith.constant 0.000000e+00 : f32
    %98 = vector.broadcast %cst_41 : f32 to vector<8x128xf32>
    %99 = arith.subf %98, %97 : vector<8x128xf32>
    %100 = math.exp %99 : vector<8x128xf32>
    %cst_42 = arith.constant 1.000000e+00 : f32
    %101 = vector.broadcast %cst_42 : f32 to vector<8x128xf32>
    %102 = arith.addf %101, %100 : vector<8x128xf32>
    %103 = tpu.reciprocal %102 {approx = true} : vector<8x128xf32> -> vector<8x128xf32>
    %104 = vector.extract_strided_slice %96 {offsets = [0, 128], sizes = [8, 128], strides = [1, 1]} : vector<8x512xf32> to vector<8x128xf32>
    %cst_43 = arith.constant 0.000000e+00 : f32
    %105 = vector.broadcast %cst_43 : f32 to vector<8x128xf32>
    %106 = arith.subf %105, %104 : vector<8x128xf32>
    %107 = math.exp %106 : vector<8x128xf32>
    %cst_44 = arith.constant 1.000000e+00 : f32
    %108 = vector.broadcast %cst_44 : f32 to vector<8x128xf32>
    %109 = arith.addf %108, %107 : vector<8x128xf32>
    %110 = tpu.reciprocal %109 {approx = true} : vector<8x128xf32> -> vector<8x128xf32>
    %111 = vector.extract_strided_slice %96 {offsets = [0, 256], sizes = [8, 128], strides = [1, 1]} : vector<8x512xf32> to vector<8x128xf32>
    %112 = math.tanh %111 : vector<8x128xf32>
    %113 = vector.extract_strided_slice %96 {offsets = [0, 384], sizes = [8, 128], strides = [1, 1]} : vector<8x512xf32> to vector<8x128xf32>
    %cst_45 = arith.constant 0.000000e+00 : f32
    %114 = vector.broadcast %cst_45 : f32 to vector<8x128xf32>
    %115 = arith.subf %114, %113 : vector<8x128xf32>
    %116 = math.exp %115 : vector<8x128xf32>
    %cst_46 = arith.constant 1.000000e+00 : f32
    %117 = vector.broadcast %cst_46 : f32 to vector<8x128xf32>
    %118 = arith.addf %117, %116 : vector<8x128xf32>
    %119 = tpu.reciprocal %118 {approx = true} : vector<8x128xf32> -> vector<8x128xf32>
    %120 = arith.mulf %110, %82 : vector<8x128xf32>
    %121 = arith.mulf %103, %112 : vector<8x128xf32>
    %122 = arith.addf %120, %121 : vector<8x128xf32>
    %123 = math.tanh %122 : vector<8x128xf32>
    %124 = arith.mulf %119, %123 : vector<8x128xf32>
    %125 = arith.truncf %124 : vector<8x128xf32> to vector<8x128xbf16>
    %126 = arith.index_cast %c2_i32 : i32 to index
    %c0_47 = arith.constant 0 : index
    %c0_48 = arith.constant 0 : index
    %127 = vector.load %arg10[%126, %c0_47, %c0_48] : memref<8x8x128xbf16, #tpu.memory_space<vmem>>, vector<1x8x128xbf16>
    %128 = vector.shape_cast %127 : vector<1x8x128xbf16> to vector<8x128xbf16>
    %129 = vector.shape_cast %125 : vector<8x128xbf16> to vector<1x8x128xbf16>
    tpu.vector_store %arg10[%126, %c0_47, %c0_48], %129 {strides = array<i32>} : memref<8x8x128xbf16, #tpu.memory_space<vmem>>, vector<1x8x128xbf16>,
    %c3_i32 = arith.constant 3 : i32
    %130 = arith.index_cast %c3_i32 : i32 to index
    %c0_49 = arith.constant 0 : index
    %c0_50 = arith.constant 0 : index
    %131 = vector.load %arg11[%130, %c0_49, %c0_50] : memref<8x8x512xf32, #tpu.memory_space<vmem>>, vector<1x8x512xf32>
    %132 = vector.shape_cast %131 : vector<1x8x512xf32> to vector<8x512xf32>
    %133 = arith.truncf %124 : vector<8x128xf32> to vector<8x128xbf16>
    %c0_51 = arith.constant 0 : index
    %c0_52 = arith.constant 0 : index
    %134 = vector.load %arg2[%c0_51, %c0_52] : memref<128x512xbf16, #tpu.memory_space<vmem>>, vector<128x512xbf16>
    %cst_53 = arith.constant dense<0.000000e+00> : vector<8x512xf32>
    %135 = tpu.matmul %133, %134, %cst_53 {dimension_numbers = #tpu.dot_dimension_numbers<[1], [0], [0], [1], [0, 0, 1, 1], [], []>} : vector<8x128xbf16>, vector<128x512xbf16>, vector<8x512xf32> -> vector<8x512xf32>
    %136 = arith.addf %132, %135 : vector<8x512xf32>
    %137 = vector.extract_strided_slice %136 {offsets = [0, 0], sizes = [8, 128], strides = [1, 1]} : vector<8x512xf32> to vector<8x128xf32>
    %cst_54 = arith.constant 0.000000e+00 : f32
    %138 = vector.broadcast %cst_54 : f32 to vector<8x128xf32>
    %139 = arith.subf %138, %137 : vector<8x128xf32>
    %140 = math.exp %139 : vector<8x128xf32>
    %cst_55 = arith.constant 1.000000e+00 : f32
    %141 = vector.broadcast %cst_55 : f32 to vector<8x128xf32>
    %142 = arith.addf %141, %140 : vector<8x128xf32>
    %143 = tpu.reciprocal %142 {approx = true} : vector<8x128xf32> -> vector<8x128xf32>
    %144 = vector.extract_strided_slice %136 {offsets = [0, 128], sizes = [8, 128], strides = [1, 1]} : vector<8x512xf32> to vector<8x128xf32>
    %cst_56 = arith.constant 0.000000e+00 : f32
    %145 = vector.broadcast %cst_56 : f32 to vector<8x128xf32>
    %146 = arith.subf %145, %144 : vector<8x128xf32>
    %147 = math.exp %146 : vector<8x128xf32>
    %cst_57 = arith.constant 1.000000e+00 : f32
    %148 = vector.broadcast %cst_57 : f32 to vector<8x128xf32>
    %149 = arith.addf %148, %147 : vector<8x128xf32>
    %150 = tpu.reciprocal %149 {approx = true} : vector<8x128xf32> -> vector<8x128xf32>
    %151 = vector.extract_strided_slice %136 {offsets = [0, 256], sizes = [8, 128], strides = [1, 1]} : vector<8x512xf32> to vector<8x128xf32>
    %152 = math.tanh %151 : vector<8x128xf32>
    %153 = vector.extract_strided_slice %136 {offsets = [0, 384], sizes = [8, 128], strides = [1, 1]} : vector<8x512xf32> to vector<8x128xf32>
    %cst_58 = arith.constant 0.000000e+00 : f32
    %154 = vector.broadcast %cst_58 : f32 to vector<8x128xf32>
    %155 = arith.subf %154, %153 : vector<8x128xf32>
    %156 = math.exp %155 : vector<8x128xf32>
    %cst_59 = arith.constant 1.000000e+00 : f32
    %157 = vector.broadcast %cst_59 : f32 to vector<8x128xf32>
    %158 = arith.addf %157, %156 : vector<8x128xf32>
    %159 = tpu.reciprocal %158 {approx = true} : vector<8x128xf32> -> vector<8x128xf32>
    %160 = arith.mulf %150, %122 : vector<8x128xf32>
    %161 = arith.mulf %143, %152 : vector<8x128xf32>
    %162 = arith.addf %160, %161 : vector<8x128xf32>
    %163 = math.tanh %162 : vector<8x128xf32>
    %164 = arith.mulf %159, %163 : vector<8x128xf32>
    %165 = arith.truncf %164 : vector<8x128xf32> to vector<8x128xbf16>
    %166 = arith.index_cast %c3_i32 : i32 to index
    %c0_60 = arith.constant 0 : index
    %c0_61 = arith.constant 0 : index
    %167 = vector.load %arg10[%166, %c0_60, %c0_61] : memref<8x8x128xbf16, #tpu.memory_space<vmem>>, vector<1x8x128xbf16>
    %168 = vector.shape_cast %167 : vector<1x8x128xbf16> to vector<8x128xbf16>
    %169 = vector.shape_cast %165 : vector<8x128xbf16> to vector<1x8x128xbf16>
    tpu.vector_store %arg10[%166, %c0_60, %c0_61], %169 {strides = array<i32>} : memref<8x8x128xbf16, #tpu.memory_space<vmem>>, vector<1x8x128xbf16>,
    %c4_i32 = arith.constant 4 : i32
    %170 = arith.index_cast %c4_i32 : i32 to index
    %c0_62 = arith.constant 0 : index
    %c0_63 = arith.constant 0 : index
    %171 = vector.load %arg11[%170, %c0_62, %c0_63] : memref<8x8x512xf32, #tpu.memory_space<vmem>>, vector<1x8x512xf32>
    %172 = vector.shape_cast %171 : vector<1x8x512xf32> to vector<8x512xf32>
    %173 = arith.truncf %164 : vector<8x128xf32> to vector<8x128xbf16>
    %c0_64 = arith.constant 0 : index
    %c0_65 = arith.constant 0 : index
    %174 = vector.load %arg2[%c0_64, %c0_65] : memref<128x512xbf16, #tpu.memory_space<vmem>>, vector<128x512xbf16>
    %cst_66 = arith.constant dense<0.000000e+00> : vector<8x512xf32>
    %175 = tpu.matmul %173, %174, %cst_66 {dimension_numbers = #tpu.dot_dimension_numbers<[1], [0], [0], [1], [0, 0, 1, 1], [], []>} : vector<8x128xbf16>, vector<128x512xbf16>, vector<8x512xf32> -> vector<8x512xf32>
    %176 = arith.addf %172, %175 : vector<8x512xf32>
    %177 = vector.extract_strided_slice %176 {offsets = [0, 0], sizes = [8, 128], strides = [1, 1]} : vector<8x512xf32> to vector<8x128xf32>
    %cst_67 = arith.constant 0.000000e+00 : f32
    %178 = vector.broadcast %cst_67 : f32 to vector<8x128xf32>
    %179 = arith.subf %178, %177 : vector<8x128xf32>
    %180 = math.exp %179 : vector<8x128xf32>
    %cst_68 = arith.constant 1.000000e+00 : f32
    %181 = vector.broadcast %cst_68 : f32 to vector<8x128xf32>
    %182 = arith.addf %181, %180 : vector<8x128xf32>
    %183 = tpu.reciprocal %182 {approx = true} : vector<8x128xf32> -> vector<8x128xf32>
    %184 = vector.extract_strided_slice %176 {offsets = [0, 128], sizes = [8, 128], strides = [1, 1]} : vector<8x512xf32> to vector<8x128xf32>
    %cst_69 = arith.constant 0.000000e+00 : f32
    %185 = vector.broadcast %cst_69 : f32 to vector<8x128xf32>
    %186 = arith.subf %185, %184 : vector<8x128xf32>
    %187 = math.exp %186 : vector<8x128xf32>
    %cst_70 = arith.constant 1.000000e+00 : f32
    %188 = vector.broadcast %cst_70 : f32 to vector<8x128xf32>
    %189 = arith.addf %188, %187 : vector<8x128xf32>
    %190 = tpu.reciprocal %189 {approx = true} : vector<8x128xf32> -> vector<8x128xf32>
    %191 = vector.extract_strided_slice %176 {offsets = [0, 256], sizes = [8, 128], strides = [1, 1]} : vector<8x512xf32> to vector<8x128xf32>
    %192 = math.tanh %191 : vector<8x128xf32>
    %193 = vector.extract_strided_slice %176 {offsets = [0, 384], sizes = [8, 128], strides = [1, 1]} : vector<8x512xf32> to vector<8x128xf32>
    %cst_71 = arith.constant 0.000000e+00 : f32
    %194 = vector.broadcast %cst_71 : f32 to vector<8x128xf32>
    %195 = arith.subf %194, %193 : vector<8x128xf32>
    %196 = math.exp %195 : vector<8x128xf32>
    %cst_72 = arith.constant 1.000000e+00 : f32
    %197 = vector.broadcast %cst_72 : f32 to vector<8x128xf32>
    %198 = arith.addf %197, %196 : vector<8x128xf32>
    %199 = tpu.reciprocal %198 {approx = true} : vector<8x128xf32> -> vector<8x128xf32>
    %200 = arith.mulf %190, %162 : vector<8x128xf32>
    %201 = arith.mulf %183, %192 : vector<8x128xf32>
    %202 = arith.addf %200, %201 : vector<8x128xf32>
    %203 = math.tanh %202 : vector<8x128xf32>
    %204 = arith.mulf %199, %203 : vector<8x128xf32>
    %205 = arith.truncf %204 : vector<8x128xf32> to vector<8x128xbf16>
    %206 = arith.index_cast %c4_i32 : i32 to index
    %c0_73 = arith.constant 0 : index
    %c0_74 = arith.constant 0 : index
    %207 = vector.load %arg10[%206, %c0_73, %c0_74] : memref<8x8x128xbf16, #tpu.memory_space<vmem>>, vector<1x8x128xbf16>
    %208 = vector.shape_cast %207 : vector<1x8x128xbf16> to vector<8x128xbf16>
    %209 = vector.shape_cast %205 : vector<8x128xbf16> to vector<1x8x128xbf16>
    tpu.vector_store %arg10[%206, %c0_73, %c0_74], %209 {strides = array<i32>} : memref<8x8x128xbf16, #tpu.memory_space<vmem>>, vector<1x8x128xbf16>,
    %c5_i32 = arith.constant 5 : i32
    %210 = arith.index_cast %c5_i32 : i32 to index
    %c0_75 = arith.constant 0 : index
    %c0_76 = arith.constant 0 : index
    %211 = vector.load %arg11[%210, %c0_75, %c0_76] : memref<8x8x512xf32, #tpu.memory_space<vmem>>, vector<1x8x512xf32>
    %212 = vector.shape_cast %211 : vector<1x8x512xf32> to vector<8x512xf32>
    %213 = arith.truncf %204 : vector<8x128xf32> to vector<8x128xbf16>
    %c0_77 = arith.constant 0 : index
    %c0_78 = arith.constant 0 : index
    %214 = vector.load %arg2[%c0_77, %c0_78] : memref<128x512xbf16, #tpu.memory_space<vmem>>, vector<128x512xbf16>
    %cst_79 = arith.constant dense<0.000000e+00> : vector<8x512xf32>
    %215 = tpu.matmul %213, %214, %cst_79 {dimension_numbers = #tpu.dot_dimension_numbers<[1], [0], [0], [1], [0, 0, 1, 1], [], []>} : vector<8x128xbf16>, vector<128x512xbf16>, vector<8x512xf32> -> vector<8x512xf32>
    %216 = arith.addf %212, %215 : vector<8x512xf32>
    %217 = vector.extract_strided_slice %216 {offsets = [0, 0], sizes = [8, 128], strides = [1, 1]} : vector<8x512xf32> to vector<8x128xf32>
    %cst_80 = arith.constant 0.000000e+00 : f32
    %218 = vector.broadcast %cst_80 : f32 to vector<8x128xf32>
    %219 = arith.subf %218, %217 : vector<8x128xf32>
    %220 = math.exp %219 : vector<8x128xf32>
    %cst_81 = arith.constant 1.000000e+00 : f32
    %221 = vector.broadcast %cst_81 : f32 to vector<8x128xf32>
    %222 = arith.addf %221, %220 : vector<8x128xf32>
    %223 = tpu.reciprocal %222 {approx = true} : vector<8x128xf32> -> vector<8x128xf32>
    %224 = vector.extract_strided_slice %216 {offsets = [0, 128], sizes = [8, 128], strides = [1, 1]} : vector<8x512xf32> to vector<8x128xf32>
    %cst_82 = arith.constant 0.000000e+00 : f32
    %225 = vector.broadcast %cst_82 : f32 to vector<8x128xf32>
    %226 = arith.subf %225, %224 : vector<8x128xf32>
    %227 = math.exp %226 : vector<8x128xf32>
    %cst_83 = arith.constant 1.000000e+00 : f32
    %228 = vector.broadcast %cst_83 : f32 to vector<8x128xf32>
    %229 = arith.addf %228, %227 : vector<8x128xf32>
    %230 = tpu.reciprocal %229 {approx = true} : vector<8x128xf32> -> vector<8x128xf32>
    %231 = vector.extract_strided_slice %216 {offsets = [0, 256], sizes = [8, 128], strides = [1, 1]} : vector<8x512xf32> to vector<8x128xf32>
    %232 = math.tanh %231 : vector<8x128xf32>
    %233 = vector.extract_strided_slice %216 {offsets = [0, 384], sizes = [8, 128], strides = [1, 1]} : vector<8x512xf32> to vector<8x128xf32>
    %cst_84 = arith.constant 0.000000e+00 : f32
    %234 = vector.broadcast %cst_84 : f32 to vector<8x128xf32>
    %235 = arith.subf %234, %233 : vector<8x128xf32>
    %236 = math.exp %235 : vector<8x128xf32>
    %cst_85 = arith.constant 1.000000e+00 : f32
    %237 = vector.broadcast %cst_85 : f32 to vector<8x128xf32>
    %238 = arith.addf %237, %236 : vector<8x128xf32>
    %239 = tpu.reciprocal %238 {approx = true} : vector<8x128xf32> -> vector<8x128xf32>
    %240 = arith.mulf %230, %202 : vector<8x128xf32>
    %241 = arith.mulf %223, %232 : vector<8x128xf32>
    %242 = arith.addf %240, %241 : vector<8x128xf32>
    %243 = math.tanh %242 : vector<8x128xf32>
    %244 = arith.mulf %239, %243 : vector<8x128xf32>
    %245 = arith.truncf %244 : vector<8x128xf32> to vector<8x128xbf16>
    %246 = arith.index_cast %c5_i32 : i32 to index
    %c0_86 = arith.constant 0 : index
    %c0_87 = arith.constant 0 : index
    %247 = vector.load %arg10[%246, %c0_86, %c0_87] : memref<8x8x128xbf16, #tpu.memory_space<vmem>>, vector<1x8x128xbf16>
    %248 = vector.shape_cast %247 : vector<1x8x128xbf16> to vector<8x128xbf16>
    %249 = vector.shape_cast %245 : vector<8x128xbf16> to vector<1x8x128xbf16>
    tpu.vector_store %arg10[%246, %c0_86, %c0_87], %249 {strides = array<i32>} : memref<8x8x128xbf16, #tpu.memory_space<vmem>>, vector<1x8x128xbf16>,
    %c6_i32 = arith.constant 6 : i32
    %250 = arith.index_cast %c6_i32 : i32 to index
    %c0_88 = arith.constant 0 : index
    %c0_89 = arith.constant 0 : index
    %251 = vector.load %arg11[%250, %c0_88, %c0_89] : memref<8x8x512xf32, #tpu.memory_space<vmem>>, vector<1x8x512xf32>
    %252 = vector.shape_cast %251 : vector<1x8x512xf32> to vector<8x512xf32>
    %253 = arith.truncf %244 : vector<8x128xf32> to vector<8x128xbf16>
    %c0_90 = arith.constant 0 : index
    %c0_91 = arith.constant 0 : index
    %254 = vector.load %arg2[%c0_90, %c0_91] : memref<128x512xbf16, #tpu.memory_space<vmem>>, vector<128x512xbf16>
    %cst_92 = arith.constant dense<0.000000e+00> : vector<8x512xf32>
    %255 = tpu.matmul %253, %254, %cst_92 {dimension_numbers = #tpu.dot_dimension_numbers<[1], [0], [0], [1], [0, 0, 1, 1], [], []>} : vector<8x128xbf16>, vector<128x512xbf16>, vector<8x512xf32> -> vector<8x512xf32>
    %256 = arith.addf %252, %255 : vector<8x512xf32>
    %257 = vector.extract_strided_slice %256 {offsets = [0, 0], sizes = [8, 128], strides = [1, 1]} : vector<8x512xf32> to vector<8x128xf32>
    %cst_93 = arith.constant 0.000000e+00 : f32
    %258 = vector.broadcast %cst_93 : f32 to vector<8x128xf32>
    %259 = arith.subf %258, %257 : vector<8x128xf32>
    %260 = math.exp %259 : vector<8x128xf32>
    %cst_94 = arith.constant 1.000000e+00 : f32
    %261 = vector.broadcast %cst_94 : f32 to vector<8x128xf32>
    %262 = arith.addf %261, %260 : vector<8x128xf32>
    %263 = tpu.reciprocal %262 {approx = true} : vector<8x128xf32> -> vector<8x128xf32>
    %264 = vector.extract_strided_slice %256 {offsets = [0, 128], sizes = [8, 128], strides = [1, 1]} : vector<8x512xf32> to vector<8x128xf32>
    %cst_95 = arith.constant 0.000000e+00 : f32
    %265 = vector.broadcast %cst_95 : f32 to vector<8x128xf32>
    %266 = arith.subf %265, %264 : vector<8x128xf32>
    %267 = math.exp %266 : vector<8x128xf32>
    %cst_96 = arith.constant 1.000000e+00 : f32
    %268 = vector.broadcast %cst_96 : f32 to vector<8x128xf32>
    %269 = arith.addf %268, %267 : vector<8x128xf32>
    %270 = tpu.reciprocal %269 {approx = true} : vector<8x128xf32> -> vector<8x128xf32>
    %271 = vector.extract_strided_slice %256 {offsets = [0, 256], sizes = [8, 128], strides = [1, 1]} : vector<8x512xf32> to vector<8x128xf32>
    %272 = math.tanh %271 : vector<8x128xf32>
    %273 = vector.extract_strided_slice %256 {offsets = [0, 384], sizes = [8, 128], strides = [1, 1]} : vector<8x512xf32> to vector<8x128xf32>
    %cst_97 = arith.constant 0.000000e+00 : f32
    %274 = vector.broadcast %cst_97 : f32 to vector<8x128xf32>
    %275 = arith.subf %274, %273 : vector<8x128xf32>
    %276 = math.exp %275 : vector<8x128xf32>
    %cst_98 = arith.constant 1.000000e+00 : f32
    %277 = vector.broadcast %cst_98 : f32 to vector<8x128xf32>
    %278 = arith.addf %277, %276 : vector<8x128xf32>
    %279 = tpu.reciprocal %278 {approx = true} : vector<8x128xf32> -> vector<8x128xf32>
    %280 = arith.mulf %270, %242 : vector<8x128xf32>
    %281 = arith.mulf %263, %272 : vector<8x128xf32>
    %282 = arith.addf %280, %281 : vector<8x128xf32>
    %283 = math.tanh %282 : vector<8x128xf32>
    %284 = arith.mulf %279, %283 : vector<8x128xf32>
    %285 = arith.truncf %284 : vector<8x128xf32> to vector<8x128xbf16>
    %286 = arith.index_cast %c6_i32 : i32 to index
    %c0_99 = arith.constant 0 : index
    %c0_100 = arith.constant 0 : index
    %287 = vector.load %arg10[%286, %c0_99, %c0_100] : memref<8x8x128xbf16, #tpu.memory_space<vmem>>, vector<1x8x128xbf16>
    %288 = vector.shape_cast %287 : vector<1x8x128xbf16> to vector<8x128xbf16>
    %289 = vector.shape_cast %285 : vector<8x128xbf16> to vector<1x8x128xbf16>
    tpu.vector_store %arg10[%286, %c0_99, %c0_100], %289 {strides = array<i32>} : memref<8x8x128xbf16, #tpu.memory_space<vmem>>, vector<1x8x128xbf16>,
    %c7_i32 = arith.constant 7 : i32
    %290 = arith.index_cast %c7_i32 : i32 to index
    %c0_101 = arith.constant 0 : index
    %c0_102 = arith.constant 0 : index
    %291 = vector.load %arg11[%290, %c0_101, %c0_102] : memref<8x8x512xf32, #tpu.memory_space<vmem>>, vector<1x8x512xf32>
    %292 = vector.shape_cast %291 : vector<1x8x512xf32> to vector<8x512xf32>
    %293 = arith.truncf %284 : vector<8x128xf32> to vector<8x128xbf16>
    %c0_103 = arith.constant 0 : index
    %c0_104 = arith.constant 0 : index
    %294 = vector.load %arg2[%c0_103, %c0_104] : memref<128x512xbf16, #tpu.memory_space<vmem>>, vector<128x512xbf16>
    %cst_105 = arith.constant dense<0.000000e+00> : vector<8x512xf32>
    %295 = tpu.matmul %293, %294, %cst_105 {dimension_numbers = #tpu.dot_dimension_numbers<[1], [0], [0], [1], [0, 0, 1, 1], [], []>} : vector<8x128xbf16>, vector<128x512xbf16>, vector<8x512xf32> -> vector<8x512xf32>
    %296 = arith.addf %292, %295 : vector<8x512xf32>
    %297 = vector.extract_strided_slice %296 {offsets = [0, 0], sizes = [8, 128], strides = [1, 1]} : vector<8x512xf32> to vector<8x128xf32>
    %cst_106 = arith.constant 0.000000e+00 : f32
    %298 = vector.broadcast %cst_106 : f32 to vector<8x128xf32>
    %299 = arith.subf %298, %297 : vector<8x128xf32>
    %300 = math.exp %299 : vector<8x128xf32>
    %cst_107 = arith.constant 1.000000e+00 : f32
    %301 = vector.broadcast %cst_107 : f32 to vector<8x128xf32>
    %302 = arith.addf %301, %300 : vector<8x128xf32>
    %303 = tpu.reciprocal %302 {approx = true} : vector<8x128xf32> -> vector<8x128xf32>
    %304 = vector.extract_strided_slice %296 {offsets = [0, 128], sizes = [8, 128], strides = [1, 1]} : vector<8x512xf32> to vector<8x128xf32>
    %cst_108 = arith.constant 0.000000e+00 : f32
    %305 = vector.broadcast %cst_108 : f32 to vector<8x128xf32>
    %306 = arith.subf %305, %304 : vector<8x128xf32>
    %307 = math.exp %306 : vector<8x128xf32>
    %cst_109 = arith.constant 1.000000e+00 : f32
    %308 = vector.broadcast %cst_109 : f32 to vector<8x128xf32>
    %309 = arith.addf %308, %307 : vector<8x128xf32>
    %310 = tpu.reciprocal %309 {approx = true} : vector<8x128xf32> -> vector<8x128xf32>
    %311 = vector.extract_strided_slice %296 {offsets = [0, 256], sizes = [8, 128], strides = [1, 1]} : vector<8x512xf32> to vector<8x128xf32>
    %312 = math.tanh %311 : vector<8x128xf32>
    %313 = vector.extract_strided_slice %296 {offsets = [0, 384], sizes = [8, 128], strides = [1, 1]} : vector<8x512xf32> to vector<8x128xf32>
    %cst_110 = arith.constant 0.000000e+00 : f32
    %314 = vector.broadcast %cst_110 : f32 to vector<8x128xf32>
    %315 = arith.subf %314, %313 : vector<8x128xf32>
    %316 = math.exp %315 : vector<8x128xf32>
    %cst_111 = arith.constant 1.000000e+00 : f32
    %317 = vector.broadcast %cst_111 : f32 to vector<8x128xf32>
    %318 = arith.addf %317, %316 : vector<8x128xf32>
    %319 = tpu.reciprocal %318 {approx = true} : vector<8x128xf32> -> vector<8x128xf32>
    %320 = arith.mulf %310, %282 : vector<8x128xf32>
    %321 = arith.mulf %303, %312 : vector<8x128xf32>
    %322 = arith.addf %320, %321 : vector<8x128xf32>
    %323 = math.tanh %322 : vector<8x128xf32>
    %324 = arith.mulf %319, %323 : vector<8x128xf32>
    %325 = arith.truncf %324 : vector<8x128xf32> to vector<8x128xbf16>
    %326 = arith.index_cast %c7_i32 : i32 to index
    %c0_112 = arith.constant 0 : index
    %c0_113 = arith.constant 0 : index
    %327 = vector.load %arg10[%326, %c0_112, %c0_113] : memref<8x8x128xbf16, #tpu.memory_space<vmem>>, vector<1x8x128xbf16>
    %328 = vector.shape_cast %327 : vector<1x8x128xbf16> to vector<8x128xbf16>
    %329 = vector.shape_cast %325 : vector<8x128xbf16> to vector<1x8x128xbf16>
    tpu.vector_store %arg10[%326, %c0_112, %c0_113], %329 {strides = array<i32>} : memref<8x8x128xbf16, #tpu.memory_space<vmem>>, vector<1x8x128xbf16>,
    %c8_i32 = arith.constant 8 : i32
    %c0_114 = arith.constant 0 : index
    %c0_115 = arith.constant 0 : index
    %c0_116 = arith.constant 0 : index
    %330 = vector.load %arg10[%c0_114, %c0_115, %c0_116] : memref<8x8x128xbf16, #tpu.memory_space<vmem>>, vector<8x8x128xbf16>
    %331 = vector.shape_cast %330 : vector<8x8x128xbf16> to vector<64x128xbf16>
    %c0_117 = arith.constant 0 : index
    %c0_118 = arith.constant 0 : index
    %332 = vector.load %arg4[%c0_117, %c0_118] : memref<128x512xbf16, #tpu.memory_space<vmem>>, vector<128x512xbf16>
    %cst_119 = arith.constant dense<0.000000e+00> : vector<64x512xf32>
    %333 = tpu.matmul %331, %332, %cst_119 {dimension_numbers = #tpu.dot_dimension_numbers<[1], [0], [0], [1], [0, 0, 1, 1], [], []>} : vector<64x128xbf16>, vector<128x512xbf16>, vector<64x512xf32> -> vector<64x512xf32>
    %c0_120 = arith.constant 0 : index
    %c0_121 = arith.constant 0 : index
    %334 = vector.load %arg6[%c0_120, %c0_121] : memref<1x512xf32, #tpu.memory_space<vmem>>, vector<1x512xf32>
    %335 = vector.broadcast %334 : vector<1x512xf32> to vector<64x512xf32>
    %336 = arith.addf %333, %335 : vector<64x512xf32>
    %337 = vector.shape_cast %336 : vector<64x512xf32> to vector<8x8x512xf32>
    %c0_122 = arith.constant 0 : index
    %c0_123 = arith.constant 0 : index
    %c0_124 = arith.constant 0 : index
    %338 = vector.load %arg11[%c0_122, %c0_123, %c0_124] : memref<8x8x512xf32, #tpu.memory_space<vmem>>, vector<8x8x512xf32>
    tpu.vector_store %arg11[%c0_122, %c0_123, %c0_124], %337 {strides = array<i32>} : memref<8x8x512xf32, #tpu.memory_space<vmem>>, vector<8x8x512xf32>,
    %cst_125 = arith.constant 0.000000e+00 : f32
    %339 = vector.broadcast %cst_125 : f32 to vector<8x128xf32>
    %c0_i32_126 = arith.constant 0 : i32
    %340 = arith.index_cast %c0_i32_126 : i32 to index
    %c0_127 = arith.constant 0 : index
    %c0_128 = arith.constant 0 : index
    %341 = vector.load %arg11[%340, %c0_127, %c0_128] : memref<8x8x512xf32, #tpu.memory_space<vmem>>, vector<1x8x512xf32>
    %342 = vector.shape_cast %341 : vector<1x8x512xf32> to vector<8x512xf32>
    %343 = arith.truncf %339 : vector<8x128xf32> to vector<8x128xbf16>
    %c0_129 = arith.constant 0 : index
    %c0_130 = arith.constant 0 : index
    %344 = vector.load %arg5[%c0_129, %c0_130] : memref<128x512xbf16, #tpu.memory_space<vmem>>, vector<128x512xbf16>
    %cst_131 = arith.constant dense<0.000000e+00> : vector<8x512xf32>
    %345 = tpu.matmul %343, %344, %cst_131 {dimension_numbers = #tpu.dot_dimension_numbers<[1], [0], [0], [1], [0, 0, 1, 1], [], []>} : vector<8x128xbf16>, vector<128x512xbf16>, vector<8x512xf32> -> vector<8x512xf32>
    %346 = arith.addf %342, %345 : vector<8x512xf32>
    %347 = vector.extract_strided_slice %346 {offsets = [0, 0], sizes = [8, 128], strides = [1, 1]} : vector<8x512xf32> to vector<8x128xf32>
    %cst_132 = arith.constant 0.000000e+00 : f32
    %348 = vector.broadcast %cst_132 : f32 to vector<8x128xf32>
    %349 = arith.subf %348, %347 : vector<8x128xf32>
    %350 = math.exp %349 : vector<8x128xf32>
    %cst_133 = arith.constant 1.000000e+00 : f32
    %351 = vector.broadcast %cst_133 : f32 to vector<8x128xf32>
    %352 = arith.addf %351, %350 : vector<8x128xf32>
    %353 = tpu.reciprocal %352 {approx = true} : vector<8x128xf32> -> vector<8x128xf32>
    %354 = vector.extract_strided_slice %346 {offsets = [0, 128], sizes = [8, 128], strides = [1, 1]} : vector<8x512xf32> to vector<8x128xf32>
    %cst_134 = arith.constant 0.000000e+00 : f32
    %355 = vector.broadcast %cst_134 : f32 to vector<8x128xf32>
    %356 = arith.subf %355, %354 : vector<8x128xf32>
    %357 = math.exp %356 : vector<8x128xf32>
    %cst_135 = arith.constant 1.000000e+00 : f32
    %358 = vector.broadcast %cst_135 : f32 to vector<8x128xf32>
    %359 = arith.addf %358, %357 : vector<8x128xf32>
    %360 = tpu.reciprocal %359 {approx = true} : vector<8x128xf32> -> vector<8x128xf32>
    %361 = vector.extract_strided_slice %346 {offsets = [0, 256], sizes = [8, 128], strides = [1, 1]} : vector<8x512xf32> to vector<8x128xf32>
    %362 = math.tanh %361 : vector<8x128xf32>
    %363 = vector.extract_strided_slice %346 {offsets = [0, 384], sizes = [8, 128], strides = [1, 1]} : vector<8x512xf32> to vector<8x128xf32>
    %cst_136 = arith.constant 0.000000e+00 : f32
    %364 = vector.broadcast %cst_136 : f32 to vector<8x128xf32>
    %365 = arith.subf %364, %363 : vector<8x128xf32>
    %366 = math.exp %365 : vector<8x128xf32>
    %cst_137 = arith.constant 1.000000e+00 : f32
    %367 = vector.broadcast %cst_137 : f32 to vector<8x128xf32>
    %368 = arith.addf %367, %366 : vector<8x128xf32>
    %369 = tpu.reciprocal %368 {approx = true} : vector<8x128xf32> -> vector<8x128xf32>
    %370 = arith.mulf %360, %339 : vector<8x128xf32>
    %371 = arith.mulf %353, %362 : vector<8x128xf32>
    %372 = arith.addf %370, %371 : vector<8x128xf32>
    %373 = math.tanh %372 : vector<8x128xf32>
    %374 = arith.mulf %369, %373 : vector<8x128xf32>
    %c1_i32_138 = arith.constant 1 : i32
    %375 = arith.index_cast %c1_i32_138 : i32 to index
    %c0_139 = arith.constant 0 : index
    %c0_140 = arith.constant 0 : index
    %376 = vector.load %arg11[%375, %c0_139, %c0_140] : memref<8x8x512xf32, #tpu.memory_space<vmem>>, vector<1x8x512xf32>
    %377 = vector.shape_cast %376 : vector<1x8x512xf32> to vector<8x512xf32>
    %378 = arith.truncf %374 : vector<8x128xf32> to vector<8x128xbf16>
    %c0_141 = arith.constant 0 : index
    %c0_142 = arith.constant 0 : index
    %379 = vector.load %arg5[%c0_141, %c0_142] : memref<128x512xbf16, #tpu.memory_space<vmem>>, vector<128x512xbf16>
    %cst_143 = arith.constant dense<0.000000e+00> : vector<8x512xf32>
    %380 = tpu.matmul %378, %379, %cst_143 {dimension_numbers = #tpu.dot_dimension_numbers<[1], [0], [0], [1], [0, 0, 1, 1], [], []>} : vector<8x128xbf16>, vector<128x512xbf16>, vector<8x512xf32> -> vector<8x512xf32>
    %381 = arith.addf %377, %380 : vector<8x512xf32>
    %382 = vector.extract_strided_slice %381 {offsets = [0, 0], sizes = [8, 128], strides = [1, 1]} : vector<8x512xf32> to vector<8x128xf32>
    %cst_144 = arith.constant 0.000000e+00 : f32
    %383 = vector.broadcast %cst_144 : f32 to vector<8x128xf32>
    %384 = arith.subf %383, %382 : vector<8x128xf32>
    %385 = math.exp %384 : vector<8x128xf32>
    %cst_145 = arith.constant 1.000000e+00 : f32
    %386 = vector.broadcast %cst_145 : f32 to vector<8x128xf32>
    %387 = arith.addf %386, %385 : vector<8x128xf32>
    %388 = tpu.reciprocal %387 {approx = true} : vector<8x128xf32> -> vector<8x128xf32>
    %389 = vector.extract_strided_slice %381 {offsets = [0, 128], sizes = [8, 128], strides = [1, 1]} : vector<8x512xf32> to vector<8x128xf32>
    %cst_146 = arith.constant 0.000000e+00 : f32
    %390 = vector.broadcast %cst_146 : f32 to vector<8x128xf32>
    %391 = arith.subf %390, %389 : vector<8x128xf32>
    %392 = math.exp %391 : vector<8x128xf32>
    %cst_147 = arith.constant 1.000000e+00 : f32
    %393 = vector.broadcast %cst_147 : f32 to vector<8x128xf32>
    %394 = arith.addf %393, %392 : vector<8x128xf32>
    %395 = tpu.reciprocal %394 {approx = true} : vector<8x128xf32> -> vector<8x128xf32>
    %396 = vector.extract_strided_slice %381 {offsets = [0, 256], sizes = [8, 128], strides = [1, 1]} : vector<8x512xf32> to vector<8x128xf32>
    %397 = math.tanh %396 : vector<8x128xf32>
    %398 = vector.extract_strided_slice %381 {offsets = [0, 384], sizes = [8, 128], strides = [1, 1]} : vector<8x512xf32> to vector<8x128xf32>
    %cst_148 = arith.constant 0.000000e+00 : f32
    %399 = vector.broadcast %cst_148 : f32 to vector<8x128xf32>
    %400 = arith.subf %399, %398 : vector<8x128xf32>
    %401 = math.exp %400 : vector<8x128xf32>
    %cst_149 = arith.constant 1.000000e+00 : f32
    %402 = vector.broadcast %cst_149 : f32 to vector<8x128xf32>
    %403 = arith.addf %402, %401 : vector<8x128xf32>
    %404 = tpu.reciprocal %403 {approx = true} : vector<8x128xf32> -> vector<8x128xf32>
    %405 = arith.mulf %395, %372 : vector<8x128xf32>
    %406 = arith.mulf %388, %397 : vector<8x128xf32>
    %407 = arith.addf %405, %406 : vector<8x128xf32>
    %408 = math.tanh %407 : vector<8x128xf32>
    %409 = arith.mulf %404, %408 : vector<8x128xf32>
    %c2_i32_150 = arith.constant 2 : i32
    %410 = arith.index_cast %c2_i32_150 : i32 to index
    %c0_151 = arith.constant 0 : index
    %c0_152 = arith.constant 0 : index
    %411 = vector.load %arg11[%410, %c0_151, %c0_152] : memref<8x8x512xf32, #tpu.memory_space<vmem>>, vector<1x8x512xf32>
    %412 = vector.shape_cast %411 : vector<1x8x512xf32> to vector<8x512xf32>
    %413 = arith.truncf %409 : vector<8x128xf32> to vector<8x128xbf16>
    %c0_153 = arith.constant 0 : index
    %c0_154 = arith.constant 0 : index
    %414 = vector.load %arg5[%c0_153, %c0_154] : memref<128x512xbf16, #tpu.memory_space<vmem>>, vector<128x512xbf16>
    %cst_155 = arith.constant dense<0.000000e+00> : vector<8x512xf32>
    %415 = tpu.matmul %413, %414, %cst_155 {dimension_numbers = #tpu.dot_dimension_numbers<[1], [0], [0], [1], [0, 0, 1, 1], [], []>} : vector<8x128xbf16>, vector<128x512xbf16>, vector<8x512xf32> -> vector<8x512xf32>
    %416 = arith.addf %412, %415 : vector<8x512xf32>
    %417 = vector.extract_strided_slice %416 {offsets = [0, 0], sizes = [8, 128], strides = [1, 1]} : vector<8x512xf32> to vector<8x128xf32>
    %cst_156 = arith.constant 0.000000e+00 : f32
    %418 = vector.broadcast %cst_156 : f32 to vector<8x128xf32>
    %419 = arith.subf %418, %417 : vector<8x128xf32>
    %420 = math.exp %419 : vector<8x128xf32>
    %cst_157 = arith.constant 1.000000e+00 : f32
    %421 = vector.broadcast %cst_157 : f32 to vector<8x128xf32>
    %422 = arith.addf %421, %420 : vector<8x128xf32>
    %423 = tpu.reciprocal %422 {approx = true} : vector<8x128xf32> -> vector<8x128xf32>
    %424 = vector.extract_strided_slice %416 {offsets = [0, 128], sizes = [8, 128], strides = [1, 1]} : vector<8x512xf32> to vector<8x128xf32>
    %cst_158 = arith.constant 0.000000e+00 : f32
    %425 = vector.broadcast %cst_158 : f32 to vector<8x128xf32>
    %426 = arith.subf %425, %424 : vector<8x128xf32>
    %427 = math.exp %426 : vector<8x128xf32>
    %cst_159 = arith.constant 1.000000e+00 : f32
    %428 = vector.broadcast %cst_159 : f32 to vector<8x128xf32>
    %429 = arith.addf %428, %427 : vector<8x128xf32>
    %430 = tpu.reciprocal %429 {approx = true} : vector<8x128xf32> -> vector<8x128xf32>
    %431 = vector.extract_strided_slice %416 {offsets = [0, 256], sizes = [8, 128], strides = [1, 1]} : vector<8x512xf32> to vector<8x128xf32>
    %432 = math.tanh %431 : vector<8x128xf32>
    %433 = vector.extract_strided_slice %416 {offsets = [0, 384], sizes = [8, 128], strides = [1, 1]} : vector<8x512xf32> to vector<8x128xf32>
    %cst_160 = arith.constant 0.000000e+00 : f32
    %434 = vector.broadcast %cst_160 : f32 to vector<8x128xf32>
    %435 = arith.subf %434, %433 : vector<8x128xf32>
    %436 = math.exp %435 : vector<8x128xf32>
    %cst_161 = arith.constant 1.000000e+00 : f32
    %437 = vector.broadcast %cst_161 : f32 to vector<8x128xf32>
    %438 = arith.addf %437, %436 : vector<8x128xf32>
    %439 = tpu.reciprocal %438 {approx = true} : vector<8x128xf32> -> vector<8x128xf32>
    %440 = arith.mulf %430, %407 : vector<8x128xf32>
    %441 = arith.mulf %423, %432 : vector<8x128xf32>
    %442 = arith.addf %440, %441 : vector<8x128xf32>
    %443 = math.tanh %442 : vector<8x128xf32>
    %444 = arith.mulf %439, %443 : vector<8x128xf32>
    %c3_i32_162 = arith.constant 3 : i32
    %445 = arith.index_cast %c3_i32_162 : i32 to index
    %c0_163 = arith.constant 0 : index
    %c0_164 = arith.constant 0 : index
    %446 = vector.load %arg11[%445, %c0_163, %c0_164] : memref<8x8x512xf32, #tpu.memory_space<vmem>>, vector<1x8x512xf32>
    %447 = vector.shape_cast %446 : vector<1x8x512xf32> to vector<8x512xf32>
    %448 = arith.truncf %444 : vector<8x128xf32> to vector<8x128xbf16>
    %c0_165 = arith.constant 0 : index
    %c0_166 = arith.constant 0 : index
    %449 = vector.load %arg5[%c0_165, %c0_166] : memref<128x512xbf16, #tpu.memory_space<vmem>>, vector<128x512xbf16>
    %cst_167 = arith.constant dense<0.000000e+00> : vector<8x512xf32>
    %450 = tpu.matmul %448, %449, %cst_167 {dimension_numbers = #tpu.dot_dimension_numbers<[1], [0], [0], [1], [0, 0, 1, 1], [], []>} : vector<8x128xbf16>, vector<128x512xbf16>, vector<8x512xf32> -> vector<8x512xf32>
    %451 = arith.addf %447, %450 : vector<8x512xf32>
    %452 = vector.extract_strided_slice %451 {offsets = [0, 0], sizes = [8, 128], strides = [1, 1]} : vector<8x512xf32> to vector<8x128xf32>
    %cst_168 = arith.constant 0.000000e+00 : f32
    %453 = vector.broadcast %cst_168 : f32 to vector<8x128xf32>
    %454 = arith.subf %453, %452 : vector<8x128xf32>
    %455 = math.exp %454 : vector<8x128xf32>
    %cst_169 = arith.constant 1.000000e+00 : f32
    %456 = vector.broadcast %cst_169 : f32 to vector<8x128xf32>
    %457 = arith.addf %456, %455 : vector<8x128xf32>
    %458 = tpu.reciprocal %457 {approx = true} : vector<8x128xf32> -> vector<8x128xf32>
    %459 = vector.extract_strided_slice %451 {offsets = [0, 128], sizes = [8, 128], strides = [1, 1]} : vector<8x512xf32> to vector<8x128xf32>
    %cst_170 = arith.constant 0.000000e+00 : f32
    %460 = vector.broadcast %cst_170 : f32 to vector<8x128xf32>
    %461 = arith.subf %460, %459 : vector<8x128xf32>
    %462 = math.exp %461 : vector<8x128xf32>
    %cst_171 = arith.constant 1.000000e+00 : f32
    %463 = vector.broadcast %cst_171 : f32 to vector<8x128xf32>
    %464 = arith.addf %463, %462 : vector<8x128xf32>
    %465 = tpu.reciprocal %464 {approx = true} : vector<8x128xf32> -> vector<8x128xf32>
    %466 = vector.extract_strided_slice %451 {offsets = [0, 256], sizes = [8, 128], strides = [1, 1]} : vector<8x512xf32> to vector<8x128xf32>
    %467 = math.tanh %466 : vector<8x128xf32>
    %468 = vector.extract_strided_slice %451 {offsets = [0, 384], sizes = [8, 128], strides = [1, 1]} : vector<8x512xf32> to vector<8x128xf32>
    %cst_172 = arith.constant 0.000000e+00 : f32
    %469 = vector.broadcast %cst_172 : f32 to vector<8x128xf32>
    %470 = arith.subf %469, %468 : vector<8x128xf32>
    %471 = math.exp %470 : vector<8x128xf32>
    %cst_173 = arith.constant 1.000000e+00 : f32
    %472 = vector.broadcast %cst_173 : f32 to vector<8x128xf32>
    %473 = arith.addf %472, %471 : vector<8x128xf32>
    %474 = tpu.reciprocal %473 {approx = true} : vector<8x128xf32> -> vector<8x128xf32>
    %475 = arith.mulf %465, %442 : vector<8x128xf32>
    %476 = arith.mulf %458, %467 : vector<8x128xf32>
    %477 = arith.addf %475, %476 : vector<8x128xf32>
    %478 = math.tanh %477 : vector<8x128xf32>
    %479 = arith.mulf %474, %478 : vector<8x128xf32>
    %c4_i32_174 = arith.constant 4 : i32
    %480 = arith.index_cast %c4_i32_174 : i32 to index
    %c0_175 = arith.constant 0 : index
    %c0_176 = arith.constant 0 : index
    %481 = vector.load %arg11[%480, %c0_175, %c0_176] : memref<8x8x512xf32, #tpu.memory_space<vmem>>, vector<1x8x512xf32>
    %482 = vector.shape_cast %481 : vector<1x8x512xf32> to vector<8x512xf32>
    %483 = arith.truncf %479 : vector<8x128xf32> to vector<8x128xbf16>
    %c0_177 = arith.constant 0 : index
    %c0_178 = arith.constant 0 : index
    %484 = vector.load %arg5[%c0_177, %c0_178] : memref<128x512xbf16, #tpu.memory_space<vmem>>, vector<128x512xbf16>
    %cst_179 = arith.constant dense<0.000000e+00> : vector<8x512xf32>
    %485 = tpu.matmul %483, %484, %cst_179 {dimension_numbers = #tpu.dot_dimension_numbers<[1], [0], [0], [1], [0, 0, 1, 1], [], []>} : vector<8x128xbf16>, vector<128x512xbf16>, vector<8x512xf32> -> vector<8x512xf32>
    %486 = arith.addf %482, %485 : vector<8x512xf32>
    %487 = vector.extract_strided_slice %486 {offsets = [0, 0], sizes = [8, 128], strides = [1, 1]} : vector<8x512xf32> to vector<8x128xf32>
    %cst_180 = arith.constant 0.000000e+00 : f32
    %488 = vector.broadcast %cst_180 : f32 to vector<8x128xf32>
    %489 = arith.subf %488, %487 : vector<8x128xf32>
    %490 = math.exp %489 : vector<8x128xf32>
    %cst_181 = arith.constant 1.000000e+00 : f32
    %491 = vector.broadcast %cst_181 : f32 to vector<8x128xf32>
    %492 = arith.addf %491, %490 : vector<8x128xf32>
    %493 = tpu.reciprocal %492 {approx = true} : vector<8x128xf32> -> vector<8x128xf32>
    %494 = vector.extract_strided_slice %486 {offsets = [0, 128], sizes = [8, 128], strides = [1, 1]} : vector<8x512xf32> to vector<8x128xf32>
    %cst_182 = arith.constant 0.000000e+00 : f32
    %495 = vector.broadcast %cst_182 : f32 to vector<8x128xf32>
    %496 = arith.subf %495, %494 : vector<8x128xf32>
    %497 = math.exp %496 : vector<8x128xf32>
    %cst_183 = arith.constant 1.000000e+00 : f32
    %498 = vector.broadcast %cst_183 : f32 to vector<8x128xf32>
    %499 = arith.addf %498, %497 : vector<8x128xf32>
    %500 = tpu.reciprocal %499 {approx = true} : vector<8x128xf32> -> vector<8x128xf32>
    %501 = vector.extract_strided_slice %486 {offsets = [0, 256], sizes = [8, 128], strides = [1, 1]} : vector<8x512xf32> to vector<8x128xf32>
    %502 = math.tanh %501 : vector<8x128xf32>
    %503 = vector.extract_strided_slice %486 {offsets = [0, 384], sizes = [8, 128], strides = [1, 1]} : vector<8x512xf32> to vector<8x128xf32>
    %cst_184 = arith.constant 0.000000e+00 : f32
    %504 = vector.broadcast %cst_184 : f32 to vector<8x128xf32>
    %505 = arith.subf %504, %503 : vector<8x128xf32>
    %506 = math.exp %505 : vector<8x128xf32>
    %cst_185 = arith.constant 1.000000e+00 : f32
    %507 = vector.broadcast %cst_185 : f32 to vector<8x128xf32>
    %508 = arith.addf %507, %506 : vector<8x128xf32>
    %509 = tpu.reciprocal %508 {approx = true} : vector<8x128xf32> -> vector<8x128xf32>
    %510 = arith.mulf %500, %477 : vector<8x128xf32>
    %511 = arith.mulf %493, %502 : vector<8x128xf32>
    %512 = arith.addf %510, %511 : vector<8x128xf32>
    %513 = math.tanh %512 : vector<8x128xf32>
    %514 = arith.mulf %509, %513 : vector<8x128xf32>
    %c5_i32_186 = arith.constant 5 : i32
    %515 = arith.index_cast %c5_i32_186 : i32 to index
    %c0_187 = arith.constant 0 : index
    %c0_188 = arith.constant 0 : index
    %516 = vector.load %arg11[%515, %c0_187, %c0_188] : memref<8x8x512xf32, #tpu.memory_space<vmem>>, vector<1x8x512xf32>
    %517 = vector.shape_cast %516 : vector<1x8x512xf32> to vector<8x512xf32>
    %518 = arith.truncf %514 : vector<8x128xf32> to vector<8x128xbf16>
    %c0_189 = arith.constant 0 : index
    %c0_190 = arith.constant 0 : index
    %519 = vector.load %arg5[%c0_189, %c0_190] : memref<128x512xbf16, #tpu.memory_space<vmem>>, vector<128x512xbf16>
    %cst_191 = arith.constant dense<0.000000e+00> : vector<8x512xf32>
    %520 = tpu.matmul %518, %519, %cst_191 {dimension_numbers = #tpu.dot_dimension_numbers<[1], [0], [0], [1], [0, 0, 1, 1], [], []>} : vector<8x128xbf16>, vector<128x512xbf16>, vector<8x512xf32> -> vector<8x512xf32>
    %521 = arith.addf %517, %520 : vector<8x512xf32>
    %522 = vector.extract_strided_slice %521 {offsets = [0, 0], sizes = [8, 128], strides = [1, 1]} : vector<8x512xf32> to vector<8x128xf32>
    %cst_192 = arith.constant 0.000000e+00 : f32
    %523 = vector.broadcast %cst_192 : f32 to vector<8x128xf32>
    %524 = arith.subf %523, %522 : vector<8x128xf32>
    %525 = math.exp %524 : vector<8x128xf32>
    %cst_193 = arith.constant 1.000000e+00 : f32
    %526 = vector.broadcast %cst_193 : f32 to vector<8x128xf32>
    %527 = arith.addf %526, %525 : vector<8x128xf32>
    %528 = tpu.reciprocal %527 {approx = true} : vector<8x128xf32> -> vector<8x128xf32>
    %529 = vector.extract_strided_slice %521 {offsets = [0, 128], sizes = [8, 128], strides = [1, 1]} : vector<8x512xf32> to vector<8x128xf32>
    %cst_194 = arith.constant 0.000000e+00 : f32
    %530 = vector.broadcast %cst_194 : f32 to vector<8x128xf32>
    %531 = arith.subf %530, %529 : vector<8x128xf32>
    %532 = math.exp %531 : vector<8x128xf32>
    %cst_195 = arith.constant 1.000000e+00 : f32
    %533 = vector.broadcast %cst_195 : f32 to vector<8x128xf32>
    %534 = arith.addf %533, %532 : vector<8x128xf32>
    %535 = tpu.reciprocal %534 {approx = true} : vector<8x128xf32> -> vector<8x128xf32>
    %536 = vector.extract_strided_slice %521 {offsets = [0, 256], sizes = [8, 128], strides = [1, 1]} : vector<8x512xf32> to vector<8x128xf32>
    %537 = math.tanh %536 : vector<8x128xf32>
    %538 = vector.extract_strided_slice %521 {offsets = [0, 384], sizes = [8, 128], strides = [1, 1]} : vector<8x512xf32> to vector<8x128xf32>
    %cst_196 = arith.constant 0.000000e+00 : f32
    %539 = vector.broadcast %cst_196 : f32 to vector<8x128xf32>
    %540 = arith.subf %539, %538 : vector<8x128xf32>
    %541 = math.exp %540 : vector<8x128xf32>
    %cst_197 = arith.constant 1.000000e+00 : f32
    %542 = vector.broadcast %cst_197 : f32 to vector<8x128xf32>
    %543 = arith.addf %542, %541 : vector<8x128xf32>
    %544 = tpu.reciprocal %543 {approx = true} : vector<8x128xf32> -> vector<8x128xf32>
    %545 = arith.mulf %535, %512 : vector<8x128xf32>
    %546 = arith.mulf %528, %537 : vector<8x128xf32>
    %547 = arith.addf %545, %546 : vector<8x128xf32>
    %548 = math.tanh %547 : vector<8x128xf32>
    %549 = arith.mulf %544, %548 : vector<8x128xf32>
    %c6_i32_198 = arith.constant 6 : i32
    %550 = arith.index_cast %c6_i32_198 : i32 to index
    %c0_199 = arith.constant 0 : index
    %c0_200 = arith.constant 0 : index
    %551 = vector.load %arg11[%550, %c0_199, %c0_200] : memref<8x8x512xf32, #tpu.memory_space<vmem>>, vector<1x8x512xf32>
    %552 = vector.shape_cast %551 : vector<1x8x512xf32> to vector<8x512xf32>
    %553 = arith.truncf %549 : vector<8x128xf32> to vector<8x128xbf16>
    %c0_201 = arith.constant 0 : index
    %c0_202 = arith.constant 0 : index
    %554 = vector.load %arg5[%c0_201, %c0_202] : memref<128x512xbf16, #tpu.memory_space<vmem>>, vector<128x512xbf16>
    %cst_203 = arith.constant dense<0.000000e+00> : vector<8x512xf32>
    %555 = tpu.matmul %553, %554, %cst_203 {dimension_numbers = #tpu.dot_dimension_numbers<[1], [0], [0], [1], [0, 0, 1, 1], [], []>} : vector<8x128xbf16>, vector<128x512xbf16>, vector<8x512xf32> -> vector<8x512xf32>
    %556 = arith.addf %552, %555 : vector<8x512xf32>
    %557 = vector.extract_strided_slice %556 {offsets = [0, 0], sizes = [8, 128], strides = [1, 1]} : vector<8x512xf32> to vector<8x128xf32>
    %cst_204 = arith.constant 0.000000e+00 : f32
    %558 = vector.broadcast %cst_204 : f32 to vector<8x128xf32>
    %559 = arith.subf %558, %557 : vector<8x128xf32>
    %560 = math.exp %559 : vector<8x128xf32>
    %cst_205 = arith.constant 1.000000e+00 : f32
    %561 = vector.broadcast %cst_205 : f32 to vector<8x128xf32>
    %562 = arith.addf %561, %560 : vector<8x128xf32>
    %563 = tpu.reciprocal %562 {approx = true} : vector<8x128xf32> -> vector<8x128xf32>
    %564 = vector.extract_strided_slice %556 {offsets = [0, 128], sizes = [8, 128], strides = [1, 1]} : vector<8x512xf32> to vector<8x128xf32>
    %cst_206 = arith.constant 0.000000e+00 : f32
    %565 = vector.broadcast %cst_206 : f32 to vector<8x128xf32>
    %566 = arith.subf %565, %564 : vector<8x128xf32>
    %567 = math.exp %566 : vector<8x128xf32>
    %cst_207 = arith.constant 1.000000e+00 : f32
    %568 = vector.broadcast %cst_207 : f32 to vector<8x128xf32>
    %569 = arith.addf %568, %567 : vector<8x128xf32>
    %570 = tpu.reciprocal %569 {approx = true} : vector<8x128xf32> -> vector<8x128xf32>
    %571 = vector.extract_strided_slice %556 {offsets = [0, 256], sizes = [8, 128], strides = [1, 1]} : vector<8x512xf32> to vector<8x128xf32>
    %572 = math.tanh %571 : vector<8x128xf32>
    %573 = vector.extract_strided_slice %556 {offsets = [0, 384], sizes = [8, 128], strides = [1, 1]} : vector<8x512xf32> to vector<8x128xf32>
    %cst_208 = arith.constant 0.000000e+00 : f32
    %574 = vector.broadcast %cst_208 : f32 to vector<8x128xf32>
    %575 = arith.subf %574, %573 : vector<8x128xf32>
    %576 = math.exp %575 : vector<8x128xf32>
    %cst_209 = arith.constant 1.000000e+00 : f32
    %577 = vector.broadcast %cst_209 : f32 to vector<8x128xf32>
    %578 = arith.addf %577, %576 : vector<8x128xf32>
    %579 = tpu.reciprocal %578 {approx = true} : vector<8x128xf32> -> vector<8x128xf32>
    %580 = arith.mulf %570, %547 : vector<8x128xf32>
    %581 = arith.mulf %563, %572 : vector<8x128xf32>
    %582 = arith.addf %580, %581 : vector<8x128xf32>
    %583 = math.tanh %582 : vector<8x128xf32>
    %584 = arith.mulf %579, %583 : vector<8x128xf32>
    %c7_i32_210 = arith.constant 7 : i32
    %585 = arith.index_cast %c7_i32_210 : i32 to index
    %c0_211 = arith.constant 0 : index
    %c0_212 = arith.constant 0 : index
    %586 = vector.load %arg11[%585, %c0_211, %c0_212] : memref<8x8x512xf32, #tpu.memory_space<vmem>>, vector<1x8x512xf32>
    %587 = vector.shape_cast %586 : vector<1x8x512xf32> to vector<8x512xf32>
    %588 = arith.truncf %584 : vector<8x128xf32> to vector<8x128xbf16>
    %c0_213 = arith.constant 0 : index
    %c0_214 = arith.constant 0 : index
    %589 = vector.load %arg5[%c0_213, %c0_214] : memref<128x512xbf16, #tpu.memory_space<vmem>>, vector<128x512xbf16>
    %cst_215 = arith.constant dense<0.000000e+00> : vector<8x512xf32>
    %590 = tpu.matmul %588, %589, %cst_215 {dimension_numbers = #tpu.dot_dimension_numbers<[1], [0], [0], [1], [0, 0, 1, 1], [], []>} : vector<8x128xbf16>, vector<128x512xbf16>, vector<8x512xf32> -> vector<8x512xf32>
    %591 = arith.addf %587, %590 : vector<8x512xf32>
    %592 = vector.extract_strided_slice %591 {offsets = [0, 0], sizes = [8, 128], strides = [1, 1]} : vector<8x512xf32> to vector<8x128xf32>
    %cst_216 = arith.constant 0.000000e+00 : f32
    %593 = vector.broadcast %cst_216 : f32 to vector<8x128xf32>
    %594 = arith.subf %593, %592 : vector<8x128xf32>
    %595 = math.exp %594 : vector<8x128xf32>
    %cst_217 = arith.constant 1.000000e+00 : f32
    %596 = vector.broadcast %cst_217 : f32 to vector<8x128xf32>
    %597 = arith.addf %596, %595 : vector<8x128xf32>
    %598 = tpu.reciprocal %597 {approx = true} : vector<8x128xf32> -> vector<8x128xf32>
    %599 = vector.extract_strided_slice %591 {offsets = [0, 128], sizes = [8, 128], strides = [1, 1]} : vector<8x512xf32> to vector<8x128xf32>
    %cst_218 = arith.constant 0.000000e+00 : f32
    %600 = vector.broadcast %cst_218 : f32 to vector<8x128xf32>
    %601 = arith.subf %600, %599 : vector<8x128xf32>
    %602 = math.exp %601 : vector<8x128xf32>
    %cst_219 = arith.constant 1.000000e+00 : f32
    %603 = vector.broadcast %cst_219 : f32 to vector<8x128xf32>
    %604 = arith.addf %603, %602 : vector<8x128xf32>
    %605 = tpu.reciprocal %604 {approx = true} : vector<8x128xf32> -> vector<8x128xf32>
    %606 = vector.extract_strided_slice %591 {offsets = [0, 256], sizes = [8, 128], strides = [1, 1]} : vector<8x512xf32> to vector<8x128xf32>
    %607 = math.tanh %606 : vector<8x128xf32>
    %608 = vector.extract_strided_slice %591 {offsets = [0, 384], sizes = [8, 128], strides = [1, 1]} : vector<8x512xf32> to vector<8x128xf32>
    %cst_220 = arith.constant 0.000000e+00 : f32
    %609 = vector.broadcast %cst_220 : f32 to vector<8x128xf32>
    %610 = arith.subf %609, %608 : vector<8x128xf32>
    %611 = math.exp %610 : vector<8x128xf32>
    %cst_221 = arith.constant 1.000000e+00 : f32
    %612 = vector.broadcast %cst_221 : f32 to vector<8x128xf32>
    %613 = arith.addf %612, %611 : vector<8x128xf32>
    %614 = tpu.reciprocal %613 {approx = true} : vector<8x128xf32> -> vector<8x128xf32>
    %615 = arith.mulf %605, %582 : vector<8x128xf32>
    %616 = arith.mulf %598, %607 : vector<8x128xf32>
    %617 = arith.addf %615, %616 : vector<8x128xf32>
    %618 = math.tanh %617 : vector<8x128xf32>
    %619 = arith.mulf %614, %618 : vector<8x128xf32>
    %c8_i32_222 = arith.constant 8 : i32
    %c0_223 = arith.constant 0 : index
    %c0_224 = arith.constant 0 : index
    %620 = vector.load %arg7[%c0_223, %c0_224] : memref<128x128xf32, #tpu.memory_space<vmem>>, vector<128x128xf32>
    %cst_225 = arith.constant dense<0.000000e+00> : vector<8x128xf32>
    %621 = tpu.matmul %619, %620, %cst_225 {dimension_numbers = #tpu.dot_dimension_numbers<[1], [0], [0], [1], [0, 0, 1, 1], [], []>} : vector<8x128xf32>, vector<128x128xf32>, vector<8x128xf32> -> vector<8x128xf32>
    %c0_226 = arith.constant 0 : index
    %c0_227 = arith.constant 0 : index
    %622 = vector.load %arg8[%c0_226, %c0_227] : memref<1x128xf32, #tpu.memory_space<vmem>>, vector<1x128xf32>
    %623 = vector.broadcast %622 : vector<1x128xf32> to vector<8x128xf32>
    %624 = arith.addf %621, %623 : vector<8x128xf32>
    %c0_228 = arith.constant 0 : index
    %c0_229 = arith.constant 0 : index
    %625 = vector.load %arg9[%c0_228, %c0_229] : memref<8x128xf32, #tpu.memory_space<vmem>>, vector<8x128xf32>
    tpu.vector_store %arg9[%c0_228, %c0_229], %624 {strides = array<i32>} : memref<8x128xf32, #tpu.memory_space<vmem>>, vector<8x128xf32>,
    return
  }
}

</mosaic_0001>

<llo_original>
// kernel: lstm_model_forward.1
$region0: #{lstm_model_forward.1}
  #allocation0 [shape = 'u32[]', space=smem, size = 0x4, offset = 0x4, fixed_abs, tag = 'smem constant byte address 0x4 - core index']
  #allocation1 [shape = 'u32[72,128]{1,0:T(1,128)}', space=vmem, size = 0x9000, scoped, tag = 'internal scratch']
  #allocation2 [shape = 'bf16[8,8,128]{2,1,0:T(8,128)(2,1)}', space=vmem, size = 0x4000, scoped, tag = 'scratch operand']
  #allocation3 [shape = 'f32[8,8,512]{2,1,0:T(8,128)}', space=vmem, size = 0x20000, scoped, tag = 'scratch operand']
  %s0 = inlined_call_operand.vmem [shape: bf16[8,8,128], index: 0, kind: input, shape index: {}]
  %s1 = inlined_call_operand.vmem [shape: bf16[128,512], index: 1, kind: input, shape index: {}]
  %s2 = inlined_call_operand.vmem [shape: bf16[128,512], index: 2, kind: input, shape index: {}]
  %s3 = inlined_call_operand.vmem [shape: f32[1,512], index: 3, kind: input, shape index: {}]
  %s4 = inlined_call_operand.vmem [shape: bf16[128,512], index: 4, kind: input, shape index: {}]
  %s5 = inlined_call_operand.vmem [shape: bf16[128,512], index: 5, kind: input, shape index: {}]
  %s6 = inlined_call_operand.vmem [shape: f32[1,512], index: 6, kind: input, shape index: {}]
  %s7 = inlined_call_operand.vmem [shape: f32[128,128], index: 7, kind: input, shape index: {}]
  %s8 = inlined_call_operand.vmem [shape: f32[1,128], index: 8, kind: input, shape index: {}]
  %s9 = inlined_call_operand.vmem [shape: f32[8,128], index: 9, kind: output, shape index: {}]
  %s10 = sld [smem:[#allocation0]]
  $region46: #{lstm_model_forward.1} parent=0
    _
  %s12 = ssub.s32 1, %s10
  %s13 = scalar_select 0, %s12, %s10
  // Predicated region
  $region2: #{lstm_model_forward.1} parent=0 // pred_check
    _
  $region3: #{lstm_model_forward.1} parent=0 // pred_check_branch
    %15 = sbr.rel (0) target = $region5
  $region4: #{lstm_model_forward.1} parent=0 // pred_region
    _
  $region5: #{lstm_model_forward.1} parent=0 // pred_fallthru
    _
  // Predicated region
  $region6: #{lstm_model_forward.1} parent=0 // pred_check
    _
  $region7: #{lstm_model_forward.1} parent=0 // pred_check_branch
    %17 = sbr.rel (0) target = $region9
  $region8: #{lstm_model_forward.1} parent=0 // pred_region
    _
  $region9: #{lstm_model_forward.1} parent=0 // pred_fallthru
    _
  // Predicated region
  $region10: #{lstm_model_forward.1} parent=0 // pred_check
    _
  $region11: #{lstm_model_forward.1} parent=0 // pred_check_branch
    %19 = sbr.rel (0) target = $region13
  $region12: #{lstm_model_forward.1} parent=0 // pred_region
    _
  $region13: #{lstm_model_forward.1} parent=0 // pred_fallthru
    _
  // Predicated region
  $region14: #{lstm_model_forward.1} parent=0 // pred_check
    _
  $region15: #{lstm_model_forward.1} parent=0 // pred_check_branch
    %21 = sbr.rel (0) target = $region17
  $region16: #{lstm_model_forward.1} parent=0 // pred_region
    _
  $region17: #{lstm_model_forward.1} parent=0 // pred_fallthru
    _
  // Predicated region
  $region18: #{lstm_model_forward.1} parent=0 // pred_check
    _
  $region19: #{lstm_model_forward.1} parent=0 // pred_check_branch
    %23 = sbr.rel (0) target = $region21
  $region20: #{lstm_model_forward.1} parent=0 // pred_region
    _
  $region21: #{lstm_model_forward.1} parent=0 // pred_fallthru
    _
  // Predicated region
  $region22: #{lstm_model_forward.1} parent=0 // pred_check
    _
  $region23: #{lstm_model_forward.1} parent=0 // pred_check_branch
    %25 = sbr.rel (0) target = $region25
  $region24: #{lstm_model_forward.1} parent=0 // pred_region
    _
  $region25: #{lstm_model_forward.1} parent=0 // pred_fallthru
    _
  // Predicated region
  $region26: #{lstm_model_forward.1} parent=0 // pred_check
    _
  $region27: #{lstm_model_forward.1} parent=0 // pred_check_branch
    %27 = sbr.rel (0) target = $region29
  $region28: #{lstm_model_forward.1} parent=0 // pred_region
    _
  $region29: #{lstm_model_forward.1} parent=0 // pred_fallthru
    _
  // Predicated region
  $region30: #{lstm_model_forward.1} parent=0 // pred_check
    _
  $region31: #{lstm_model_forward.1} parent=0 // pred_check_branch
    %29 = sbr.rel (0) target = $region33
  $region32: #{lstm_model_forward.1} parent=0 // pred_region
    _
  $region33: #{lstm_model_forward.1} parent=0 // pred_fallthru
    _
  // Predicated region
  $region34: #{lstm_model_forward.1} parent=0 // pred_check
    _
  $region35: #{lstm_model_forward.1} parent=0 // pred_check_branch
    %31 = sbr.rel (0) target = $region37
  $region36: #{lstm_model_forward.1} parent=0 // pred_region
    _
  $region37: #{lstm_model_forward.1} parent=0 // pred_fallthru
    _
  %v33 = vld [vmem:[%s0] sm:$0xf]
  %v34 = vld [vmem:[%s0 + $0x4] sm:$0xf]
  %v35 = vld [vmem:[%s0 + $0x8] sm:$0xf]
  %v36 = vld [vmem:[%s0 + $0xc] sm:$0xf]
  %v37 = vld [vmem:[%s0 + $0x10] sm:$0xf]
  %v38 = vld [vmem:[%s0 + $0x14] sm:$0xf]
  %v39 = vld [vmem:[%s0 + $0x18] sm:$0xf]
  %v40 = vld [vmem:[%s0 + $0x1c] sm:$0xf]
  %v41 = vld [vmem:[%s1] sm:$0xff]
  %v42 = vld [vmem:[%s1 + $0x8] sm:$0xff]
  %v43 = vld [vmem:[%s1 + $0x10] sm:$0xff]
  %v44 = vld [vmem:[%s1 + $0x18] sm:$0xff]
  %v45 = vld [vmem:[%s1 + $0x20] sm:$0xff]
  %v46 = vld [vmem:[%s1 + $0x28] sm:$0xff]
  %v47 = vld [vmem:[%s1 + $0x30] sm:$0xff]
  %v48 = vld [vmem:[%s1 + $0x38] sm:$0xff]
  %v49 = vld [vmem:[%s1 + $0x40] sm:$0xff]
  %v50 = vld [vmem:[%s1 + $0x48] sm:$0xff]
  %v51 = vld [vmem:[%s1 + $0x50] sm:$0xff]
  %v52 = vld [vmem:[%s1 + $0x58] sm:$0xff]
  %v53 = vld [vmem:[%s1 + $0x60] sm:$0xff]
  %v54 = vld [vmem:[%s1 + $0x68] sm:$0xff]
  %v55 = vld [vmem:[%s1 + $0x70] sm:$0xff]
  %v56 = vld [vmem:[%s1 + $0x78] sm:$0xff]
  %v57 = vld [vmem:[%s1 + $0x80] sm:$0xff]
  %v58 = vld [vmem:[%s1 + $0x88] sm:$0xff]
  %v59 = vld [vmem:[%s1 + $0x90] sm:$0xff]
  %v60 = vld [vmem:[%s1 + $0x98] sm:$0xff]
  %v61 = vld [vmem:[%s1 + $0xa0] sm:$0xff]
  %v62 = vld [vmem:[%s1 + $0xa8] sm:$0xff]
  %v63 = vld [vmem:[%s1 + $0xb0] sm:$0xff]
  %v64 = vld [vmem:[%s1 + $0xb8] sm:$0xff]
  %v65 = vld [vmem:[%s1 + $0xc0] sm:$0xff]
  %v66 = vld [vmem:[%s1 + $0xc8] sm:$0xff]
  %v67 = vld [vmem:[%s1 + $0xd0] sm:$0xff]
  %v68 = vld [vmem:[%s1 + $0xd8] sm:$0xff]
  %v69 = vld [vmem:[%s1 + $0xe0] sm:$0xff]
  %v70 = vld [vmem:[%s1 + $0xe8] sm:$0xff]
  %v71 = vld [vmem:[%s1 + $0xf0] sm:$0xff]
  %v72 = vld [vmem:[%s1 + $0xf8] sm:$0xff]
  %v73 = vld [vmem:[%s3] sm:$0xf]
  %v75 = vperm.slane %v73, 0
  %v76 = vperm.slane %v73, 1
  %v77 = vperm.slane %v73, 2
  %v78 = vperm.slane %v73, 3
  %v91 = vunpack.c.l.b16 %v33
  %v92 = vunpack.c.l.b16 %v34
  %v93 = vunpack.c.l.b16 %v35
  %v94 = vunpack.c.l.b16 %v36
  %v95 = vunpack.c.l.b16 %v37
  %v96 = vunpack.c.l.b16 %v38
  %v97 = vunpack.c.l.b16 %v39
  %v98 = vunpack.c.l.b16 %v40
  %v99 = vpack.c.b16 %v92, %v91
  %v100 = vpack.c.b16 %v94, %v93
  %v101 = vpack.c.b16 %v96, %v95
  %v102 = vpack.c.b16 %v98, %v97
  %v139 = vunpack.c.l.b16 %v41
  %v140 = vunpack.c.h.b16 %v41
  %v141 = vunpack.c.l.b16 %v42
  %v142 = vunpack.c.h.b16 %v42
  %v143 = vunpack.c.l.b16 %v43
  %v144 = vunpack.c.h.b16 %v43
  %v145 = vunpack.c.l.b16 %v44
  %v146 = vunpack.c.h.b16 %v44
  %v147 = vunpack.c.l.b16 %v45
  %v148 = vunpack.c.h.b16 %v45
  %v149 = vunpack.c.l.b16 %v46
  %v150 = vunpack.c.h.b16 %v46
  %v151 = vunpack.c.l.b16 %v47
  %v152 = vunpack.c.h.b16 %v47
  %v153 = vunpack.c.l.b16 %v48
  %v154 = vunpack.c.h.b16 %v48
  %v155 = vunpack.c.l.b16 %v49
  %v156 = vunpack.c.h.b16 %v49
  %v157 = vunpack.c.l.b16 %v50
  %v158 = vunpack.c.h.b16 %v50
  %v159 = vunpack.c.l.b16 %v51
  %v160 = vunpack.c.h.b16 %v51
  %v161 = vunpack.c.l.b16 %v52
  %v162 = vunpack.c.h.b16 %v52
  %v163 = vunpack.c.l.b16 %v53
  %v164 = vunpack.c.h.b16 %v53
  %v165 = vunpack.c.l.b16 %v54
  %v166 = vunpack.c.h.b16 %v54
  %v167 = vunpack.c.l.b16 %v55
  %v168 = vunpack.c.h.b16 %v55
  %v169 = vunpack.c.l.b16 %v56
  %v170 = vunpack.c.h.b16 %v56
  %v171 = vunpack.c.l.b16 %v57
  %v172 = vunpack.c.h.b16 %v57
  %v173 = vunpack.c.l.b16 %v58
  %v174 = vunpack.c.h.b16 %v58
  %v175 = vunpack.c.l.b16 %v59
  %v176 = vunpack.c.h.b16 %v59
  %v177 = vunpack.c.l.b16 %v60
  %v178 = vunpack.c.h.b16 %v60
  %v179 = vunpack.c.l.b16 %v61
  %v180 = vunpack.c.h.b16 %v61
  %v181 = vunpack.c.l.b16 %v62
  %v182 = vunpack.c.h.b16 %v62
  %v183 = vunpack.c.l.b16 %v63
  %v184 = vunpack.c.h.b16 %v63
  %v185 = vunpack.c.l.b16 %v64
  %v186 = vunpack.c.h.b16 %v64
  %v187 = vunpack.c.l.b16 %v65
  %v188 = vunpack.c.h.b16 %v65
  %v189 = vunpack.c.l.b16 %v66
  %v190 = vunpack.c.h.b16 %v66
  %v191 = vunpack.c.l.b16 %v67
  %v192 = vunpack.c.h.b16 %v67
  %v193 = vunpack.c.l.b16 %v68
  %v194 = vunpack.c.h.b16 %v68
  %v195 = vunpack.c.l.b16 %v69
  %v196 = vunpack.c.h.b16 %v69
  %v197 = vunpack.c.l.b16 %v70
  %v198 = vunpack.c.h.b16 %v70
  %v199 = vunpack.c.l.b16 %v71
  %v200 = vunpack.c.h.b16 %v71
  %v201 = vunpack.c.l.b16 %v72
  %v202 = vunpack.c.h.b16 %v72
  %v203 = vpack.c.b16 %v143, %v139
  %v204 = vpack.c.b16 %v144, %v140
  %v205 = vpack.c.b16 %v145, %v141
  %v206 = vpack.c.b16 %v146, %v142
  %v207 = vpack.c.b16 %v151, %v147
  %v208 = vpack.c.b16 %v152, %v148
  %v209 = vpack.c.b16 %v153, %v149
  %v210 = vpack.c.b16 %v154, %v150
  %v211 = vpack.c.b16 %v159, %v155
  %v212 = vpack.c.b16 %v160, %v156
  %v213 = vpack.c.b16 %v161, %v157
  %v214 = vpack.c.b16 %v162, %v158
  %v215 = vpack.c.b16 %v167, %v163
  %v216 = vpack.c.b16 %v168, %v164
  %v217 = vpack.c.b16 %v169, %v165
  %v218 = vpack.c.b16 %v170, %v166
  %v219 = vpack.c.b16 %v175, %v171
  %v220 = vpack.c.b16 %v176, %v172
  %v221 = vpack.c.b16 %v177, %v173
  %v222 = vpack.c.b16 %v178, %v174
  %v223 = vpack.c.b16 %v183, %v179
  %v224 = vpack.c.b16 %v184, %v180
  %v225 = vpack.c.b16 %v185, %v181
  %v226 = vpack.c.b16 %v186, %v182
  %v227 = vpack.c.b16 %v191, %v187
  %v228 = vpack.c.b16 %v192, %v188
  %v229 = vpack.c.b16 %v193, %v189
  %v230 = vpack.c.b16 %v194, %v190
  %v231 = vpack.c.b16 %v199, %v195
  %v232 = vpack.c.b16 %v200, %v196
  %v233 = vpack.c.b16 %v201, %v197
  %v234 = vpack.c.b16 %v202, %v198
  %267 = vmatpush.bf16.msra.mxu0 %v231
  %268 = vmatpush.bf16.msra.mxu0 %v227
  %269 = vmatpush.bf16.msra.mxu0 %v223
  %270 = vmatpush.bf16.msra.mxu0 %v219
  %271 = vmatpush.bf16.msra.mxu0 %v215
  %272 = vmatpush.bf16.msra.mxu0 %v211
  %273 = vmatpush.bf16.msra.mxu0 %v207
  %274 = vmatpush.bf16.msra.mxu0 %v203
  %275 = vmatmul.bf16.gmra.mxu0 %v99
  %v276 = vpop.f32.mrf.mxu0
  %v277 = vadd.f32 %v75, %v276
  %v278 = vpop.f32.mrf.mxu0
  %v279 = vadd.f32 %v75, %v278
  %280 = vmatmul.bf16.gmra.mxu0 %v100
  %v281 = vpop.f32.mrf.mxu0
  %v282 = vadd.f32 %v75, %v281
  %v283 = vpop.f32.mrf.mxu0
  %v284 = vadd.f32 %v75, %v283
  %285 = vmatmul.bf16.gmra.mxu0 %v101
  %v286 = vpop.f32.mrf.mxu0
  %v287 = vadd.f32 %v75, %v286
  %v288 = vpop.f32.mrf.mxu0
  %v289 = vadd.f32 %v75, %v288
  %290 = vmatmul.bf16.gmra.mxu0 %v102
  %v291 = vpop.f32.mrf.mxu0
  %v292 = vadd.f32 %v75, %v291
  %v293 = vpop.f32.mrf.mxu0
  %v294 = vadd.f32 %v75, %v293
  %295 = vdwg.mxu0
  %296 = vmatpush.bf16.msra.mxu0 %v232
  %297 = vmatpush.bf16.msra.mxu0 %v228
  %298 = vmatpush.bf16.msra.mxu0 %v224
  %299 = vmatpush.bf16.msra.mxu0 %v220
  %300 = vmatpush.bf16.msra.mxu0 %v216
  %301 = vmatpush.bf16.msra.mxu0 %v212
  %302 = vmatpush.bf16.msra.mxu0 %v208
  %303 = vmatpush.bf16.msra.mxu0 %v204
  %304 = vmatmul.bf16.gmra.mxu0 %v99
  %v305 = vpop.f32.mrf.mxu0
  %v306 = vadd.f32 %v76, %v305
  %v307 = vpop.f32.mrf.mxu0
  %v308 = vadd.f32 %v76, %v307
  %309 = vmatmul.bf16.gmra.mxu0 %v100
  %v310 = vpop.f32.mrf.mxu0
  %v311 = vadd.f32 %v76, %v310
  %v312 = vpop.f32.mrf.mxu0
  %v313 = vadd.f32 %v76, %v312
  %314 = vmatmul.bf16.gmra.mxu0 %v101
  %v315 = vpop.f32.mrf.mxu0
  %v316 = vadd.f32 %v76, %v315
  %v317 = vpop.f32.mrf.mxu0
  %v318 = vadd.f32 %v76, %v317
  %319 = vmatmul.bf16.gmra.mxu0 %v102
  %v320 = vpop.f32.mrf.mxu0
  %v321 = vadd.f32 %v76, %v320
  %v322 = vpop.f32.mrf.mxu0
  %v323 = vadd.f32 %v76, %v322
  %324 = vdwg.mxu0
  %325 = vmatpush.bf16.msra.mxu0 %v233
  %326 = vmatpush.bf16.msra.mxu0 %v229
  %327 = vmatpush.bf16.msra.mxu0 %v225
  %328 = vmatpush.bf16.msra.mxu0 %v221
  %329 = vmatpush.bf16.msra.mxu0 %v217
  %330 = vmatpush.bf16.msra.mxu0 %v213
  %331 = vmatpush.bf16.msra.mxu0 %v209
  %332 = vmatpush.bf16.msra.mxu0 %v205
  %333 = vmatmul.bf16.gmra.mxu0 %v99
  %v334 = vpop.f32.mrf.mxu0
  %v335 = vadd.f32 %v77, %v334
  %v336 = vpop.f32.mrf.mxu0
  %v337 = vadd.f32 %v77, %v336
  %338 = vmatmul.bf16.gmra.mxu0 %v100
  %v339 = vpop.f32.mrf.mxu0
  %v340 = vadd.f32 %v77, %v339
  %v341 = vpop.f32.mrf.mxu0
  %v342 = vadd.f32 %v77, %v341
  %343 = vmatmul.bf16.gmra.mxu0 %v101
  %v344 = vpop.f32.mrf.mxu0
  %v345 = vadd.f32 %v77, %v344
  %v346 = vpop.f32.mrf.mxu0
  %v347 = vadd.f32 %v77, %v346
  %348 = vmatmul.bf16.gmra.mxu0 %v102
  %v349 = vpop.f32.mrf.mxu0
  %v350 = vadd.f32 %v77, %v349
  %v351 = vpop.f32.mrf.mxu0
  %v352 = vadd.f32 %v77, %v351
  %353 = vdwg.mxu0
  %354 = vmatpush.bf16.msra.mxu0 %v234
  %355 = vmatpush.bf16.msra.mxu0 %v230
  %356 = vmatpush.bf16.msra.mxu0 %v226
  %357 = vmatpush.bf16.msra.mxu0 %v222
  %358 = vmatpush.bf16.msra.mxu0 %v218
  %359 = vmatpush.bf16.msra.mxu0 %v214
  %360 = vmatpush.bf16.msra.mxu0 %v210
  %361 = vmatpush.bf16.msra.mxu0 %v206
  %362 = vmatmul.bf16.gmra.mxu0 %v99
  %v363 = vpop.f32.mrf.mxu0
  %v364 = vadd.f32 %v78, %v363
  %v365 = vpop.f32.mrf.mxu0
  %v366 = vadd.f32 %v78, %v365
  %367 = vmatmul.bf16.gmra.mxu0 %v100
  %v368 = vpop.f32.mrf.mxu0
  %v369 = vadd.f32 %v78, %v368
  %v370 = vpop.f32.mrf.mxu0
  %v371 = vadd.f32 %v78, %v370
  %372 = vmatmul.bf16.gmra.mxu0 %v101
  %v373 = vpop.f32.mrf.mxu0
  %v374 = vadd.f32 %v78, %v373
  %v375 = vpop.f32.mrf.mxu0
  %v376 = vadd.f32 %v78, %v375
  %377 = vmatmul.bf16.gmra.mxu0 %v102
  %v378 = vpop.f32.mrf.mxu0
  %v379 = vadd.f32 %v78, %v378
  %v380 = vpop.f32.mrf.mxu0
  %v381 = vadd.f32 %v78, %v380
  %382 = vdwg.mxu0
  %383 = vst [vmem:[#allocation3] sm:$0xff] %v277
  %384 = vst [vmem:[#allocation3 + $0x8] sm:$0xff] %v306
  %385 = vst [vmem:[#allocation3 + $0x10] sm:$0xff] %v335
  %386 = vst [vmem:[#allocation3 + $0x18] sm:$0xff] %v364
  %387 = vst [vmem:[#allocation3 + $0x20] sm:$0xff] %v279
  %388 = vst [vmem:[#allocation3 + $0x28] sm:$0xff] %v308
  %389 = vst [vmem:[#allocation3 + $0x30] sm:$0xff] %v337
  %390 = vst [vmem:[#allocation3 + $0x38] sm:$0xff] %v366
  %391 = vst [vmem:[#allocation3 + $0x40] sm:$0xff] %v282
  %392 = vst [vmem:[#allocation3 + $0x48] sm:$0xff] %v311
  %393 = vst [vmem:[#allocation3 + $0x50] sm:$0xff] %v340
  %394 = vst [vmem:[#allocation3 + $0x58] sm:$0xff] %v369
  %395 = vst [vmem:[#allocation3 + $0x60] sm:$0xff] %v284
  %396 = vst [vmem:[#allocation3 + $0x68] sm:$0xff] %v313
  %397 = vst [vmem:[#allocation3 + $0x70] sm:$0xff] %v342
  %398 = vst [vmem:[#allocation3 + $0x78] sm:$0xff] %v371
  %399 = vst [vmem:[#allocation3 + $0x80] sm:$0xff] %v287
  %400 = vst [vmem:[#allocation3 + $0x88] sm:$0xff] %v316
  %401 = vst [vmem:[#allocation3 + $0x90] sm:$0xff] %v345
  %402 = vst [vmem:[#allocation3 + $0x98] sm:$0xff] %v374
  %403 = vst [vmem:[#allocation3 + $0xa0] sm:$0xff] %v289
  %404 = vst [vmem:[#allocation3 + $0xa8] sm:$0xff] %v318
  %405 = vst [vmem:[#allocation3 + $0xb0] sm:$0xff] %v347
  %406 = vst [vmem:[#allocation3 + $0xb8] sm:$0xff] %v376
  %407 = vst [vmem:[#allocation3 + $0xc0] sm:$0xff] %v292
  %408 = vst [vmem:[#allocation3 + $0xc8] sm:$0xff] %v321
  %409 = vst [vmem:[#allocation3 + $0xd0] sm:$0xff] %v350
  %410 = vst [vmem:[#allocation3 + $0xd8] sm:$0xff] %v379
  %411 = vst [vmem:[#allocation3 + $0xe0] sm:$0xff] %v294
  %412 = vst [vmem:[#allocation3 + $0xe8] sm:$0xff] %v323
  %413 = vst [vmem:[#allocation3 + $0xf0] sm:$0xff] %v352
  %414 = vst [vmem:[#allocation3 + $0xf8] sm:$0xff] %v381
  %v415 = vld [vmem:[#allocation3] sm:$0xff]
  %v416 = vld [vmem:[#allocation3 + $0x8] sm:$0xff]
  %v417 = vld [vmem:[#allocation3 + $0x10] sm:$0xff]
  %v418 = vld [vmem:[#allocation3 + $0x18] sm:$0xff]
  %v419 = vld [vmem:[%s2] sm:$0xff]
  %v420 = vld [vmem:[%s2 + $0x8] sm:$0xff]
  %v421 = vld [vmem:[%s2 + $0x10] sm:$0xff]
  %v422 = vld [vmem:[%s2 + $0x18] sm:$0xff]
  %v423 = vld [vmem:[%s2 + $0x20] sm:$0xff]
  %v424 = vld [vmem:[%s2 + $0x28] sm:$0xff]
  %v425 = vld [vmem:[%s2 + $0x30] sm:$0xff]
  %v426 = vld [vmem:[%s2 + $0x38] sm:$0xff]
  %v427 = vld [vmem:[%s2 + $0x40] sm:$0xff]
  %v428 = vld [vmem:[%s2 + $0x48] sm:$0xff]
  %v429 = vld [vmem:[%s2 + $0x50] sm:$0xff]
  %v430 = vld [vmem:[%s2 + $0x58] sm:$0xff]
  %v431 = vld [vmem:[%s2 + $0x60] sm:$0xff]
  %v432 = vld [vmem:[%s2 + $0x68] sm:$0xff]
  %v433 = vld [vmem:[%s2 + $0x70] sm:$0xff]
  %v434 = vld [vmem:[%s2 + $0x78] sm:$0xff]
  %v435 = vld [vmem:[%s2 + $0x80] sm:$0xff]
  %v436 = vld [vmem:[%s2 + $0x88] sm:$0xff]
  %v437 = vld [vmem:[%s2 + $0x90] sm:$0xff]
  %v438 = vld [vmem:[%s2 + $0x98] sm:$0xff]
  %v439 = vld [vmem:[%s2 + $0xa0] sm:$0xff]
  %v440 = vld [vmem:[%s2 + $0xa8] sm:$0xff]
  %v441 = vld [vmem:[%s2 + $0xb0] sm:$0xff]
  %v442 = vld [vmem:[%s2 + $0xb8] sm:$0xff]
  %v443 = vld [vmem:[%s2 + $0xc0] sm:$0xff]
  %v444 = vld [vmem:[%s2 + $0xc8] sm:$0xff]
  %v445 = vld [vmem:[%s2 + $0xd0] sm:$0xff]
  %v446 = vld [vmem:[%s2 + $0xd8] sm:$0xff]
  %v447 = vld [vmem:[%s2 + $0xe0] sm:$0xff]
  %v448 = vld [vmem:[%s2 + $0xe8] sm:$0xff]
  %v449 = vld [vmem:[%s2 + $0xf0] sm:$0xff]
  %v450 = vld [vmem:[%s2 + $0xf8] sm:$0xff]
  %v483 = vunpack.c.l.b16 %v419
  %v484 = vunpack.c.h.b16 %v419
  %v485 = vunpack.c.l.b16 %v420
  %v486 = vunpack.c.h.b16 %v420
  %v487 = vunpack.c.l.b16 %v421
  %v488 = vunpack.c.h.b16 %v421
  %v489 = vunpack.c.l.b16 %v422
  %v490 = vunpack.c.h.b16 %v422
  %v491 = vunpack.c.l.b16 %v423
  %v492 = vunpack.c.h.b16 %v423
  %v493 = vunpack.c.l.b16 %v424
  %v494 = vunpack.c.h.b16 %v424
  %v495 = vunpack.c.l.b16 %v425
  %v496 = vunpack.c.h.b16 %v425
  %v497 = vunpack.c.l.b16 %v426
  %v498 = vunpack.c.h.b16 %v426
  %v499 = vunpack.c.l.b16 %v427
  %v500 = vunpack.c.h.b16 %v427
  %v501 = vunpack.c.l.b16 %v428
  %v502 = vunpack.c.h.b16 %v428
  %v503 = vunpack.c.l.b16 %v429
  %v504 = vunpack.c.h.b16 %v429
  %v505 = vunpack.c.l.b16 %v430
  %v506 = vunpack.c.h.b16 %v430
  %v507 = vunpack.c.l.b16 %v431
  %v508 = vunpack.c.h.b16 %v431
  %v509 = vunpack.c.l.b16 %v432
  %v510 = vunpack.c.h.b16 %v432
  %v511 = vunpack.c.l.b16 %v433
  %v512 = vunpack.c.h.b16 %v433
  %v513 = vunpack.c.l.b16 %v434
  %v514 = vunpack.c.h.b16 %v434
  %v515 = vunpack.c.l.b16 %v435
  %v516 = vunpack.c.h.b16 %v435
  %v517 = vunpack.c.l.b16 %v436
  %v518 = vunpack.c.h.b16 %v436
  %v519 = vunpack.c.l.b16 %v437
  %v520 = vunpack.c.h.b16 %v437
  %v521 = vunpack.c.l.b16 %v438
  %v522 = vunpack.c.h.b16 %v438
  %v523 = vunpack.c.l.b16 %v439
  %v524 = vunpack.c.h.b16 %v439
  %v525 = vunpack.c.l.b16 %v440
  %v526 = vunpack.c.h.b16 %v440
  %v527 = vunpack.c.l.b16 %v441
  %v528 = vunpack.c.h.b16 %v441
  %v529 = vunpack.c.l.b16 %v442
  %v530 = vunpack.c.h.b16 %v442
  %v531 = vunpack.c.l.b16 %v443
  %v532 = vunpack.c.h.b16 %v443
  %v533 = vunpack.c.l.b16 %v444
  %v534 = vunpack.c.h.b16 %v444
  %v535 = vunpack.c.l.b16 %v445
  %v536 = vunpack.c.h.b16 %v445
  %v537 = vunpack.c.l.b16 %v446
  %v538 = vunpack.c.h.b16 %v446
  %v539 = vunpack.c.l.b16 %v447
  %v540 = vunpack.c.h.b16 %v447
  %v541 = vunpack.c.l.b16 %v448
  %v542 = vunpack.c.h.b16 %v448
  %v543 = vunpack.c.l.b16 %v449
  %v544 = vunpack.c.h.b16 %v449
  %v545 = vunpack.c.l.b16 %v450
  %v546 = vunpack.c.h.b16 %v450
  %v547 = vpack.c.b16 %v487, %v483
  %v548 = vpack.c.b16 %v488, %v484
  %v549 = vpack.c.b16 %v489, %v485
  %v550 = vpack.c.b16 %v490, %v486
  %v551 = vpack.c.b16 %v495, %v491
  %v552 = vpack.c.b16 %v496, %v492
  %v553 = vpack.c.b16 %v497, %v493
  %v554 = vpack.c.b16 %v498, %v494
  %v555 = vpack.c.b16 %v503, %v499
  %v556 = vpack.c.b16 %v504, %v500
  %v557 = vpack.c.b16 %v505, %v501
  %v558 = vpack.c.b16 %v506, %v502
  %v559 = vpack.c.b16 %v511, %v507
  %v560 = vpack.c.b16 %v512, %v508
  %v561 = vpack.c.b16 %v513, %v509
  %v562 = vpack.c.b16 %v514, %v510
  %v563 = vpack.c.b16 %v519, %v515
  %v564 = vpack.c.b16 %v520, %v516
  %v565 = vpack.c.b16 %v521, %v517
  %v566 = vpack.c.b16 %v522, %v518
  %v567 = vpack.c.b16 %v527, %v523
  %v568 = vpack.c.b16 %v528, %v524
  %v569 = vpack.c.b16 %v529, %v525
  %v570 = vpack.c.b16 %v530, %v526
  %v571 = vpack.c.b16 %v535, %v531
  %v572 = vpack.c.b16 %v536, %v532
  %v573 = vpack.c.b16 %v537, %v533
  %v574 = vpack.c.b16 %v538, %v534
  %v575 = vpack.c.b16 %v543, %v539
  %v576 = vpack.c.b16 %v544, %v540
  %v577 = vpack.c.b16 %v545, %v541
  %v578 = vpack.c.b16 %v546, %v542
  %611 = vmatpush.bf16.msra.mxu0 %v575
  %612 = vmatpush.bf16.msra.mxu0 %v571
  %613 = vmatpush.bf16.msra.mxu0 %v567
  %614 = vmatpush.bf16.msra.mxu0 %v563
  %615 = vmatpush.bf16.msra.mxu0 %v559
  %616 = vmatpush.bf16.msra.mxu0 %v555
  %617 = vmatpush.bf16.msra.mxu0 %v551
  %618 = vmatpush.bf16.msra.mxu0 %v547
  %619 = vmatmul.bf16.gmra.mxu0 0
  %v620 = vpop.f32.mrf.mxu0
  %v621 = vadd.f32 0.0, %v620
  %v622 = vpop.f32.mrf.mxu0
  %623 = vdwg.mxu0
  %624 = vmatpush.bf16.msra.mxu0 %v576
  %625 = vmatpush.bf16.msra.mxu0 %v572
  %626 = vmatpush.bf16.msra.mxu0 %v568
  %627 = vmatpush.bf16.msra.mxu0 %v564
  %628 = vmatpush.bf16.msra.mxu0 %v560
  %629 = vmatpush.bf16.msra.mxu0 %v556
  %630 = vmatpush.bf16.msra.mxu0 %v552
  %631 = vmatpush.bf16.msra.mxu0 %v548
  %632 = vmatmul.bf16.gmra.mxu0 0
  %v633 = vpop.f32.mrf.mxu0
  %v634 = vadd.f32 0.0, %v633
  %v635 = vpop.f32.mrf.mxu0
  %636 = vdwg.mxu0
  %637 = vmatpush.bf16.msra.mxu0 %v577
  %638 = vmatpush.bf16.msra.mxu0 %v573
  %639 = vmatpush.bf16.msra.mxu0 %v569
  %640 = vmatpush.bf16.msra.mxu0 %v565
  %641 = vmatpush.bf16.msra.mxu0 %v561
  %642 = vmatpush.bf16.msra.mxu0 %v557
  %643 = vmatpush.bf16.msra.mxu0 %v553
  %644 = vmatpush.bf16.msra.mxu0 %v549
  %645 = vmatmul.bf16.gmra.mxu0 0
  %v646 = vpop.f32.mrf.mxu0
  %v647 = vadd.f32 0.0, %v646
  %v648 = vpop.f32.mrf.mxu0
  %649 = vdwg.mxu0
  %650 = vmatpush.bf16.msra.mxu0 %v578
  %651 = vmatpush.bf16.msra.mxu0 %v574
  %652 = vmatpush.bf16.msra.mxu0 %v570
  %653 = vmatpush.bf16.msra.mxu0 %v566
  %654 = vmatpush.bf16.msra.mxu0 %v562
  %655 = vmatpush.bf16.msra.mxu0 %v558
  %656 = vmatpush.bf16.msra.mxu0 %v554
  %657 = vmatpush.bf16.msra.mxu0 %v550
  %658 = vmatmul.bf16.gmra.mxu0 0
  %v659 = vpop.f32.mrf.mxu0
  %v660 = vadd.f32 0.0, %v659
  %v661 = vpop.f32.mrf.mxu0
  %662 = vdwg.mxu0
  %v663 = vadd.f32 %v415, %v621
  %v664 = vadd.f32 %v416, %v634
  %v665 = vadd.f32 %v417, %v647
  %v666 = vadd.f32 %v418, %v660
  %v667 = vsub.f32 0.0, %v663
  %v668 = vmul.f32 %v667, 1.442695
  %v669 = vpow.pop %v668
  %v670 = vadd.f32 %v669, 1.0
  %v671 = vrcp.pop %v670
  %v672 = vsub.f32 0.0, %v664
  %v673 = vmul.f32 %v672, 1.442695
  %v674 = vpow.pop %v673
  %v675 = vadd.f32 %v674, 1.0
  %v676 = vrcp.pop %v675
  %v677 = vtanh.pop %v665
  %v678 = vsub.f32 0.0, %v666
  %v679 = vmul.f32 %v678, 1.442695
  %v680 = vpow.pop %v679
  %v681 = vadd.f32 %v680, 1.0
  %v682 = vrcp.pop %v681
  %v683 = vmul.f32 %v676, 0.0
  %v684 = vmul.f32 %v671, %v677
  %v685 = vadd.f32 %v683, %v684
  %v686 = vtanh.pop %v685
  %v687 = vmul.f32 %v682, %v686
  %v688 = vpack.c.bf16 %v687, %v687
  %689 = vst [vmem:[#allocation2] sm:$0xf] %v688
  %s690 = scalar_lea.vmem [#allocation3], 32
  %v691 = vld [vmem:[%s690] sm:$0xff]
  %v692 = vld [vmem:[%s690 + $0x8] sm:$0xff]
  %v693 = vld [vmem:[%s690 + $0x10] sm:$0xff]
  %v694 = vld [vmem:[%s690 + $0x18] sm:$0xff]
  %v695 = vld [vmem:[%s2] sm:$0xff]
  %v696 = vld [vmem:[%s2 + $0x8] sm:$0xff]
  %v697 = vld [vmem:[%s2 + $0x10] sm:$0xff]
  %v698 = vld [vmem:[%s2 + $0x18] sm:$0xff]
  %v699 = vld [vmem:[%s2 + $0x20] sm:$0xff]
  %v700 = vld [vmem:[%s2 + $0x28] sm:$0xff]
  %v701 = vld [vmem:[%s2 + $0x30] sm:$0xff]
  %v702 = vld [vmem:[%s2 + $0x38] sm:$0xff]
  %v703 = vld [vmem:[%s2 + $0x40] sm:$0xff]
  %v704 = vld [vmem:[%s2 + $0x48] sm:$0xff]
  %v705 = vld [vmem:[%s2 + $0x50] sm:$0xff]
  %v706 = vld [vmem:[%s2 + $0x58] sm:$0xff]
  %v707 = vld [vmem:[%s2 + $0x60] sm:$0xff]
  %v708 = vld [vmem:[%s2 + $0x68] sm:$0xff]
  %v709 = vld [vmem:[%s2 + $0x70] sm:$0xff]
  %v710 = vld [vmem:[%s2 + $0x78] sm:$0xff]
  %v711 = vld [vmem:[%s2 + $0x80] sm:$0xff]
  %v712 = vld [vmem:[%s2 + $0x88] sm:$0xff]
  %v713 = vld [vmem:[%s2 + $0x90] sm:$0xff]
  %v714 = vld [vmem:[%s2 + $0x98] sm:$0xff]
  %v715 = vld [vmem:[%s2 + $0xa0] sm:$0xff]
  %v716 = vld [vmem:[%s2 + $0xa8] sm:$0xff]
  %v717 = vld [vmem:[%s2 + $0xb0] sm:$0xff]
  %v718 = vld [vmem:[%s2 + $0xb8] sm:$0xff]
  %v719 = vld [vmem:[%s2 + $0xc0] sm:$0xff]
  %v720 = vld [vmem:[%s2 + $0xc8] sm:$0xff]
  %v721 = vld [vmem:[%s2 + $0xd0] sm:$0xff]
  %v722 = vld [vmem:[%s2 + $0xd8] sm:$0xff]
  %v723 = vld [vmem:[%s2 + $0xe0] sm:$0xff]
  %v724 = vld [vmem:[%s2 + $0xe8] sm:$0xff]
  %v725 = vld [vmem:[%s2 + $0xf0] sm:$0xff]
  %v726 = vld [vmem:[%s2 + $0xf8] sm:$0xff]
  %v759 = vunpack.c.l.b16 %v695
  %v760 = vunpack.c.h.b16 %v695
  %v761 = vunpack.c.l.b16 %v696
  %v762 = vunpack.c.h.b16 %v696
  %v763 = vunpack.c.l.b16 %v697
  %v764 = vunpack.c.h.b16 %v697
  %v765 = vunpack.c.l.b16 %v698
  %v766 = vunpack.c.h.b16 %v698
  %v767 = vunpack.c.l.b16 %v699
  %v768 = vunpack.c.h.b16 %v699
  %v769 = vunpack.c.l.b16 %v700
  %v770 = vunpack.c.h.b16 %v700
  %v771 = vunpack.c.l.b16 %v701
  %v772 = vunpack.c.h.b16 %v701
  %v773 = vunpack.c.l.b16 %v702
  %v774 = vunpack.c.h.b16 %v702
  %v775 = vunpack.c.l.b16 %v703
  %v776 = vunpack.c.h.b16 %v703
  %v777 = vunpack.c.l.b16 %v704
  %v778 = vunpack.c.h.b16 %v704
  %v779 = vunpack.c.l.b16 %v705
  %v780 = vunpack.c.h.b16 %v705
  %v781 = vunpack.c.l.b16 %v706
  %v782 = vunpack.c.h.b16 %v706
  %v783 = vunpack.c.l.b16 %v707
  %v784 = vunpack.c.h.b16 %v707
  %v785 = vunpack.c.l.b16 %v708
  %v786 = vunpack.c.h.b16 %v708
  %v787 = vunpack.c.l.b16 %v709
  %v788 = vunpack.c.h.b16 %v709
  %v789 = vunpack.c.l.b16 %v710
  %v790 = vunpack.c.h.b16 %v710
  %v791 = vunpack.c.l.b16 %v711
  %v792 = vunpack.c.h.b16 %v711
  %v793 = vunpack.c.l.b16 %v712
  %v794 = vunpack.c.h.b16 %v712
  %v795 = vunpack.c.l.b16 %v713
  %v796 = vunpack.c.h.b16 %v713
  %v797 = vunpack.c.l.b16 %v714
  %v798 = vunpack.c.h.b16 %v714
  %v799 = vunpack.c.l.b16 %v715
  %v800 = vunpack.c.h.b16 %v715
  %v801 = vunpack.c.l.b16 %v716
  %v802 = vunpack.c.h.b16 %v716
  %v803 = vunpack.c.l.b16 %v717
  %v804 = vunpack.c.h.b16 %v717
  %v805 = vunpack.c.l.b16 %v718
  %v806 = vunpack.c.h.b16 %v718
  %v807 = vunpack.c.l.b16 %v719
  %v808 = vunpack.c.h.b16 %v719
  %v809 = vunpack.c.l.b16 %v720
  %v810 = vunpack.c.h.b16 %v720
  %v811 = vunpack.c.l.b16 %v721
  %v812 = vunpack.c.h.b16 %v721
  %v813 = vunpack.c.l.b16 %v722
  %v814 = vunpack.c.h.b16 %v722
  %v815 = vunpack.c.l.b16 %v723
  %v816 = vunpack.c.h.b16 %v723
  %v817 = vunpack.c.l.b16 %v724
  %v818 = vunpack.c.h.b16 %v724
  %v819 = vunpack.c.l.b16 %v725
  %v820 = vunpack.c.h.b16 %v725
  %v821 = vunpack.c.l.b16 %v726
  %v822 = vunpack.c.h.b16 %v726
  %v823 = vpack.c.b16 %v763, %v759
  %v824 = vpack.c.b16 %v764, %v760
  %v825 = vpack.c.b16 %v765, %v761
  %v826 = vpack.c.b16 %v766, %v762
  %v827 = vpack.c.b16 %v771, %v767
  %v828 = vpack.c.b16 %v772, %v768
  %v829 = vpack.c.b16 %v773, %v769
  %v830 = vpack.c.b16 %v774, %v770
  %v831 = vpack.c.b16 %v779, %v775
  %v832 = vpack.c.b16 %v780, %v776
  %v833 = vpack.c.b16 %v781, %v777
  %v834 = vpack.c.b16 %v782, %v778
  %v835 = vpack.c.b16 %v787, %v783
  %v836 = vpack.c.b16 %v788, %v784
  %v837 = vpack.c.b16 %v789, %v785
  %v838 = vpack.c.b16 %v790, %v786
  %v839 = vpack.c.b16 %v795, %v791
  %v840 = vpack.c.b16 %v796, %v792
  %v841 = vpack.c.b16 %v797, %v793
  %v842 = vpack.c.b16 %v798, %v794
  %v843 = vpack.c.b16 %v803, %v799
  %v844 = vpack.c.b16 %v804, %v800
  %v845 = vpack.c.b16 %v805, %v801
  %v846 = vpack.c.b16 %v806, %v802
  %v847 = vpack.c.b16 %v811, %v807
  %v848 = vpack.c.b16 %v812, %v808
  %v849 = vpack.c.b16 %v813, %v809
  %v850 = vpack.c.b16 %v814, %v810
  %v851 = vpack.c.b16 %v819, %v815
  %v852 = vpack.c.b16 %v820, %v816
  %v853 = vpack.c.b16 %v821, %v817
  %v854 = vpack.c.b16 %v822, %v818
  %887 = vmatpush.bf16.msra.mxu0 %v851
  %888 = vmatpush.bf16.msra.mxu0 %v847
  %889 = vmatpush.bf16.msra.mxu0 %v843
  %890 = vmatpush.bf16.msra.mxu0 %v839
  %891 = vmatpush.bf16.msra.mxu0 %v835
  %892 = vmatpush.bf16.msra.mxu0 %v831
  %893 = vmatpush.bf16.msra.mxu0 %v827
  %894 = vmatpush.bf16.msra.mxu0 %v823
  %895 = vmatmul.bf16.gmra.mxu0 %v688
  %v896 = vpop.f32.mrf.mxu0
  %v897 = vadd.f32 0.0, %v896
  %v898 = vpop.f32.mrf.mxu0
  %899 = vdwg.mxu0
  %900 = vmatpush.bf16.msra.mxu0 %v852
  %901 = vmatpush.bf16.msra.mxu0 %v848
  %902 = vmatpush.bf16.msra.mxu0 %v844
  %903 = vmatpush.bf16.msra.mxu0 %v840
  %904 = vmatpush.bf16.msra.mxu0 %v836
  %905 = vmatpush.bf16.msra.mxu0 %v832
  %906 = vmatpush.bf16.msra.mxu0 %v828
  %907 = vmatpush.bf16.msra.mxu0 %v824
  %908 = vmatmul.bf16.gmra.mxu0 %v688
  %v909 = vpop.f32.mrf.mxu0
  %v910 = vadd.f32 0.0, %v909
  %v911 = vpop.f32.mrf.mxu0
  %912 = vdwg.mxu0
  %913 = vmatpush.bf16.msra.mxu0 %v853
  %914 = vmatpush.bf16.msra.mxu0 %v849
  %915 = vmatpush.bf16.msra.mxu0 %v845
  %916 = vmatpush.bf16.msra.mxu0 %v841
  %917 = vmatpush.bf16.msra.mxu0 %v837
  %918 = vmatpush.bf16.msra.mxu0 %v833
  %919 = vmatpush.bf16.msra.mxu0 %v829
  %920 = vmatpush.bf16.msra.mxu0 %v825
  %921 = vmatmul.bf16.gmra.mxu0 %v688
  %v922 = vpop.f32.mrf.mxu0
  %v923 = vadd.f32 0.0, %v922
  %v924 = vpop.f32.mrf.mxu0
  %925 = vdwg.mxu0
  %926 = vmatpush.bf16.msra.mxu0 %v854
  %927 = vmatpush.bf16.msra.mxu0 %v850
  %928 = vmatpush.bf16.msra.mxu0 %v846
  %929 = vmatpush.bf16.msra.mxu0 %v842
  %930 = vmatpush.bf16.msra.mxu0 %v838
  %931 = vmatpush.bf16.msra.mxu0 %v834
  %932 = vmatpush.bf16.msra.mxu0 %v830
  %933 = vmatpush.bf16.msra.mxu0 %v826
  %934 = vmatmul.bf16.gmra.mxu0 %v688
  %v935 = vpop.f32.mrf.mxu0
  %v936 = vadd.f32 0.0, %v935
  %v937 = vpop.f32.mrf.mxu0
  %938 = vdwg.mxu0
  %v939 = vadd.f32 %v691, %v897
  %v940 = vadd.f32 %v692, %v910
  %v941 = vadd.f32 %v693, %v923
  %v942 = vadd.f32 %v694, %v936
  %v943 = vsub.f32 0.0, %v939
  %v944 = vmul.f32 %v943, 1.442695
  %v945 = vpow.pop %v944
  %v946 = vadd.f32 %v945, 1.0
  %v947 = vrcp.pop %v946
  %v948 = vsub.f32 0.0, %v940
  %v949 = vmul.f32 %v948, 1.442695
  %v950 = vpow.pop %v949
  %v951 = vadd.f32 %v950, 1.0
  %v952 = vrcp.pop %v951
  %v953 = vtanh.pop %v941
  %v954 = vsub.f32 0.0, %v942
  %v955 = vmul.f32 %v954, 1.442695
  %v956 = vpow.pop %v955
  %v957 = vadd.f32 %v956, 1.0
  %v958 = vrcp.pop %v957
  %v959 = vmul.f32 %v952, %v685
  %v960 = vmul.f32 %v947, %v953
  %v961 = vadd.f32 %v959, %v960
  %v962 = vtanh.pop %v961
  %v963 = vmul.f32 %v958, %v962
  %v964 = vpack.c.bf16 %v963, %v963
  %s965 = scalar_lea.vmem [#allocation2], 4
  %966 = vst [vmem:[%s965] sm:$0xf] %v964
  %s967 = scalar_lea.vmem [#allocation3], 64
  %v968 = vld [vmem:[%s967] sm:$0xff]
  %v969 = vld [vmem:[%s967 + $0x8] sm:$0xff]
  %v970 = vld [vmem:[%s967 + $0x10] sm:$0xff]
  %v971 = vld [vmem:[%s967 + $0x18] sm:$0xff]
  %v972 = vld [vmem:[%s2] sm:$0xff]
  %v973 = vld [vmem:[%s2 + $0x8] sm:$0xff]
  %v974 = vld [vmem:[%s2 + $0x10] sm:$0xff]
  %v975 = vld [vmem:[%s2 + $0x18] sm:$0xff]
  %v976 = vld [vmem:[%s2 + $0x20] sm:$0xff]
  %v977 = vld [vmem:[%s2 + $0x28] sm:$0xff]
  %v978 = vld [vmem:[%s2 + $0x30] sm:$0xff]
  %v979 = vld [vmem:[%s2 + $0x38] sm:$0xff]
  %v980 = vld [vmem:[%s2 + $0x40] sm:$0xff]
  %v981 = vld [vmem:[%s2 + $0x48] sm:$0xff]
  %v982 = vld [vmem:[%s2 + $0x50] sm:$0xff]
  %v983 = vld [vmem:[%s2 + $0x58] sm:$0xff]
  %v984 = vld [vmem:[%s2 + $0x60] sm:$0xff]
  %v985 = vld [vmem:[%s2 + $0x68] sm:$0xff]
  %v986 = vld [vmem:[%s2 + $0x70] sm:$0xff]
  %v987 = vld [vmem:[%s2 + $0x78] sm:$0xff]
  %v988 = vld [vmem:[%s2 + $0x80] sm:$0xff]
  %v989 = vld [vmem:[%s2 + $0x88] sm:$0xff]
  %v990 = vld [vmem:[%s2 + $0x90] sm:$0xff]
  %v991 = vld [vmem:[%s2 + $0x98] sm:$0xff]
  %v992 = vld [vmem:[%s2 + $0xa0] sm:$0xff]
  %v993 = vld [vmem:[%s2 + $0xa8] sm:$0xff]
  %v994 = vld [vmem:[%s2 + $0xb0] sm:$0xff]
  %v995 = vld [vmem:[%s2 + $0xb8] sm:$0xff]
  %v996 = vld [vmem:[%s2 + $0xc0] sm:$0xff]
  %v997 = vld [vmem:[%s2 + $0xc8] sm:$0xff]
  %v998 = vld [vmem:[%s2 + $0xd0] sm:$0xff]
  %v999 = vld [vmem:[%s2 + $0xd8] sm:$0xff]
  %v1000 = vld [vmem:[%s2 + $0xe0] sm:$0xff]
  %v1001 = vld [vmem:[%s2 + $0xe8] sm:$0xff]
  %v1002 = vld [vmem:[%s2 + $0xf0] sm:$0xff]
  %v1003 = vld [vmem:[%s2 + $0xf8] sm:$0xff]
  %v1036 = vunpack.c.l.b16 %v972
  %v1037 = vunpack.c.h.b16 %v972
  %v1038 = vunpack.c.l.b16 %v973
  %v1039 = vunpack.c.h.b16 %v973
  %v1040 = vunpack.c.l.b16 %v974
  %v1041 = vunpack.c.h.b16 %v974
  %v1042 = vunpack.c.l.b16 %v975
  %v1043 = vunpack.c.h.b16 %v975
  %v1044 = vunpack.c.l.b16 %v976
  %v1045 = vunpack.c.h.b16 %v976
  %v1046 = vunpack.c.l.b16 %v977
  %v1047 = vunpack.c.h.b16 %v977
  %v1048 = vunpack.c.l.b16 %v978
  %v1049 = vunpack.c.h.b16 %v978
  %v1050 = vunpack.c.l.b16 %v979
  %v1051 = vunpack.c.h.b16 %v979
  %v1052 = vunpack.c.l.b16 %v980
  %v1053 = vunpack.c.h.b16 %v980
  %v1054 = vunpack.c.l.b16 %v981
  %v1055 = vunpack.c.h.b16 %v981
  %v1056 = vunpack.c.l.b16 %v982
  %v1057 = vunpack.c.h.b16 %v982
  %v1058 = vunpack.c.l.b16 %v983
  %v1059 = vunpack.c.h.b16 %v983
  %v1060 = vunpack.c.l.b16 %v984
  %v1061 = vunpack.c.h.b16 %v984
  %v1062 = vunpack.c.l.b16 %v985
  %v1063 = vunpack.c.h.b16 %v985
  %v1064 = vunpack.c.l.b16 %v986
  %v1065 = vunpack.c.h.b16 %v986
  %v1066 = vunpack.c.l.b16 %v987
  %v1067 = vunpack.c.h.b16 %v987
  %v1068 = vunpack.c.l.b16 %v988
  %v1069 = vunpack.c.h.b16 %v988
  %v1070 = vunpack.c.l.b16 %v989
  %v1071 = vunpack.c.h.b16 %v989
  %v1072 = vunpack.c.l.b16 %v990
  %v1073 = vunpack.c.h.b16 %v990
  %v1074 = vunpack.c.l.b16 %v991
  %v1075 = vunpack.c.h.b16 %v991
  %v1076 = vunpack.c.l.b16 %v992
  %v1077 = vunpack.c.h.b16 %v992
  %v1078 = vunpack.c.l.b16 %v993
  %v1079 = vunpack.c.h.b16 %v993
  %v1080 = vunpack.c.l.b16 %v994
  %v1081 = vunpack.c.h.b16 %v994
  %v1082 = vunpack.c.l.b16 %v995
  %v1083 = vunpack.c.h.b16 %v995
  %v1084 = vunpack.c.l.b16 %v996
  %v1085 = vunpack.c.h.b16 %v996
  %v1086 = vunpack.c.l.b16 %v997
  %v1087 = vunpack.c.h.b16 %v997
  %v1088 = vunpack.c.l.b16 %v998
  %v1089 = vunpack.c.h.b16 %v998
  %v1090 = vunpack.c.l.b16 %v999
  %v1091 = vunpack.c.h.b16 %v999
  %v1092 = vunpack.c.l.b16 %v1000
  %v1093 = vunpack.c.h.b16 %v1000
  %v1094 = vunpack.c.l.b16 %v1001
  %v1095 = vunpack.c.h.b16 %v1001
  %v1096 = vunpack.c.l.b16 %v1002
  %v1097 = vunpack.c.h.b16 %v1002
  %v1098 = vunpack.c.l.b16 %v1003
  %v1099 = vunpack.c.h.b16 %v1003
  %v1100 = vpack.c.b16 %v1040, %v1036
  %v1101 = vpack.c.b16 %v1041, %v1037
  %v1102 = vpack.c.b16 %v1042, %v1038
  %v1103 = vpack.c.b16 %v1043, %v1039
  %v1104 = vpack.c.b16 %v1048, %v1044
  %v1105 = vpack.c.b16 %v1049, %v1045
  %v1106 = vpack.c.b16 %v1050, %v1046
  %v1107 = vpack.c.b16 %v1051, %v1047
  %v1108 = vpack.c.b16 %v1056, %v1052
  %v1109 = vpack.c.b16 %v1057, %v1053
  %v1110 = vpack.c.b16 %v1058, %v1054
  %v1111 = vpack.c.b16 %v1059, %v1055
  %v1112 = vpack.c.b16 %v1064, %v1060
  %v1113 = vpack.c.b16 %v1065, %v1061
  %v1114 = vpack.c.b16 %v1066, %v1062
  %v1115 = vpack.c.b16 %v1067, %v1063
  %v1116 = vpack.c.b16 %v1072, %v1068
  %v1117 = vpack.c.b16 %v1073, %v1069
  %v1118 = vpack.c.b16 %v1074, %v1070
  %v1119 = vpack.c.b16 %v1075, %v1071
  %v1120 = vpack.c.b16 %v1080, %v1076
  %v1121 = vpack.c.b16 %v1081, %v1077
  %v1122 = vpack.c.b16 %v1082, %v1078
  %v1123 = vpack.c.b16 %v1083, %v1079
  %v1124 = vpack.c.b16 %v1088, %v1084
  %v1125 = vpack.c.b16 %v1089, %v1085
  %v1126 = vpack.c.b16 %v1090, %v1086
  %v1127 = vpack.c.b16 %v1091, %v1087
  %v1128 = vpack.c.b16 %v1096, %v1092
  %v1129 = vpack.c.b16 %v1097, %v1093
  %v1130 = vpack.c.b16 %v1098, %v1094
  %v1131 = vpack.c.b16 %v1099, %v1095
  %1164 = vmatpush.bf16.msra.mxu0 %v1128
  %1165 = vmatpush.bf16.msra.mxu0 %v1124
  %1166 = vmatpush.bf16.msra.mxu0 %v1120
  %1167 = vmatpush.bf16.msra.mxu0 %v1116
  %1168 = vmatpush.bf16.msra.mxu0 %v1112
  %1169 = vmatpush.bf16.msra.mxu0 %v1108
  %1170 = vmatpush.bf16.msra.mxu0 %v1104
  %1171 = vmatpush.bf16.msra.mxu0 %v1100
  %1172 = vmatmul.bf16.gmra.mxu0 %v964
  %v1173 = vpop.f32.mrf.mxu0
  %v1174 = vadd.f32 0.0, %v1173
  %v1175 = vpop.f32.mrf.mxu0
  %1176 = vdwg.mxu0
  %1177 = vmatpush.bf16.msra.mxu0 %v1129
  %1178 = vmatpush.bf16.msra.mxu0 %v1125
  %1179 = vmatpush.bf16.msra.mxu0 %v1121
  %1180 = vmatpush.bf16.msra.mxu0 %v1117
  %1181 = vmatpush.bf16.msra.mxu0 %v1113
  %1182 = vmatpush.bf16.msra.mxu0 %v1109
  %1183 = vmatpush.bf16.msra.mxu0 %v1105
  %1184 = vmatpush.bf16.msra.mxu0 %v1101
  %1185 = vmatmul.bf16.gmra.mxu0 %v964
  %v1186 = vpop.f32.mrf.mxu0
  %v1187 = vadd.f32 0.0, %v1186
  %v1188 = vpop.f32.mrf.mxu0
  %1189 = vdwg.mxu0
  %1190 = vmatpush.bf16.msra.mxu0 %v1130
  %1191 = vmatpush.bf16.msra.mxu0 %v1126
  %1192 = vmatpush.bf16.msra.mxu0 %v1122
  %1193 = vmatpush.bf16.msra.mxu0 %v1118
  %1194 = vmatpush.bf16.msra.mxu0 %v1114
  %1195 = vmatpush.bf16.msra.mxu0 %v1110
  %1196 = vmatpush.bf16.msra.mxu0 %v1106
  %1197 = vmatpush.bf16.msra.mxu0 %v1102
  %1198 = vmatmul.bf16.gmra.mxu0 %v964
  %v1199 = vpop.f32.mrf.mxu0
  %v1200 = vadd.f32 0.0, %v1199
  %v1201 = vpop.f32.mrf.mxu0
  %1202 = vdwg.mxu0
  %1203 = vmatpush.bf16.msra.mxu0 %v1131
  %1204 = vmatpush.bf16.msra.mxu0 %v1127
  %1205 = vmatpush.bf16.msra.mxu0 %v1123
  %1206 = vmatpush.bf16.msra.mxu0 %v1119
  %1207 = vmatpush.bf16.msra.mxu0 %v1115
  %1208 = vmatpush.bf16.msra.mxu0 %v1111
  %1209 = vmatpush.bf16.msra.mxu0 %v1107
  %1210 = vmatpush.bf16.msra.mxu0 %v1103
  %1211 = vmatmul.bf16.gmra.mxu0 %v964
  %v1212 = vpop.f32.mrf.mxu0
  %v1213 = vadd.f32 0.0, %v1212
  %v1214 = vpop.f32.mrf.mxu0
  %1215 = vdwg.mxu0
  %v1216 = vadd.f32 %v968, %v1174
  %v1217 = vadd.f32 %v969, %v1187
  %v1218 = vadd.f32 %v970, %v1200
  %v1219 = vadd.f32 %v971, %v1213
  %v1220 = vsub.f32 0.0, %v1216
  %v1221 = vmul.f32 %v1220, 1.442695
  %v1222 = vpow.pop %v1221
  %v1223 = vadd.f32 %v1222, 1.0
  %v1224 = vrcp.pop %v1223
  %v1225 = vsub.f32 0.0, %v1217
  %v1226 = vmul.f32 %v1225, 1.442695
  %v1227 = vpow.pop %v1226
  %v1228 = vadd.f32 %v1227, 1.0
  %v1229 = vrcp.pop %v1228
  %v1230 = vtanh.pop %v1218
  %v1231 = vsub.f32 0.0, %v1219
  %v1232 = vmul.f32 %v1231, 1.442695
  %v1233 = vpow.pop %v1232
  %v1234 = vadd.f32 %v1233, 1.0
  %v1235 = vrcp.pop %v1234
  %v1236 = vmul.f32 %v1229, %v961
  %v1237 = vmul.f32 %v1224, %v1230
  %v1238 = vadd.f32 %v1236, %v1237
  %v1239 = vtanh.pop %v1238
  %v1240 = vmul.f32 %v1235, %v1239
  %v1241 = vpack.c.bf16 %v1240, %v1240
  %s1242 = scalar_lea.vmem [#allocation2], 8
  %1243 = vst [vmem:[%s1242] sm:$0xf] %v1241
  %s1244 = scalar_lea.vmem [#allocation3], 96
  %v1245 = vld [vmem:[%s1244] sm:$0xff]
  %v1246 = vld [vmem:[%s1244 + $0x8] sm:$0xff]
  %v1247 = vld [vmem:[%s1244 + $0x10] sm:$0xff]
  %v1248 = vld [vmem:[%s1244 + $0x18] sm:$0xff]
  %v1249 = vld [vmem:[%s2] sm:$0xff]
  %v1250 = vld [vmem:[%s2 + $0x8] sm:$0xff]
  %v1251 = vld [vmem:[%s2 + $0x10] sm:$0xff]
  %v1252 = vld [vmem:[%s2 + $0x18] sm:$0xff]
  %v1253 = vld [vmem:[%s2 + $0x20] sm:$0xff]
  %v1254 = vld [vmem:[%s2 + $0x28] sm:$0xff]
  %v1255 = vld [vmem:[%s2 + $0x30] sm:$0xff]
  %v1256 = vld [vmem:[%s2 + $0x38] sm:$0xff]
  %v1257 = vld [vmem:[%s2 + $0x40] sm:$0xff]
  %v1258 = vld [vmem:[%s2 + $0x48] sm:$0xff]
  %v1259 = vld [vmem:[%s2 + $0x50] sm:$0xff]
  %v1260 = vld [vmem:[%s2 + $0x58] sm:$0xff]
  %v1261 = vld [vmem:[%s2 + $0x60] sm:$0xff]
  %v1262 = vld [vmem:[%s2 + $0x68] sm:$0xff]
  %v1263 = vld [vmem:[%s2 + $0x70] sm:$0xff]
  %v1264 = vld [vmem:[%s2 + $0x78] sm:$0xff]
  %v1265 = vld [vmem:[%s2 + $0x80] sm:$0xff]
  %v1266 = vld [vmem:[%s2 + $0x88] sm:$0xff]
  %v1267 = vld [vmem:[%s2 + $0x90] sm:$0xff]
  %v1268 = vld [vmem:[%s2 + $0x98] sm:$0xff]
  %v1269 = vld [vmem:[%s2 + $0xa0] sm:$0xff]
  %v1270 = vld [vmem:[%s2 + $0xa8] sm:$0xff]
  %v1271 = vld [vmem:[%s2 + $0xb0] sm:$0xff]
  %v1272 = vld [vmem:[%s2 + $0xb8] sm:$0xff]
  %v1273 = vld [vmem:[%s2 + $0xc0] sm:$0xff]
  %v1274 = vld [vmem:[%s2 + $0xc8] sm:$0xff]
  %v1275 = vld [vmem:[%s2 + $0xd0] sm:$0xff]
  %v1276 = vld [vmem:[%s2 + $0xd8] sm:$0xff]
  %v1277 = vld [vmem:[%s2 + $0xe0] sm:$0xff]
  %v1278 = vld [vmem:[%s2 + $0xe8] sm:$0xff]
  %v1279 = vld [vmem:[%s2 + $0xf0] sm:$0xff]
  %v1280 = vld [vmem:[%s2 + $0xf8] sm:$0xff]
  %v1313 = vunpack.c.l.b16 %v1249
  %v1314 = vunpack.c.h.b16 %v1249
  %v1315 = vunpack.c.l.b16 %v1250
  %v1316 = vunpack.c.h.b16 %v1250
  %v1317 = vunpack.c.l.b16 %v1251
  %v1318 = vunpack.c.h.b16 %v1251
  %v1319 = vunpack.c.l.b16 %v1252
  %v1320 = vunpack.c.h.b16 %v1252
  %v1321 = vunpack.c.l.b16 %v1253
  %v1322 = vunpack.c.h.b16 %v1253
  %v1323 = vunpack.c.l.b16 %v1254
  %v1324 = vunpack.c.h.b16 %v1254
  %v1325 = vunpack.c.l.b16 %v1255
  %v1326 = vunpack.c.h.b16 %v1255
  %v1327 = vunpack.c.l.b16 %v1256
  %v1328 = vunpack.c.h.b16 %v1256
  %v1329 = vunpack.c.l.b16 %v1257
  %v1330 = vunpack.c.h.b16 %v1257
  %v1331 = vunpack.c.l.b16 %v1258
  %v1332 = vunpack.c.h.b16 %v1258
  %v1333 = vunpack.c.l.b16 %v1259
  %v1334 = vunpack.c.h.b16 %v1259
  %v1335 = vunpack.c.l.b16 %v1260
  %v1336 = vunpack.c.h.b16 %v1260
  %v1337 = vunpack.c.l.b16 %v1261
  %v1338 = vunpack.c.h.b16 %v1261
  %v1339 = vunpack.c.l.b16 %v1262
  %v1340 = vunpack.c.h.b16 %v1262
  %v1341 = vunpack.c.l.b16 %v1263
  %v1342 = vunpack.c.h.b16 %v1263
  %v1343 = vunpack.c.l.b16 %v1264
  %v1344 = vunpack.c.h.b16 %v1264
  %v1345 = vunpack.c.l.b16 %v1265
  %v1346 = vunpack.c.h.b16 %v1265
  %v1347 = vunpack.c.l.b16 %v1266
  %v1348 = vunpack.c.h.b16 %v1266
  %v1349 = vunpack.c.l.b16 %v1267
  %v1350 = vunpack.c.h.b16 %v1267
  %v1351 = vunpack.c.l.b16 %v1268
  %v1352 = vunpack.c.h.b16 %v1268
  %v1353 = vunpack.c.l.b16 %v1269
  %v1354 = vunpack.c.h.b16 %v1269
  %v1355 = vunpack.c.l.b16 %v1270
  %v1356 = vunpack.c.h.b16 %v1270
  %v1357 = vunpack.c.l.b16 %v1271
  %v1358 = vunpack.c.h.b16 %v1271
  %v1359 = vunpack.c.l.b16 %v1272
  %v1360 = vunpack.c.h.b16 %v1272
  %v1361 = vunpack.c.l.b16 %v1273
  %v1362 = vunpack.c.h.b16 %v1273
  %v1363 = vunpack.c.l.b16 %v1274
  %v1364 = vunpack.c.h.b16 %v1274
  %v1365 = vunpack.c.l.b16 %v1275
  %v1366 = vunpack.c.h.b16 %v1275
  %v1367 = vunpack.c.l.b16 %v1276
  %v1368 = vunpack.c.h.b16 %v1276
  %v1369 = vunpack.c.l.b16 %v1277
  %v1370 = vunpack.c.h.b16 %v1277
  %v1371 = vunpack.c.l.b16 %v1278
  %v1372 = vunpack.c.h.b16 %v1278
  %v1373 = vunpack.c.l.b16 %v1279
  %v1374 = vunpack.c.h.b16 %v1279
  %v1375 = vunpack.c.l.b16 %v1280
  %v1376 = vunpack.c.h.b16 %v1280
  %v1377 = vpack.c.b16 %v1317, %v1313
  %v1378 = vpack.c.b16 %v1318, %v1314
  %v1379 = vpack.c.b16 %v1319, %v1315
  %v1380 = vpack.c.b16 %v1320, %v1316
  %v1381 = vpack.c.b16 %v1325, %v1321
  %v1382 = vpack.c.b16 %v1326, %v1322
  %v1383 = vpack.c.b16 %v1327, %v1323
  %v1384 = vpack.c.b16 %v1328, %v1324
  %v1385 = vpack.c.b16 %v1333, %v1329
  %v1386 = vpack.c.b16 %v1334, %v1330
  %v1387 = vpack.c.b16 %v1335, %v1331
  %v1388 = vpack.c.b16 %v1336, %v1332
  %v1389 = vpack.c.b16 %v1341, %v1337
  %v1390 = vpack.c.b16 %v1342, %v1338
  %v1391 = vpack.c.b16 %v1343, %v1339
  %v1392 = vpack.c.b16 %v1344, %v1340
  %v1393 = vpack.c.b16 %v1349, %v1345
  %v1394 = vpack.c.b16 %v1350, %v1346
  %v1395 = vpack.c.b16 %v1351, %v1347
  %v1396 = vpack.c.b16 %v1352, %v1348
  %v1397 = vpack.c.b16 %v1357, %v1353
  %v1398 = vpack.c.b16 %v1358, %v1354
  %v1399 = vpack.c.b16 %v1359, %v1355
  %v1400 = vpack.c.b16 %v1360, %v1356
  %v1401 = vpack.c.b16 %v1365, %v1361
  %v1402 = vpack.c.b16 %v1366, %v1362
  %v1403 = vpack.c.b16 %v1367, %v1363
  %v1404 = vpack.c.b16 %v1368, %v1364
  %v1405 = vpack.c.b16 %v1373, %v1369
  %v1406 = vpack.c.b16 %v1374, %v1370
  %v1407 = vpack.c.b16 %v1375, %v1371
  %v1408 = vpack.c.b16 %v1376, %v1372
  %1441 = vmatpush.bf16.msra.mxu0 %v1405
  %1442 = vmatpush.bf16.msra.mxu0 %v1401
  %1443 = vmatpush.bf16.msra.mxu0 %v1397
  %1444 = vmatpush.bf16.msra.mxu0 %v1393
  %1445 = vmatpush.bf16.msra.mxu0 %v1389
  %1446 = vmatpush.bf16.msra.mxu0 %v1385
  %1447 = vmatpush.bf16.msra.mxu0 %v1381
  %1448 = vmatpush.bf16.msra.mxu0 %v1377
  %1449 = vmatmul.bf16.gmra.mxu0 %v1241
  %v1450 = vpop.f32.mrf.mxu0
  %v1451 = vadd.f32 0.0, %v1450
  %v1452 = vpop.f32.mrf.mxu0
  %1453 = vdwg.mxu0
  %1454 = vmatpush.bf16.msra.mxu0 %v1406
  %1455 = vmatpush.bf16.msra.mxu0 %v1402
  %1456 = vmatpush.bf16.msra.mxu0 %v1398
  %1457 = vmatpush.bf16.msra.mxu0 %v1394
  %1458 = vmatpush.bf16.msra.mxu0 %v1390
  %1459 = vmatpush.bf16.msra.mxu0 %v1386
  %1460 = vmatpush.bf16.msra.mxu0 %v1382
  %1461 = vmatpush.bf16.msra.mxu0 %v1378
  %1462 = vmatmul.bf16.gmra.mxu0 %v1241
  %v1463 = vpop.f32.mrf.mxu0
  %v1464 = vadd.f32 0.0, %v1463
  %v1465 = vpop.f32.mrf.mxu0
  %1466 = vdwg.mxu0
  %1467 = vmatpush.bf16.msra.mxu0 %v1407
  %1468 = vmatpush.bf16.msra.mxu0 %v1403
  %1469 = vmatpush.bf16.msra.mxu0 %v1399
  %1470 = vmatpush.bf16.msra.mxu0 %v1395
  %1471 = vmatpush.bf16.msra.mxu0 %v1391
  %1472 = vmatpush.bf16.msra.mxu0 %v1387
  %1473 = vmatpush.bf16.msra.mxu0 %v1383
  %1474 = vmatpush.bf16.msra.mxu0 %v1379
  %1475 = vmatmul.bf16.gmra.mxu0 %v1241
  %v1476 = vpop.f32.mrf.mxu0
  %v1477 = vadd.f32 0.0, %v1476
  %v1478 = vpop.f32.mrf.mxu0
  %1479 = vdwg.mxu0
  %1480 = vmatpush.bf16.msra.mxu0 %v1408
  %1481 = vmatpush.bf16.msra.mxu0 %v1404
  %1482 = vmatpush.bf16.msra.mxu0 %v1400
  %1483 = vmatpush.bf16.msra.mxu0 %v1396
  %1484 = vmatpush.bf16.msra.mxu0 %v1392
  %1485 = vmatpush.bf16.msra.mxu0 %v1388
  %1486 = vmatpush.bf16.msra.mxu0 %v1384
  %1487 = vmatpush.bf16.msra.mxu0 %v1380
  %1488 = vmatmul.bf16.gmra.mxu0 %v1241
  %v1489 = vpop.f32.mrf.mxu0
  %v1490 = vadd.f32 0.0, %v1489
  %v1491 = vpop.f32.mrf.mxu0
  %1492 = vdwg.mxu0
  %v1493 = vadd.f32 %v1245, %v1451
  %v1494 = vadd.f32 %v1246, %v1464
  %v1495 = vadd.f32 %v1247, %v1477
  %v1496 = vadd.f32 %v1248, %v1490
  %v1497 = vsub.f32 0.0, %v1493
  %v1498 = vmul.f32 %v1497, 1.442695
  %v1499 = vpow.pop %v1498
  %v1500 = vadd.f32 %v1499, 1.0
  %v1501 = vrcp.pop %v1500
  %v1502 = vsub.f32 0.0, %v1494
  %v1503 = vmul.f32 %v1502, 1.442695
  %v1504 = vpow.pop %v1503
  %v1505 = vadd.f32 %v1504, 1.0
  %v1506 = vrcp.pop %v1505
  %v1507 = vtanh.pop %v1495
  %v1508 = vsub.f32 0.0, %v1496
  %v1509 = vmul.f32 %v1508, 1.442695
  %v1510 = vpow.pop %v1509
  %v1511 = vadd.f32 %v1510, 1.0
  %v1512 = vrcp.pop %v1511
  %v1513 = vmul.f32 %v1506, %v1238
  %v1514 = vmul.f32 %v1501, %v1507
  %v1515 = vadd.f32 %v1513, %v1514
  %v1516 = vtanh.pop %v1515
  %v1517 = vmul.f32 %v1512, %v1516
  %v1518 = vpack.c.bf16 %v1517, %v1517
  %s1519 = scalar_lea.vmem [#allocation2], 12
  %1520 = vst [vmem:[%s1519] sm:$0xf] %v1518
  %s1521 = scalar_lea.vmem [#allocation3], 128
  %v1522 = vld [vmem:[%s1521] sm:$0xff]
  %v1523 = vld [vmem:[%s1521 + $0x8] sm:$0xff]
  %v1524 = vld [vmem:[%s1521 + $0x10] sm:$0xff]
  %v1525 = vld [vmem:[%s1521 + $0x18] sm:$0xff]
  %v1526 = vld [vmem:[%s2] sm:$0xff]
  %v1527 = vld [vmem:[%s2 + $0x8] sm:$0xff]
  %v1528 = vld [vmem:[%s2 + $0x10] sm:$0xff]
  %v1529 = vld [vmem:[%s2 + $0x18] sm:$0xff]
  %v1530 = vld [vmem:[%s2 + $0x20] sm:$0xff]
  %v1531 = vld [vmem:[%s2 + $0x28] sm:$0xff]
  %v1532 = vld [vmem:[%s2 + $0x30] sm:$0xff]
  %v1533 = vld [vmem:[%s2 + $0x38] sm:$0xff]
  %v1534 = vld [vmem:[%s2 + $0x40] sm:$0xff]
  %v1535 = vld [vmem:[%s2 + $0x48] sm:$0xff]
  %v1536 = vld [vmem:[%s2 + $0x50] sm:$0xff]
  %v1537 = vld [vmem:[%s2 + $0x58] sm:$0xff]
  %v1538 = vld [vmem:[%s2 + $0x60] sm:$0xff]
  %v1539 = vld [vmem:[%s2 + $0x68] sm:$0xff]
  %v1540 = vld [vmem:[%s2 + $0x70] sm:$0xff]
  %v1541 = vld [vmem:[%s2 + $0x78] sm:$0xff]
  %v1542 = vld [vmem:[%s2 + $0x80] sm:$0xff]
  %v1543 = vld [vmem:[%s2 + $0x88] sm:$0xff]
  %v1544 = vld [vmem:[%s2 + $0x90] sm:$0xff]
  %v1545 = vld [vmem:[%s2 + $0x98] sm:$0xff]
  %v1546 = vld [vmem:[%s2 + $0xa0] sm:$0xff]
  %v1547 = vld [vmem:[%s2 + $0xa8] sm:$0xff]
  %v1548 = vld [vmem:[%s2 + $0xb0] sm:$0xff]
  %v1549 = vld [vmem:[%s2 + $0xb8] sm:$0xff]
  %v1550 = vld [vmem:[%s2 + $0xc0] sm:$0xff]
  %v1551 = vld [vmem:[%s2 + $0xc8] sm:$0xff]
  %v1552 = vld [vmem:[%s2 + $0xd0] sm:$0xff]
  %v1553 = vld [vmem:[%s2 + $0xd8] sm:$0xff]
  %v1554 = vld [vmem:[%s2 + $0xe0] sm:$0xff]
  %v1555 = vld [vmem:[%s2 + $0xe8] sm:$0xff]
  %v1556 = vld [vmem:[%s2 + $0xf0] sm:$0xff]
  %v1557 = vld [vmem:[%s2 + $0xf8] sm:$0xff]
  %v1590 = vunpack.c.l.b16 %v1526
  %v1591 = vunpack.c.h.b16 %v1526
  %v1592 = vunpack.c.l.b16 %v1527
  %v1593 = vunpack.c.h.b16 %v1527
  %v1594 = vunpack.c.l.b16 %v1528
  %v1595 = vunpack.c.h.b16 %v1528
  %v1596 = vunpack.c.l.b16 %v1529
  %v1597 = vunpack.c.h.b16 %v1529
  %v1598 = vunpack.c.l.b16 %v1530
  %v1599 = vunpack.c.h.b16 %v1530
  %v1600 = vunpack.c.l.b16 %v1531
  %v1601 = vunpack.c.h.b16 %v1531
  %v1602 = vunpack.c.l.b16 %v1532
  %v1603 = vunpack.c.h.b16 %v1532
  %v1604 = vunpack.c.l.b16 %v1533
  %v1605 = vunpack.c.h.b16 %v1533
  %v1606 = vunpack.c.l.b16 %v1534
  %v1607 = vunpack.c.h.b16 %v1534
  %v1608 = vunpack.c.l.b16 %v1535
  %v1609 = vunpack.c.h.b16 %v1535
  %v1610 = vunpack.c.l.b16 %v1536
  %v1611 = vunpack.c.h.b16 %v1536
  %v1612 = vunpack.c.l.b16 %v1537
  %v1613 = vunpack.c.h.b16 %v1537
  %v1614 = vunpack.c.l.b16 %v1538
  %v1615 = vunpack.c.h.b16 %v1538
  %v1616 = vunpack.c.l.b16 %v1539
  %v1617 = vunpack.c.h.b16 %v1539
  %v1618 = vunpack.c.l.b16 %v1540
  %v1619 = vunpack.c.h.b16 %v1540
  %v1620 = vunpack.c.l.b16 %v1541
  %v1621 = vunpack.c.h.b16 %v1541
  %v1622 = vunpack.c.l.b16 %v1542
  %v1623 = vunpack.c.h.b16 %v1542
  %v1624 = vunpack.c.l.b16 %v1543
  %v1625 = vunpack.c.h.b16 %v1543
  %v1626 = vunpack.c.l.b16 %v1544
  %v1627 = vunpack.c.h.b16 %v1544
  %v1628 = vunpack.c.l.b16 %v1545
  %v1629 = vunpack.c.h.b16 %v1545
  %v1630 = vunpack.c.l.b16 %v1546
  %v1631 = vunpack.c.h.b16 %v1546
  %v1632 = vunpack.c.l.b16 %v1547
  %v1633 = vunpack.c.h.b16 %v1547
  %v1634 = vunpack.c.l.b16 %v1548
  %v1635 = vunpack.c.h.b16 %v1548
  %v1636 = vunpack.c.l.b16 %v1549
  %v1637 = vunpack.c.h.b16 %v1549
  %v1638 = vunpack.c.l.b16 %v1550
  %v1639 = vunpack.c.h.b16 %v1550
  %v1640 = vunpack.c.l.b16 %v1551
  %v1641 = vunpack.c.h.b16 %v1551
  %v1642 = vunpack.c.l.b16 %v1552
  %v1643 = vunpack.c.h.b16 %v1552
  %v1644 = vunpack.c.l.b16 %v1553
  %v1645 = vunpack.c.h.b16 %v1553
  %v1646 = vunpack.c.l.b16 %v1554
  %v1647 = vunpack.c.h.b16 %v1554
  %v1648 = vunpack.c.l.b16 %v1555
  %v1649 = vunpack.c.h.b16 %v1555
  %v1650 = vunpack.c.l.b16 %v1556
  %v1651 = vunpack.c.h.b16 %v1556
  %v1652 = vunpack.c.l.b16 %v1557
  %v1653 = vunpack.c.h.b16 %v1557
  %v1654 = vpack.c.b16 %v1594, %v1590
  %v1655 = vpack.c.b16 %v1595, %v1591
  %v1656 = vpack.c.b16 %v1596, %v1592
  %v1657 = vpack.c.b16 %v1597, %v1593
  %v1658 = vpack.c.b16 %v1602, %v1598
  %v1659 = vpack.c.b16 %v1603, %v1599
  %v1660 = vpack.c.b16 %v1604, %v1600
  %v1661 = vpack.c.b16 %v1605, %v1601
  %v1662 = vpack.c.b16 %v1610, %v1606
  %v1663 = vpack.c.b16 %v1611, %v1607
  %v1664 = vpack.c.b16 %v1612, %v1608
  %v1665 = vpack.c.b16 %v1613, %v1609
  %v1666 = vpack.c.b16 %v1618, %v1614
  %v1667 = vpack.c.b16 %v1619, %v1615
  %v1668 = vpack.c.b16 %v1620, %v1616
  %v1669 = vpack.c.b16 %v1621, %v1617
  %v1670 = vpack.c.b16 %v1626, %v1622
  %v1671 = vpack.c.b16 %v1627, %v1623
  %v1672 = vpack.c.b16 %v1628, %v1624
  %v1673 = vpack.c.b16 %v1629, %v1625
  %v1674 = vpack.c.b16 %v1634, %v1630
  %v1675 = vpack.c.b16 %v1635, %v1631
  %v1676 = vpack.c.b16 %v1636, %v1632
  %v1677 = vpack.c.b16 %v1637, %v1633
  %v1678 = vpack.c.b16 %v1642, %v1638
  %v1679 = vpack.c.b16 %v1643, %v1639
  %v1680 = vpack.c.b16 %v1644, %v1640
  %v1681 = vpack.c.b16 %v1645, %v1641
  %v1682 = vpack.c.b16 %v1650, %v1646
  %v1683 = vpack.c.b16 %v1651, %v1647
  %v1684 = vpack.c.b16 %v1652, %v1648
  %v1685 = vpack.c.b16 %v1653, %v1649
  %1718 = vmatpush.bf16.msra.mxu0 %v1682
  %1719 = vmatpush.bf16.msra.mxu0 %v1678
  %1720 = vmatpush.bf16.msra.mxu0 %v1674
  %1721 = vmatpush.bf16.msra.mxu0 %v1670
  %1722 = vmatpush.bf16.msra.mxu0 %v1666
  %1723 = vmatpush.bf16.msra.mxu0 %v1662
  %1724 = vmatpush.bf16.msra.mxu0 %v1658
  %1725 = vmatpush.bf16.msra.mxu0 %v1654
  %1726 = vmatmul.bf16.gmra.mxu0 %v1518
  %v1727 = vpop.f32.mrf.mxu0
  %v1728 = vadd.f32 0.0, %v1727
  %v1729 = vpop.f32.mrf.mxu0
  %1730 = vdwg.mxu0
  %1731 = vmatpush.bf16.msra.mxu0 %v1683
  %1732 = vmatpush.bf16.msra.mxu0 %v1679
  %1733 = vmatpush.bf16.msra.mxu0 %v1675
  %1734 = vmatpush.bf16.msra.mxu0 %v1671
  %1735 = vmatpush.bf16.msra.mxu0 %v1667
  %1736 = vmatpush.bf16.msra.mxu0 %v1663
  %1737 = vmatpush.bf16.msra.mxu0 %v1659
  %1738 = vmatpush.bf16.msra.mxu0 %v1655
  %1739 = vmatmul.bf16.gmra.mxu0 %v1518
  %v1740 = vpop.f32.mrf.mxu0
  %v1741 = vadd.f32 0.0, %v1740
  %v1742 = vpop.f32.mrf.mxu0
  %1743 = vdwg.mxu0
  %1744 = vmatpush.bf16.msra.mxu0 %v1684
  %1745 = vmatpush.bf16.msra.mxu0 %v1680
  %1746 = vmatpush.bf16.msra.mxu0 %v1676
  %1747 = vmatpush.bf16.msra.mxu0 %v1672
  %1748 = vmatpush.bf16.msra.mxu0 %v1668
  %1749 = vmatpush.bf16.msra.mxu0 %v1664
  %1750 = vmatpush.bf16.msra.mxu0 %v1660
  %1751 = vmatpush.bf16.msra.mxu0 %v1656
  %1752 = vmatmul.bf16.gmra.mxu0 %v1518
  %v1753 = vpop.f32.mrf.mxu0
  %v1754 = vadd.f32 0.0, %v1753
  %v1755 = vpop.f32.mrf.mxu0
  %1756 = vdwg.mxu0
  %1757 = vmatpush.bf16.msra.mxu0 %v1685
  %1758 = vmatpush.bf16.msra.mxu0 %v1681
  %1759 = vmatpush.bf16.msra.mxu0 %v1677
  %1760 = vmatpush.bf16.msra.mxu0 %v1673
  %1761 = vmatpush.bf16.msra.mxu0 %v1669
  %1762 = vmatpush.bf16.msra.mxu0 %v1665
  %1763 = vmatpush.bf16.msra.mxu0 %v1661
  %1764 = vmatpush.bf16.msra.mxu0 %v1657
  %1765 = vmatmul.bf16.gmra.mxu0 %v1518
  %v1766 = vpop.f32.mrf.mxu0
  %v1767 = vadd.f32 0.0, %v1766
  %v1768 = vpop.f32.mrf.mxu0
  %1769 = vdwg.mxu0
  %v1770 = vadd.f32 %v1522, %v1728
  %v1771 = vadd.f32 %v1523, %v1741
  %v1772 = vadd.f32 %v1524, %v1754
  %v1773 = vadd.f32 %v1525, %v1767
  %v1774 = vsub.f32 0.0, %v1770
  %v1775 = vmul.f32 %v1774, 1.442695
  %v1776 = vpow.pop %v1775
  %v1777 = vadd.f32 %v1776, 1.0
  %v1778 = vrcp.pop %v1777
  %v1779 = vsub.f32 0.0, %v1771
  %v1780 = vmul.f32 %v1779, 1.442695
  %v1781 = vpow.pop %v1780
  %v1782 = vadd.f32 %v1781, 1.0
  %v1783 = vrcp.pop %v1782
  %v1784 = vtanh.pop %v1772
  %v1785 = vsub.f32 0.0, %v1773
  %v1786 = vmul.f32 %v1785, 1.442695
  %v1787 = vpow.pop %v1786
  %v1788 = vadd.f32 %v1787, 1.0
  %v1789 = vrcp.pop %v1788
  %v1790 = vmul.f32 %v1783, %v1515
  %v1791 = vmul.f32 %v1778, %v1784
  %v1792 = vadd.f32 %v1790, %v1791
  %v1793 = vtanh.pop %v1792
  %v1794 = vmul.f32 %v1789, %v1793
  %v1795 = vpack.c.bf16 %v1794, %v1794
  %s1796 = scalar_lea.vmem [#allocation2], 16
  %1797 = vst [vmem:[%s1796] sm:$0xf] %v1795
  %s1798 = scalar_lea.vmem [#allocation3], 160
  %v1799 = vld [vmem:[%s1798] sm:$0xff]
  %v1800 = vld [vmem:[%s1798 + $0x8] sm:$0xff]
  %v1801 = vld [vmem:[%s1798 + $0x10] sm:$0xff]
  %v1802 = vld [vmem:[%s1798 + $0x18] sm:$0xff]
  %v1803 = vld [vmem:[%s2] sm:$0xff]
  %v1804 = vld [vmem:[%s2 + $0x8] sm:$0xff]
  %v1805 = vld [vmem:[%s2 + $0x10] sm:$0xff]
  %v1806 = vld [vmem:[%s2 + $0x18] sm:$0xff]
  %v1807 = vld [vmem:[%s2 + $0x20] sm:$0xff]
  %v1808 = vld [vmem:[%s2 + $0x28] sm:$0xff]
  %v1809 = vld [vmem:[%s2 + $0x30] sm:$0xff]
  %v1810 = vld [vmem:[%s2 + $0x38] sm:$0xff]
  %v1811 = vld [vmem:[%s2 + $0x40] sm:$0xff]
  %v1812 = vld [vmem:[%s2 + $0x48] sm:$0xff]
  %v1813 = vld [vmem:[%s2 + $0x50] sm:$0xff]
  %v1814 = vld [vmem:[%s2 + $0x58] sm:$0xff]
  %v1815 = vld [vmem:[%s2 + $0x60] sm:$0xff]
  %v1816 = vld [vmem:[%s2 + $0x68] sm:$0xff]
  %v1817 = vld [vmem:[%s2 + $0x70] sm:$0xff]
  %v1818 = vld [vmem:[%s2 + $0x78] sm:$0xff]
  %v1819 = vld [vmem:[%s2 + $0x80] sm:$0xff]
  %v1820 = vld [vmem:[%s2 + $0x88] sm:$0xff]
  %v1821 = vld [vmem:[%s2 + $0x90] sm:$0xff]
  %v1822 = vld [vmem:[%s2 + $0x98] sm:$0xff]
  %v1823 = vld [vmem:[%s2 + $0xa0] sm:$0xff]
  %v1824 = vld [vmem:[%s2 + $0xa8] sm:$0xff]
  %v1825 = vld [vmem:[%s2 + $0xb0] sm:$0xff]
  %v1826 = vld [vmem:[%s2 + $0xb8] sm:$0xff]
  %v1827 = vld [vmem:[%s2 + $0xc0] sm:$0xff]
  %v1828 = vld [vmem:[%s2 + $0xc8] sm:$0xff]
  %v1829 = vld [vmem:[%s2 + $0xd0] sm:$0xff]
  %v1830 = vld [vmem:[%s2 + $0xd8] sm:$0xff]
  %v1831 = vld [vmem:[%s2 + $0xe0] sm:$0xff]
  %v1832 = vld [vmem:[%s2 + $0xe8] sm:$0xff]
  %v1833 = vld [vmem:[%s2 + $0xf0] sm:$0xff]
  %v1834 = vld [vmem:[%s2 + $0xf8] sm:$0xff]
  %v1867 = vunpack.c.l.b16 %v1803
  %v1868 = vunpack.c.h.b16 %v1803
  %v1869 = vunpack.c.l.b16 %v1804
  %v1870 = vunpack.c.h.b16 %v1804
  %v1871 = vunpack.c.l.b16 %v1805
  %v1872 = vunpack.c.h.b16 %v1805
  %v1873 = vunpack.c.l.b16 %v1806
  %v1874 = vunpack.c.h.b16 %v1806
  %v1875 = vunpack.c.l.b16 %v1807
  %v1876 = vunpack.c.h.b16 %v1807
  %v1877 = vunpack.c.l.b16 %v1808
  %v1878 = vunpack.c.h.b16 %v1808
  %v1879 = vunpack.c.l.b16 %v1809
  %v1880 = vunpack.c.h.b16 %v1809
  %v1881 = vunpack.c.l.b16 %v1810
  %v1882 = vunpack.c.h.b16 %v1810
  %v1883 = vunpack.c.l.b16 %v1811
  %v1884 = vunpack.c.h.b16 %v1811
  %v1885 = vunpack.c.l.b16 %v1812
  %v1886 = vunpack.c.h.b16 %v1812
  %v1887 = vunpack.c.l.b16 %v1813
  %v1888 = vunpack.c.h.b16 %v1813
  %v1889 = vunpack.c.l.b16 %v1814
  %v1890 = vunpack.c.h.b16 %v1814
  %v1891 = vunpack.c.l.b16 %v1815
  %v1892 = vunpack.c.h.b16 %v1815
  %v1893 = vunpack.c.l.b16 %v1816
  %v1894 = vunpack.c.h.b16 %v1816
  %v1895 = vunpack.c.l.b16 %v1817
  %v1896 = vunpack.c.h.b16 %v1817
  %v1897 = vunpack.c.l.b16 %v1818
  %v1898 = vunpack.c.h.b16 %v1818
  %v1899 = vunpack.c.l.b16 %v1819
  %v1900 = vunpack.c.h.b16 %v1819
  %v1901 = vunpack.c.l.b16 %v1820
  %v1902 = vunpack.c.h.b16 %v1820
  %v1903 = vunpack.c.l.b16 %v1821
  %v1904 = vunpack.c.h.b16 %v1821
  %v1905 = vunpack.c.l.b16 %v1822
  %v1906 = vunpack.c.h.b16 %v1822
  %v1907 = vunpack.c.l.b16 %v1823
  %v1908 = vunpack.c.h.b16 %v1823
  %v1909 = vunpack.c.l.b16 %v1824
  %v1910 = vunpack.c.h.b16 %v1824
  %v1911 = vunpack.c.l.b16 %v1825
  %v1912 = vunpack.c.h.b16 %v1825
  %v1913 = vunpack.c.l.b16 %v1826
  %v1914 = vunpack.c.h.b16 %v1826
  %v1915 = vunpack.c.l.b16 %v1827
  %v1916 = vunpack.c.h.b16 %v1827
  %v1917 = vunpack.c.l.b16 %v1828
  %v1918 = vunpack.c.h.b16 %v1828
  %v1919 = vunpack.c.l.b16 %v1829
  %v1920 = vunpack.c.h.b16 %v1829
  %v1921 = vunpack.c.l.b16 %v1830
  %v1922 = vunpack.c.h.b16 %v1830
  %v1923 = vunpack.c.l.b16 %v1831
  %v1924 = vunpack.c.h.b16 %v1831
  %v1925 = vunpack.c.l.b16 %v1832
  %v1926 = vunpack.c.h.b16 %v1832
  %v1927 = vunpack.c.l.b16 %v1833
  %v1928 = vunpack.c.h.b16 %v1833
  %v1929 = vunpack.c.l.b16 %v1834
  %v1930 = vunpack.c.h.b16 %v1834
  %v1931 = vpack.c.b16 %v1871, %v1867
  %v1932 = vpack.c.b16 %v1872, %v1868
  %v1933 = vpack.c.b16 %v1873, %v1869
  %v1934 = vpack.c.b16 %v1874, %v1870
  %v1935 = vpack.c.b16 %v1879, %v1875
  %v1936 = vpack.c.b16 %v1880, %v1876
  %v1937 = vpack.c.b16 %v1881, %v1877
  %v1938 = vpack.c.b16 %v1882, %v1878
  %v1939 = vpack.c.b16 %v1887, %v1883
  %v1940 = vpack.c.b16 %v1888, %v1884
  %v1941 = vpack.c.b16 %v1889, %v1885
  %v1942 = vpack.c.b16 %v1890, %v1886
  %v1943 = vpack.c.b16 %v1895, %v1891
  %v1944 = vpack.c.b16 %v1896, %v1892
  %v1945 = vpack.c.b16 %v1897, %v1893
  %v1946 = vpack.c.b16 %v1898, %v1894
  %v1947 = vpack.c.b16 %v1903, %v1899
  %v1948 = vpack.c.b16 %v1904, %v1900
  %v1949 = vpack.c.b16 %v1905, %v1901
  %v1950 = vpack.c.b16 %v1906, %v1902
  %v1951 = vpack.c.b16 %v1911, %v1907
  %v1952 = vpack.c.b16 %v1912, %v1908
  %v1953 = vpack.c.b16 %v1913, %v1909
  %v1954 = vpack.c.b16 %v1914, %v1910
  %v1955 = vpack.c.b16 %v1919, %v1915
  %v1956 = vpack.c.b16 %v1920, %v1916
  %v1957 = vpack.c.b16 %v1921, %v1917
  %v1958 = vpack.c.b16 %v1922, %v1918
  %v1959 = vpack.c.b16 %v1927, %v1923
  %v1960 = vpack.c.b16 %v1928, %v1924
  %v1961 = vpack.c.b16 %v1929, %v1925
  %v1962 = vpack.c.b16 %v1930, %v1926
  %1995 = vmatpush.bf16.msra.mxu0 %v1959
  %1996 = vmatpush.bf16.msra.mxu0 %v1955
  %1997 = vmatpush.bf16.msra.mxu0 %v1951
  %1998 = vmatpush.bf16.msra.mxu0 %v1947
  %1999 = vmatpush.bf16.msra.mxu0 %v1943
  %2000 = vmatpush.bf16.msra.mxu0 %v1939
  %2001 = vmatpush.bf16.msra.mxu0 %v1935
  %2002 = vmatpush.bf16.msra.mxu0 %v1931
  %2003 = vmatmul.bf16.gmra.mxu0 %v1795
  %v2004 = vpop.f32.mrf.mxu0
  %v2005 = vadd.f32 0.0, %v2004
  %v2006 = vpop.f32.mrf.mxu0
  %2007 = vdwg.mxu0
  %2008 = vmatpush.bf16.msra.mxu0 %v1960
  %2009 = vmatpush.bf16.msra.mxu0 %v1956
  %2010 = vmatpush.bf16.msra.mxu0 %v1952
  %2011 = vmatpush.bf16.msra.mxu0 %v1948
  %2012 = vmatpush.bf16.msra.mxu0 %v1944
  %2013 = vmatpush.bf16.msra.mxu0 %v1940
  %2014 = vmatpush.bf16.msra.mxu0 %v1936
  %2015 = vmatpush.bf16.msra.mxu0 %v1932
  %2016 = vmatmul.bf16.gmra.mxu0 %v1795
  %v2017 = vpop.f32.mrf.mxu0
  %v2018 = vadd.f32 0.0, %v2017
  %v2019 = vpop.f32.mrf.mxu0
  %2020 = vdwg.mxu0
  %2021 = vmatpush.bf16.msra.mxu0 %v1961
  %2022 = vmatpush.bf16.msra.mxu0 %v1957
  %2023 = vmatpush.bf16.msra.mxu0 %v1953
  %2024 = vmatpush.bf16.msra.mxu0 %v1949
  %2025 = vmatpush.bf16.msra.mxu0 %v1945
  %2026 = vmatpush.bf16.msra.mxu0 %v1941
  %2027 = vmatpush.bf16.msra.mxu0 %v1937
  %2028 = vmatpush.bf16.msra.mxu0 %v1933
  %2029 = vmatmul.bf16.gmra.mxu0 %v1795
  %v2030 = vpop.f32.mrf.mxu0
  %v2031 = vadd.f32 0.0, %v2030
  %v2032 = vpop.f32.mrf.mxu0
  %2033 = vdwg.mxu0
  %2034 = vmatpush.bf16.msra.mxu0 %v1962
  %2035 = vmatpush.bf16.msra.mxu0 %v1958
  %2036 = vmatpush.bf16.msra.mxu0 %v1954
  %2037 = vmatpush.bf16.msra.mxu0 %v1950
  %2038 = vmatpush.bf16.msra.mxu0 %v1946
  %2039 = vmatpush.bf16.msra.mxu0 %v1942
  %2040 = vmatpush.bf16.msra.mxu0 %v1938
  %2041 = vmatpush.bf16.msra.mxu0 %v1934
  %2042 = vmatmul.bf16.gmra.mxu0 %v1795
  %v2043 = vpop.f32.mrf.mxu0
  %v2044 = vadd.f32 0.0, %v2043
  %v2045 = vpop.f32.mrf.mxu0
  %2046 = vdwg.mxu0
  %v2047 = vadd.f32 %v1799, %v2005
  %v2048 = vadd.f32 %v1800, %v2018
  %v2049 = vadd.f32 %v1801, %v2031
  %v2050 = vadd.f32 %v1802, %v2044
  %v2051 = vsub.f32 0.0, %v2047
  %v2052 = vmul.f32 %v2051, 1.442695
  %v2053 = vpow.pop %v2052
  %v2054 = vadd.f32 %v2053, 1.0
  %v2055 = vrcp.pop %v2054
  %v2056 = vsub.f32 0.0, %v2048
  %v2057 = vmul.f32 %v2056, 1.442695
  %v2058 = vpow.pop %v2057
  %v2059 = vadd.f32 %v2058, 1.0
  %v2060 = vrcp.pop %v2059
  %v2061 = vtanh.pop %v2049
  %v2062 = vsub.f32 0.0, %v2050
  %v2063 = vmul.f32 %v2062, 1.442695
  %v2064 = vpow.pop %v2063
  %v2065 = vadd.f32 %v2064, 1.0
  %v2066 = vrcp.pop %v2065
  %v2067 = vmul.f32 %v2060, %v1792
  %v2068 = vmul.f32 %v2055, %v2061
  %v2069 = vadd.f32 %v2067, %v2068
  %v2070 = vtanh.pop %v2069
  %v2071 = vmul.f32 %v2066, %v2070
  %v2072 = vpack.c.bf16 %v2071, %v2071
  %s2073 = scalar_lea.vmem [#allocation2], 20
  %2074 = vst [vmem:[%s2073] sm:$0xf] %v2072
  %s2075 = scalar_lea.vmem [#allocation3], 192
  %v2076 = vld [vmem:[%s2075] sm:$0xff]
  %v2077 = vld [vmem:[%s2075 + $0x8] sm:$0xff]
  %v2078 = vld [vmem:[%s2075 + $0x10] sm:$0xff]
  %v2079 = vld [vmem:[%s2075 + $0x18] sm:$0xff]
  %v2080 = vld [vmem:[%s2] sm:$0xff]
  %v2081 = vld [vmem:[%s2 + $0x8] sm:$0xff]
  %v2082 = vld [vmem:[%s2 + $0x10] sm:$0xff]
  %v2083 = vld [vmem:[%s2 + $0x18] sm:$0xff]
  %v2084 = vld [vmem:[%s2 + $0x20] sm:$0xff]
  %v2085 = vld [vmem:[%s2 + $0x28] sm:$0xff]
  %v2086 = vld [vmem:[%s2 + $0x30] sm:$0xff]
  %v2087 = vld [vmem:[%s2 + $0x38] sm:$0xff]
  %v2088 = vld [vmem:[%s2 + $0x40] sm:$0xff]
  %v2089 = vld [vmem:[%s2 + $0x48] sm:$0xff]
  %v2090 = vld [vmem:[%s2 + $0x50] sm:$0xff]
  %v2091 = vld [vmem:[%s2 + $0x58] sm:$0xff]
  %v2092 = vld [vmem:[%s2 + $0x60] sm:$0xff]
  %v2093 = vld [vmem:[%s2 + $0x68] sm:$0xff]
  %v2094 = vld [vmem:[%s2 + $0x70] sm:$0xff]
  %v2095 = vld [vmem:[%s2 + $0x78] sm:$0xff]
  %v2096 = vld [vmem:[%s2 + $0x80] sm:$0xff]
  %v2097 = vld [vmem:[%s2 + $0x88] sm:$0xff]
  %v2098 = vld [vmem:[%s2 + $0x90] sm:$0xff]
  %v2099 = vld [vmem:[%s2 + $0x98] sm:$0xff]
  %v2100 = vld [vmem:[%s2 + $0xa0] sm:$0xff]
  %v2101 = vld [vmem:[%s2 + $0xa8] sm:$0xff]
  %v2102 = vld [vmem:[%s2 + $0xb0] sm:$0xff]
  %v2103 = vld [vmem:[%s2 + $0xb8] sm:$0xff]
  %v2104 = vld [vmem:[%s2 + $0xc0] sm:$0xff]
  %v2105 = vld [vmem:[%s2 + $0xc8] sm:$0xff]
  %v2106 = vld [vmem:[%s2 + $0xd0] sm:$0xff]
  %v2107 = vld [vmem:[%s2 + $0xd8] sm:$0xff]
  %v2108 = vld [vmem:[%s2 + $0xe0] sm:$0xff]
  %v2109 = vld [vmem:[%s2 + $0xe8] sm:$0xff]
  %v2110 = vld [vmem:[%s2 + $0xf0] sm:$0xff]
  %v2111 = vld [vmem:[%s2 + $0xf8] sm:$0xff]
  %v2144 = vunpack.c.l.b16 %v2080
  %v2145 = vunpack.c.h.b16 %v2080
  %v2146 = vunpack.c.l.b16 %v2081
  %v2147 = vunpack.c.h.b16 %v2081
  %v2148 = vunpack.c.l.b16 %v2082
  %v2149 = vunpack.c.h.b16 %v2082
  %v2150 = vunpack.c.l.b16 %v2083
  %v2151 = vunpack.c.h.b16 %v2083
  %v2152 = vunpack.c.l.b16 %v2084
  %v2153 = vunpack.c.h.b16 %v2084
  %v2154 = vunpack.c.l.b16 %v2085
  %v2155 = vunpack.c.h.b16 %v2085
  %v2156 = vunpack.c.l.b16 %v2086
  %v2157 = vunpack.c.h.b16 %v2086
  %v2158 = vunpack.c.l.b16 %v2087
  %v2159 = vunpack.c.h.b16 %v2087
  %v2160 = vunpack.c.l.b16 %v2088
  %v2161 = vunpack.c.h.b16 %v2088
  %v2162 = vunpack.c.l.b16 %v2089
  %v2163 = vunpack.c.h.b16 %v2089
  %v2164 = vunpack.c.l.b16 %v2090
  %v2165 = vunpack.c.h.b16 %v2090
  %v2166 = vunpack.c.l.b16 %v2091
  %v2167 = vunpack.c.h.b16 %v2091
  %v2168 = vunpack.c.l.b16 %v2092
  %v2169 = vunpack.c.h.b16 %v2092
  %v2170 = vunpack.c.l.b16 %v2093
  %v2171 = vunpack.c.h.b16 %v2093
  %v2172 = vunpack.c.l.b16 %v2094
  %v2173 = vunpack.c.h.b16 %v2094
  %v2174 = vunpack.c.l.b16 %v2095
  %v2175 = vunpack.c.h.b16 %v2095
  %v2176 = vunpack.c.l.b16 %v2096
  %v2177 = vunpack.c.h.b16 %v2096
  %v2178 = vunpack.c.l.b16 %v2097
  %v2179 = vunpack.c.h.b16 %v2097
  %v2180 = vunpack.c.l.b16 %v2098
  %v2181 = vunpack.c.h.b16 %v2098
  %v2182 = vunpack.c.l.b16 %v2099
  %v2183 = vunpack.c.h.b16 %v2099
  %v2184 = vunpack.c.l.b16 %v2100
  %v2185 = vunpack.c.h.b16 %v2100
  %v2186 = vunpack.c.l.b16 %v2101
  %v2187 = vunpack.c.h.b16 %v2101
  %v2188 = vunpack.c.l.b16 %v2102
  %v2189 = vunpack.c.h.b16 %v2102
  %v2190 = vunpack.c.l.b16 %v2103
  %v2191 = vunpack.c.h.b16 %v2103
  %v2192 = vunpack.c.l.b16 %v2104
  %v2193 = vunpack.c.h.b16 %v2104
  %v2194 = vunpack.c.l.b16 %v2105
  %v2195 = vunpack.c.h.b16 %v2105
  %v2196 = vunpack.c.l.b16 %v2106
  %v2197 = vunpack.c.h.b16 %v2106
  %v2198 = vunpack.c.l.b16 %v2107
  %v2199 = vunpack.c.h.b16 %v2107
  %v2200 = vunpack.c.l.b16 %v2108
  %v2201 = vunpack.c.h.b16 %v2108
  %v2202 = vunpack.c.l.b16 %v2109
  %v2203 = vunpack.c.h.b16 %v2109
  %v2204 = vunpack.c.l.b16 %v2110
  %v2205 = vunpack.c.h.b16 %v2110
  %v2206 = vunpack.c.l.b16 %v2111
  %v2207 = vunpack.c.h.b16 %v2111
  %v2208 = vpack.c.b16 %v2148, %v2144
  %v2209 = vpack.c.b16 %v2149, %v2145
  %v2210 = vpack.c.b16 %v2150, %v2146
  %v2211 = vpack.c.b16 %v2151, %v2147
  %v2212 = vpack.c.b16 %v2156, %v2152
  %v2213 = vpack.c.b16 %v2157, %v2153
  %v2214 = vpack.c.b16 %v2158, %v2154
  %v2215 = vpack.c.b16 %v2159, %v2155
  %v2216 = vpack.c.b16 %v2164, %v2160
  %v2217 = vpack.c.b16 %v2165, %v2161
  %v2218 = vpack.c.b16 %v2166, %v2162
  %v2219 = vpack.c.b16 %v2167, %v2163
  %v2220 = vpack.c.b16 %v2172, %v2168
  %v2221 = vpack.c.b16 %v2173, %v2169
  %v2222 = vpack.c.b16 %v2174, %v2170
  %v2223 = vpack.c.b16 %v2175, %v2171
  %v2224 = vpack.c.b16 %v2180, %v2176
  %v2225 = vpack.c.b16 %v2181, %v2177
  %v2226 = vpack.c.b16 %v2182, %v2178
  %v2227 = vpack.c.b16 %v2183, %v2179
  %v2228 = vpack.c.b16 %v2188, %v2184
  %v2229 = vpack.c.b16 %v2189, %v2185
  %v2230 = vpack.c.b16 %v2190, %v2186
  %v2231 = vpack.c.b16 %v2191, %v2187
  %v2232 = vpack.c.b16 %v2196, %v2192
  %v2233 = vpack.c.b16 %v2197, %v2193
  %v2234 = vpack.c.b16 %v2198, %v2194
  %v2235 = vpack.c.b16 %v2199, %v2195
  %v2236 = vpack.c.b16 %v2204, %v2200
  %v2237 = vpack.c.b16 %v2205, %v2201
  %v2238 = vpack.c.b16 %v2206, %v2202
  %v2239 = vpack.c.b16 %v2207, %v2203
  %2272 = vmatpush.bf16.msra.mxu0 %v2236
  %2273 = vmatpush.bf16.msra.mxu0 %v2232
  %2274 = vmatpush.bf16.msra.mxu0 %v2228
  %2275 = vmatpush.bf16.msra.mxu0 %v2224
  %2276 = vmatpush.bf16.msra.mxu0 %v2220
  %2277 = vmatpush.bf16.msra.mxu0 %v2216
  %2278 = vmatpush.bf16.msra.mxu0 %v2212
  %2279 = vmatpush.bf16.msra.mxu0 %v2208
  %2280 = vmatmul.bf16.gmra.mxu0 %v2072
  %v2281 = vpop.f32.mrf.mxu0
  %v2282 = vadd.f32 0.0, %v2281
  %v2283 = vpop.f32.mrf.mxu0
  %2284 = vdwg.mxu0
  %2285 = vmatpush.bf16.msra.mxu0 %v2237
  %2286 = vmatpush.bf16.msra.mxu0 %v2233
  %2287 = vmatpush.bf16.msra.mxu0 %v2229
  %2288 = vmatpush.bf16.msra.mxu0 %v2225
  %2289 = vmatpush.bf16.msra.mxu0 %v2221
  %2290 = vmatpush.bf16.msra.mxu0 %v2217
  %2291 = vmatpush.bf16.msra.mxu0 %v2213
  %2292 = vmatpush.bf16.msra.mxu0 %v2209
  %2293 = vmatmul.bf16.gmra.mxu0 %v2072
  %v2294 = vpop.f32.mrf.mxu0
  %v2295 = vadd.f32 0.0, %v2294
  %v2296 = vpop.f32.mrf.mxu0
  %2297 = vdwg.mxu0
  %2298 = vmatpush.bf16.msra.mxu0 %v2238
  %2299 = vmatpush.bf16.msra.mxu0 %v2234
  %2300 = vmatpush.bf16.msra.mxu0 %v2230
  %2301 = vmatpush.bf16.msra.mxu0 %v2226
  %2302 = vmatpush.bf16.msra.mxu0 %v2222
  %2303 = vmatpush.bf16.msra.mxu0 %v2218
  %2304 = vmatpush.bf16.msra.mxu0 %v2214
  %2305 = vmatpush.bf16.msra.mxu0 %v2210
  %2306 = vmatmul.bf16.gmra.mxu0 %v2072
  %v2307 = vpop.f32.mrf.mxu0
  %v2308 = vadd.f32 0.0, %v2307
  %v2309 = vpop.f32.mrf.mxu0
  %2310 = vdwg.mxu0
  %2311 = vmatpush.bf16.msra.mxu0 %v2239
  %2312 = vmatpush.bf16.msra.mxu0 %v2235
  %2313 = vmatpush.bf16.msra.mxu0 %v2231
  %2314 = vmatpush.bf16.msra.mxu0 %v2227
  %2315 = vmatpush.bf16.msra.mxu0 %v2223
  %2316 = vmatpush.bf16.msra.mxu0 %v2219
  %2317 = vmatpush.bf16.msra.mxu0 %v2215
  %2318 = vmatpush.bf16.msra.mxu0 %v2211
  %2319 = vmatmul.bf16.gmra.mxu0 %v2072
  %v2320 = vpop.f32.mrf.mxu0
  %v2321 = vadd.f32 0.0, %v2320
  %v2322 = vpop.f32.mrf.mxu0
  %2323 = vdwg.mxu0
  %v2324 = vadd.f32 %v2076, %v2282
  %v2325 = vadd.f32 %v2077, %v2295
  %v2326 = vadd.f32 %v2078, %v2308
  %v2327 = vadd.f32 %v2079, %v2321
  %v2328 = vsub.f32 0.0, %v2324
  %v2329 = vmul.f32 %v2328, 1.442695
  %v2330 = vpow.pop %v2329
  %v2331 = vadd.f32 %v2330, 1.0
  %v2332 = vrcp.pop %v2331
  %v2333 = vsub.f32 0.0, %v2325
  %v2334 = vmul.f32 %v2333, 1.442695
  %v2335 = vpow.pop %v2334
  %v2336 = vadd.f32 %v2335, 1.0
  %v2337 = vrcp.pop %v2336
  %v2338 = vtanh.pop %v2326
  %v2339 = vsub.f32 0.0, %v2327
  %v2340 = vmul.f32 %v2339, 1.442695
  %v2341 = vpow.pop %v2340
  %v2342 = vadd.f32 %v2341, 1.0
  %v2343 = vrcp.pop %v2342
  %v2344 = vmul.f32 %v2337, %v2069
  %v2345 = vmul.f32 %v2332, %v2338
  %v2346 = vadd.f32 %v2344, %v2345
  %v2347 = vtanh.pop %v2346
  %v2348 = vmul.f32 %v2343, %v2347
  %v2349 = vpack.c.bf16 %v2348, %v2348
  %s2350 = scalar_lea.vmem [#allocation2], 24
  %2351 = vst [vmem:[%s2350] sm:$0xf] %v2349
  %s2352 = scalar_lea.vmem [#allocation3], 224
  %v2353 = vld [vmem:[%s2352] sm:$0xff]
  %v2354 = vld [vmem:[%s2352 + $0x8] sm:$0xff]
  %v2355 = vld [vmem:[%s2352 + $0x10] sm:$0xff]
  %v2356 = vld [vmem:[%s2352 + $0x18] sm:$0xff]
  %v2357 = vld [vmem:[%s2] sm:$0xff]
  %v2358 = vld [vmem:[%s2 + $0x8] sm:$0xff]
  %v2359 = vld [vmem:[%s2 + $0x10] sm:$0xff]
  %v2360 = vld [vmem:[%s2 + $0x18] sm:$0xff]
  %v2361 = vld [vmem:[%s2 + $0x20] sm:$0xff]
  %v2362 = vld [vmem:[%s2 + $0x28] sm:$0xff]
  %v2363 = vld [vmem:[%s2 + $0x30] sm:$0xff]
  %v2364 = vld [vmem:[%s2 + $0x38] sm:$0xff]
  %v2365 = vld [vmem:[%s2 + $0x40] sm:$0xff]
  %v2366 = vld [vmem:[%s2 + $0x48] sm:$0xff]
  %v2367 = vld [vmem:[%s2 + $0x50] sm:$0xff]
  %v2368 = vld [vmem:[%s2 + $0x58] sm:$0xff]
  %v2369 = vld [vmem:[%s2 + $0x60] sm:$0xff]
  %v2370 = vld [vmem:[%s2 + $0x68] sm:$0xff]
  %v2371 = vld [vmem:[%s2 + $0x70] sm:$0xff]
  %v2372 = vld [vmem:[%s2 + $0x78] sm:$0xff]
  %v2373 = vld [vmem:[%s2 + $0x80] sm:$0xff]
  %v2374 = vld [vmem:[%s2 + $0x88] sm:$0xff]
  %v2375 = vld [vmem:[%s2 + $0x90] sm:$0xff]
  %v2376 = vld [vmem:[%s2 + $0x98] sm:$0xff]
  %v2377 = vld [vmem:[%s2 + $0xa0] sm:$0xff]
  %v2378 = vld [vmem:[%s2 + $0xa8] sm:$0xff]
  %v2379 = vld [vmem:[%s2 + $0xb0] sm:$0xff]
  %v2380 = vld [vmem:[%s2 + $0xb8] sm:$0xff]
  %v2381 = vld [vmem:[%s2 + $0xc0] sm:$0xff]
  %v2382 = vld [vmem:[%s2 + $0xc8] sm:$0xff]
  %v2383 = vld [vmem:[%s2 + $0xd0] sm:$0xff]
  %v2384 = vld [vmem:[%s2 + $0xd8] sm:$0xff]
  %v2385 = vld [vmem:[%s2 + $0xe0] sm:$0xff]
  %v2386 = vld [vmem:[%s2 + $0xe8] sm:$0xff]
  %v2387 = vld [vmem:[%s2 + $0xf0] sm:$0xff]
  %v2388 = vld [vmem:[%s2 + $0xf8] sm:$0xff]
  %v2421 = vunpack.c.l.b16 %v2357
  %v2422 = vunpack.c.h.b16 %v2357
  %v2423 = vunpack.c.l.b16 %v2358
  %v2424 = vunpack.c.h.b16 %v2358
  %v2425 = vunpack.c.l.b16 %v2359
  %v2426 = vunpack.c.h.b16 %v2359
  %v2427 = vunpack.c.l.b16 %v2360
  %v2428 = vunpack.c.h.b16 %v2360
  %v2429 = vunpack.c.l.b16 %v2361
  %v2430 = vunpack.c.h.b16 %v2361
  %v2431 = vunpack.c.l.b16 %v2362
  %v2432 = vunpack.c.h.b16 %v2362
  %v2433 = vunpack.c.l.b16 %v2363
  %v2434 = vunpack.c.h.b16 %v2363
  %v2435 = vunpack.c.l.b16 %v2364
  %v2436 = vunpack.c.h.b16 %v2364
  %v2437 = vunpack.c.l.b16 %v2365
  %v2438 = vunpack.c.h.b16 %v2365
  %v2439 = vunpack.c.l.b16 %v2366
  %v2440 = vunpack.c.h.b16 %v2366
  %v2441 = vunpack.c.l.b16 %v2367
  %v2442 = vunpack.c.h.b16 %v2367
  %v2443 = vunpack.c.l.b16 %v2368
  %v2444 = vunpack.c.h.b16 %v2368
  %v2445 = vunpack.c.l.b16 %v2369
  %v2446 = vunpack.c.h.b16 %v2369
  %v2447 = vunpack.c.l.b16 %v2370
  %v2448 = vunpack.c.h.b16 %v2370
  %v2449 = vunpack.c.l.b16 %v2371
  %v2450 = vunpack.c.h.b16 %v2371
  %v2451 = vunpack.c.l.b16 %v2372
  %v2452 = vunpack.c.h.b16 %v2372
  %v2453 = vunpack.c.l.b16 %v2373
  %v2454 = vunpack.c.h.b16 %v2373
  %v2455 = vunpack.c.l.b16 %v2374
  %v2456 = vunpack.c.h.b16 %v2374
  %v2457 = vunpack.c.l.b16 %v2375
  %v2458 = vunpack.c.h.b16 %v2375
  %v2459 = vunpack.c.l.b16 %v2376
  %v2460 = vunpack.c.h.b16 %v2376
  %v2461 = vunpack.c.l.b16 %v2377
  %v2462 = vunpack.c.h.b16 %v2377
  %v2463 = vunpack.c.l.b16 %v2378
  %v2464 = vunpack.c.h.b16 %v2378
  %v2465 = vunpack.c.l.b16 %v2379
  %v2466 = vunpack.c.h.b16 %v2379
  %v2467 = vunpack.c.l.b16 %v2380
  %v2468 = vunpack.c.h.b16 %v2380
  %v2469 = vunpack.c.l.b16 %v2381
  %v2470 = vunpack.c.h.b16 %v2381
  %v2471 = vunpack.c.l.b16 %v2382
  %v2472 = vunpack.c.h.b16 %v2382
  %v2473 = vunpack.c.l.b16 %v2383
  %v2474 = vunpack.c.h.b16 %v2383
  %v2475 = vunpack.c.l.b16 %v2384
  %v2476 = vunpack.c.h.b16 %v2384
  %v2477 = vunpack.c.l.b16 %v2385
  %v2478 = vunpack.c.h.b16 %v2385
  %v2479 = vunpack.c.l.b16 %v2386
  %v2480 = vunpack.c.h.b16 %v2386
  %v2481 = vunpack.c.l.b16 %v2387
  %v2482 = vunpack.c.h.b16 %v2387
  %v2483 = vunpack.c.l.b16 %v2388
  %v2484 = vunpack.c.h.b16 %v2388
  %v2485 = vpack.c.b16 %v2425, %v2421
  %v2486 = vpack.c.b16 %v2426, %v2422
  %v2487 = vpack.c.b16 %v2427, %v2423
  %v2488 = vpack.c.b16 %v2428, %v2424
  %v2489 = vpack.c.b16 %v2433, %v2429
  %v2490 = vpack.c.b16 %v2434, %v2430
  %v2491 = vpack.c.b16 %v2435, %v2431
  %v2492 = vpack.c.b16 %v2436, %v2432
  %v2493 = vpack.c.b16 %v2441, %v2437
  %v2494 = vpack.c.b16 %v2442, %v2438
  %v2495 = vpack.c.b16 %v2443, %v2439
  %v2496 = vpack.c.b16 %v2444, %v2440
  %v2497 = vpack.c.b16 %v2449, %v2445
  %v2498 = vpack.c.b16 %v2450, %v2446
  %v2499 = vpack.c.b16 %v2451, %v2447
  %v2500 = vpack.c.b16 %v2452, %v2448
  %v2501 = vpack.c.b16 %v2457, %v2453
  %v2502 = vpack.c.b16 %v2458, %v2454
  %v2503 = vpack.c.b16 %v2459, %v2455
  %v2504 = vpack.c.b16 %v2460, %v2456
  %v2505 = vpack.c.b16 %v2465, %v2461
  %v2506 = vpack.c.b16 %v2466, %v2462
  %v2507 = vpack.c.b16 %v2467, %v2463
  %v2508 = vpack.c.b16 %v2468, %v2464
  %v2509 = vpack.c.b16 %v2473, %v2469
  %v2510 = vpack.c.b16 %v2474, %v2470
  %v2511 = vpack.c.b16 %v2475, %v2471
  %v2512 = vpack.c.b16 %v2476, %v2472
  %v2513 = vpack.c.b16 %v2481, %v2477
  %v2514 = vpack.c.b16 %v2482, %v2478
  %v2515 = vpack.c.b16 %v2483, %v2479
  %v2516 = vpack.c.b16 %v2484, %v2480
  %2549 = vmatpush.bf16.msra.mxu0 %v2513
  %2550 = vmatpush.bf16.msra.mxu0 %v2509
  %2551 = vmatpush.bf16.msra.mxu0 %v2505
  %2552 = vmatpush.bf16.msra.mxu0 %v2501
  %2553 = vmatpush.bf16.msra.mxu0 %v2497
  %2554 = vmatpush.bf16.msra.mxu0 %v2493
  %2555 = vmatpush.bf16.msra.mxu0 %v2489
  %2556 = vmatpush.bf16.msra.mxu0 %v2485
  %2557 = vmatmul.bf16.gmra.mxu0 %v2349
  %v2558 = vpop.f32.mrf.mxu0
  %v2559 = vadd.f32 0.0, %v2558
  %v2560 = vpop.f32.mrf.mxu0
  %2561 = vdwg.mxu0
  %2562 = vmatpush.bf16.msra.mxu0 %v2514
  %2563 = vmatpush.bf16.msra.mxu0 %v2510
  %2564 = vmatpush.bf16.msra.mxu0 %v2506
  %2565 = vmatpush.bf16.msra.mxu0 %v2502
  %2566 = vmatpush.bf16.msra.mxu0 %v2498
  %2567 = vmatpush.bf16.msra.mxu0 %v2494
  %2568 = vmatpush.bf16.msra.mxu0 %v2490
  %2569 = vmatpush.bf16.msra.mxu0 %v2486
  %2570 = vmatmul.bf16.gmra.mxu0 %v2349
  %v2571 = vpop.f32.mrf.mxu0
  %v2572 = vadd.f32 0.0, %v2571
  %v2573 = vpop.f32.mrf.mxu0
  %2574 = vdwg.mxu0
  %2575 = vmatpush.bf16.msra.mxu0 %v2515
  %2576 = vmatpush.bf16.msra.mxu0 %v2511
  %2577 = vmatpush.bf16.msra.mxu0 %v2507
  %2578 = vmatpush.bf16.msra.mxu0 %v2503
  %2579 = vmatpush.bf16.msra.mxu0 %v2499
  %2580 = vmatpush.bf16.msra.mxu0 %v2495
  %2581 = vmatpush.bf16.msra.mxu0 %v2491
  %2582 = vmatpush.bf16.msra.mxu0 %v2487
  %2583 = vmatmul.bf16.gmra.mxu0 %v2349
  %v2584 = vpop.f32.mrf.mxu0
  %v2585 = vadd.f32 0.0, %v2584
  %v2586 = vpop.f32.mrf.mxu0
  %2587 = vdwg.mxu0
  %2588 = vmatpush.bf16.msra.mxu0 %v2516
  %2589 = vmatpush.bf16.msra.mxu0 %v2512
  %2590 = vmatpush.bf16.msra.mxu0 %v2508
  %2591 = vmatpush.bf16.msra.mxu0 %v2504
  %2592 = vmatpush.bf16.msra.mxu0 %v2500
  %2593 = vmatpush.bf16.msra.mxu0 %v2496
  %2594 = vmatpush.bf16.msra.mxu0 %v2492
  %2595 = vmatpush.bf16.msra.mxu0 %v2488
  %2596 = vmatmul.bf16.gmra.mxu0 %v2349
  %v2597 = vpop.f32.mrf.mxu0
  %v2598 = vadd.f32 0.0, %v2597
  %v2599 = vpop.f32.mrf.mxu0
  %2600 = vdwg.mxu0
  %v2601 = vadd.f32 %v2353, %v2559
  %v2602 = vadd.f32 %v2354, %v2572
  %v2603 = vadd.f32 %v2355, %v2585
  %v2604 = vadd.f32 %v2356, %v2598
  %v2605 = vsub.f32 0.0, %v2601
  %v2606 = vmul.f32 %v2605, 1.442695
  %v2607 = vpow.pop %v2606
  %v2608 = vadd.f32 %v2607, 1.0
  %v2609 = vrcp.pop %v2608
  %v2610 = vsub.f32 0.0, %v2602
  %v2611 = vmul.f32 %v2610, 1.442695
  %v2612 = vpow.pop %v2611
  %v2613 = vadd.f32 %v2612, 1.0
  %v2614 = vrcp.pop %v2613
  %v2615 = vtanh.pop %v2603
  %v2616 = vsub.f32 0.0, %v2604
  %v2617 = vmul.f32 %v2616, 1.442695
  %v2618 = vpow.pop %v2617
  %v2619 = vadd.f32 %v2618, 1.0
  %v2620 = vrcp.pop %v2619
  %v2621 = vmul.f32 %v2614, %v2346
  %v2622 = vmul.f32 %v2609, %v2615
  %v2623 = vadd.f32 %v2621, %v2622
  %v2624 = vtanh.pop %v2623
  %v2625 = vmul.f32 %v2620, %v2624
  %v2626 = vpack.c.bf16 %v2625, %v2625
  %s2627 = scalar_lea.vmem [#allocation2], 28
  %2628 = vst [vmem:[%s2627] sm:$0xf] %v2626
  %v2629 = vld [vmem:[#allocation2] sm:$0xf]
  %v2630 = vld [vmem:[#allocation2 + $0x4] sm:$0xf]
  %v2631 = vld [vmem:[#allocation2 + $0x8] sm:$0xf]
  %v2632 = vld [vmem:[#allocation2 + $0xc] sm:$0xf]
  %v2633 = vld [vmem:[#allocation2 + $0x10] sm:$0xf]
  %v2634 = vld [vmem:[#allocation2 + $0x14] sm:$0xf]
  %v2635 = vld [vmem:[#allocation2 + $0x18] sm:$0xf]
  %v2636 = vld [vmem:[#allocation2 + $0x1c] sm:$0xf]
  %v2637 = vld [vmem:[%s4] sm:$0xff]
  %v2638 = vld [vmem:[%s4 + $0x8] sm:$0xff]
  %v2639 = vld [vmem:[%s4 + $0x10] sm:$0xff]
  %v2640 = vld [vmem:[%s4 + $0x18] sm:$0xff]
  %v2641 = vld [vmem:[%s4 + $0x20] sm:$0xff]
  %v2642 = vld [vmem:[%s4 + $0x28] sm:$0xff]
  %v2643 = vld [vmem:[%s4 + $0x30] sm:$0xff]
  %v2644 = vld [vmem:[%s4 + $0x38] sm:$0xff]
  %v2645 = vld [vmem:[%s4 + $0x40] sm:$0xff]
  %v2646 = vld [vmem:[%s4 + $0x48] sm:$0xff]
  %v2647 = vld [vmem:[%s4 + $0x50] sm:$0xff]
  %v2648 = vld [vmem:[%s4 + $0x58] sm:$0xff]
  %v2649 = vld [vmem:[%s4 + $0x60] sm:$0xff]
  %v2650 = vld [vmem:[%s4 + $0x68] sm:$0xff]
  %v2651 = vld [vmem:[%s4 + $0x70] sm:$0xff]
  %v2652 = vld [vmem:[%s4 + $0x78] sm:$0xff]
  %v2653 = vld [vmem:[%s4 + $0x80] sm:$0xff]
  %v2654 = vld [vmem:[%s4 + $0x88] sm:$0xff]
  %v2655 = vld [vmem:[%s4 + $0x90] sm:$0xff]
  %v2656 = vld [vmem:[%s4 + $0x98] sm:$0xff]
  %v2657 = vld [vmem:[%s4 + $0xa0] sm:$0xff]
  %v2658 = vld [vmem:[%s4 + $0xa8] sm:$0xff]
  %v2659 = vld [vmem:[%s4 + $0xb0] sm:$0xff]
  %v2660 = vld [vmem:[%s4 + $0xb8] sm:$0xff]
  %v2661 = vld [vmem:[%s4 + $0xc0] sm:$0xff]
  %v2662 = vld [vmem:[%s4 + $0xc8] sm:$0xff]
  %v2663 = vld [vmem:[%s4 + $0xd0] sm:$0xff]
  %v2664 = vld [vmem:[%s4 + $0xd8] sm:$0xff]
  %v2665 = vld [vmem:[%s4 + $0xe0] sm:$0xff]
  %v2666 = vld [vmem:[%s4 + $0xe8] sm:$0xff]
  %v2667 = vld [vmem:[%s4 + $0xf0] sm:$0xff]
  %v2668 = vld [vmem:[%s4 + $0xf8] sm:$0xff]
  %v2669 = vld [vmem:[%s6] sm:$0xf]
  %v2671 = vperm.slane %v2669, 0
  %v2672 = vperm.slane %v2669, 1
  %v2673 = vperm.slane %v2669, 2
  %v2674 = vperm.slane %v2669, 3
  %v2687 = vunpack.c.l.b16 %v2629
  %v2688 = vunpack.c.l.b16 %v2630
  %v2689 = vunpack.c.l.b16 %v2631
  %v2690 = vunpack.c.l.b16 %v2632
  %v2691 = vunpack.c.l.b16 %v2633
  %v2692 = vunpack.c.l.b16 %v2634
  %v2693 = vunpack.c.l.b16 %v2635
  %v2694 = vunpack.c.l.b16 %v2636
  %v2695 = vpack.c.b16 %v2688, %v2687
  %v2696 = vpack.c.b16 %v2690, %v2689
  %v2697 = vpack.c.b16 %v2692, %v2691
  %v2698 = vpack.c.b16 %v2694, %v2693
  %v2735 = vunpack.c.l.b16 %v2637
  %v2736 = vunpack.c.h.b16 %v2637
  %v2737 = vunpack.c.l.b16 %v2638
  %v2738 = vunpack.c.h.b16 %v2638
  %v2739 = vunpack.c.l.b16 %v2639
  %v2740 = vunpack.c.h.b16 %v2639
  %v2741 = vunpack.c.l.b16 %v2640
  %v2742 = vunpack.c.h.b16 %v2640
  %v2743 = vunpack.c.l.b16 %v2641
  %v2744 = vunpack.c.h.b16 %v2641
  %v2745 = vunpack.c.l.b16 %v2642
  %v2746 = vunpack.c.h.b16 %v2642
  %v2747 = vunpack.c.l.b16 %v2643
  %v2748 = vunpack.c.h.b16 %v2643
  %v2749 = vunpack.c.l.b16 %v2644
  %v2750 = vunpack.c.h.b16 %v2644
  %v2751 = vunpack.c.l.b16 %v2645
  %v2752 = vunpack.c.h.b16 %v2645
  %v2753 = vunpack.c.l.b16 %v2646
  %v2754 = vunpack.c.h.b16 %v2646
  %v2755 = vunpack.c.l.b16 %v2647
  %v2756 = vunpack.c.h.b16 %v2647
  %v2757 = vunpack.c.l.b16 %v2648
  %v2758 = vunpack.c.h.b16 %v2648
  %v2759 = vunpack.c.l.b16 %v2649
  %v2760 = vunpack.c.h.b16 %v2649
  %v2761 = vunpack.c.l.b16 %v2650
  %v2762 = vunpack.c.h.b16 %v2650
  %v2763 = vunpack.c.l.b16 %v2651
  %v2764 = vunpack.c.h.b16 %v2651
  %v2765 = vunpack.c.l.b16 %v2652
  %v2766 = vunpack.c.h.b16 %v2652
  %v2767 = vunpack.c.l.b16 %v2653
  %v2768 = vunpack.c.h.b16 %v2653
  %v2769 = vunpack.c.l.b16 %v2654
  %v2770 = vunpack.c.h.b16 %v2654
  %v2771 = vunpack.c.l.b16 %v2655
  %v2772 = vunpack.c.h.b16 %v2655
  %v2773 = vunpack.c.l.b16 %v2656
  %v2774 = vunpack.c.h.b16 %v2656
  %v2775 = vunpack.c.l.b16 %v2657
  %v2776 = vunpack.c.h.b16 %v2657
  %v2777 = vunpack.c.l.b16 %v2658
  %v2778 = vunpack.c.h.b16 %v2658
  %v2779 = vunpack.c.l.b16 %v2659
  %v2780 = vunpack.c.h.b16 %v2659
  %v2781 = vunpack.c.l.b16 %v2660
  %v2782 = vunpack.c.h.b16 %v2660
  %v2783 = vunpack.c.l.b16 %v2661
  %v2784 = vunpack.c.h.b16 %v2661
  %v2785 = vunpack.c.l.b16 %v2662
  %v2786 = vunpack.c.h.b16 %v2662
  %v2787 = vunpack.c.l.b16 %v2663
  %v2788 = vunpack.c.h.b16 %v2663
  %v2789 = vunpack.c.l.b16 %v2664
  %v2790 = vunpack.c.h.b16 %v2664
  %v2791 = vunpack.c.l.b16 %v2665
  %v2792 = vunpack.c.h.b16 %v2665
  %v2793 = vunpack.c.l.b16 %v2666
  %v2794 = vunpack.c.h.b16 %v2666
  %v2795 = vunpack.c.l.b16 %v2667
  %v2796 = vunpack.c.h.b16 %v2667
  %v2797 = vunpack.c.l.b16 %v2668
  %v2798 = vunpack.c.h.b16 %v2668
  %v2799 = vpack.c.b16 %v2739, %v2735
  %v2800 = vpack.c.b16 %v2740, %v2736
  %v2801 = vpack.c.b16 %v2741, %v2737
  %v2802 = vpack.c.b16 %v2742, %v2738
  %v2803 = vpack.c.b16 %v2747, %v2743
  %v2804 = vpack.c.b16 %v2748, %v2744
  %v2805 = vpack.c.b16 %v2749, %v2745
  %v2806 = vpack.c.b16 %v2750, %v2746
  %v2807 = vpack.c.b16 %v2755, %v2751
  %v2808 = vpack.c.b16 %v2756, %v2752
  %v2809 = vpack.c.b16 %v2757, %v2753
  %v2810 = vpack.c.b16 %v2758, %v2754
  %v2811 = vpack.c.b16 %v2763, %v2759
  %v2812 = vpack.c.b16 %v2764, %v2760
  %v2813 = vpack.c.b16 %v2765, %v2761
  %v2814 = vpack.c.b16 %v2766, %v2762
  %v2815 = vpack.c.b16 %v2771, %v2767
  %v2816 = vpack.c.b16 %v2772, %v2768
  %v2817 = vpack.c.b16 %v2773, %v2769
  %v2818 = vpack.c.b16 %v2774, %v2770
  %v2819 = vpack.c.b16 %v2779, %v2775
  %v2820 = vpack.c.b16 %v2780, %v2776
  %v2821 = vpack.c.b16 %v2781, %v2777
  %v2822 = vpack.c.b16 %v2782, %v2778
  %v2823 = vpack.c.b16 %v2787, %v2783
  %v2824 = vpack.c.b16 %v2788, %v2784
  %v2825 = vpack.c.b16 %v2789, %v2785
  %v2826 = vpack.c.b16 %v2790, %v2786
  %v2827 = vpack.c.b16 %v2795, %v2791
  %v2828 = vpack.c.b16 %v2796, %v2792
  %v2829 = vpack.c.b16 %v2797, %v2793
  %v2830 = vpack.c.b16 %v2798, %v2794
  %2863 = vmatpush.bf16.msra.mxu0 %v2827
  %2864 = vmatpush.bf16.msra.mxu0 %v2823
  %2865 = vmatpush.bf16.msra.mxu0 %v2819
  %2866 = vmatpush.bf16.msra.mxu0 %v2815
  %2867 = vmatpush.bf16.msra.mxu0 %v2811
  %2868 = vmatpush.bf16.msra.mxu0 %v2807
  %2869 = vmatpush.bf16.msra.mxu0 %v2803
  %2870 = vmatpush.bf16.msra.mxu0 %v2799
  %2871 = vmatmul.bf16.gmra.mxu0 %v2695
  %v2872 = vpop.f32.mrf.mxu0
  %v2873 = vadd.f32 %v2671, %v2872
  %v2874 = vpop.f32.mrf.mxu0
  %v2875 = vadd.f32 %v2671, %v2874
  %2876 = vmatmul.bf16.gmra.mxu0 %v2696
  %v2877 = vpop.f32.mrf.mxu0
  %v2878 = vadd.f32 %v2671, %v2877
  %v2879 = vpop.f32.mrf.mxu0
  %v2880 = vadd.f32 %v2671, %v2879
  %2881 = vmatmul.bf16.gmra.mxu0 %v2697
  %v2882 = vpop.f32.mrf.mxu0
  %v2883 = vadd.f32 %v2671, %v2882
  %v2884 = vpop.f32.mrf.mxu0
  %v2885 = vadd.f32 %v2671, %v2884
  %2886 = vmatmul.bf16.gmra.mxu0 %v2698
  %v2887 = vpop.f32.mrf.mxu0
  %v2888 = vadd.f32 %v2671, %v2887
  %v2889 = vpop.f32.mrf.mxu0
  %v2890 = vadd.f32 %v2671, %v2889
  %2891 = vdwg.mxu0
  %2892 = vmatpush.bf16.msra.mxu0 %v2828
  %2893 = vmatpush.bf16.msra.mxu0 %v2824
  %2894 = vmatpush.bf16.msra.mxu0 %v2820
  %2895 = vmatpush.bf16.msra.mxu0 %v2816
  %2896 = vmatpush.bf16.msra.mxu0 %v2812
  %2897 = vmatpush.bf16.msra.mxu0 %v2808
  %2898 = vmatpush.bf16.msra.mxu0 %v2804
  %2899 = vmatpush.bf16.msra.mxu0 %v2800
  %2900 = vmatmul.bf16.gmra.mxu0 %v2695
  %v2901 = vpop.f32.mrf.mxu0
  %v2902 = vadd.f32 %v2672, %v2901
  %v2903 = vpop.f32.mrf.mxu0
  %v2904 = vadd.f32 %v2672, %v2903
  %2905 = vmatmul.bf16.gmra.mxu0 %v2696
  %v2906 = vpop.f32.mrf.mxu0
  %v2907 = vadd.f32 %v2672, %v2906
  %v2908 = vpop.f32.mrf.mxu0
  %v2909 = vadd.f32 %v2672, %v2908
  %2910 = vmatmul.bf16.gmra.mxu0 %v2697
  %v2911 = vpop.f32.mrf.mxu0
  %v2912 = vadd.f32 %v2672, %v2911
  %v2913 = vpop.f32.mrf.mxu0
  %v2914 = vadd.f32 %v2672, %v2913
  %2915 = vmatmul.bf16.gmra.mxu0 %v2698
  %v2916 = vpop.f32.mrf.mxu0
  %v2917 = vadd.f32 %v2672, %v2916
  %v2918 = vpop.f32.mrf.mxu0
  %v2919 = vadd.f32 %v2672, %v2918
  %2920 = vdwg.mxu0
  %2921 = vmatpush.bf16.msra.mxu0 %v2829
  %2922 = vmatpush.bf16.msra.mxu0 %v2825
  %2923 = vmatpush.bf16.msra.mxu0 %v2821
  %2924 = vmatpush.bf16.msra.mxu0 %v2817
  %2925 = vmatpush.bf16.msra.mxu0 %v2813
  %2926 = vmatpush.bf16.msra.mxu0 %v2809
  %2927 = vmatpush.bf16.msra.mxu0 %v2805
  %2928 = vmatpush.bf16.msra.mxu0 %v2801
  %2929 = vmatmul.bf16.gmra.mxu0 %v2695
  %v2930 = vpop.f32.mrf.mxu0
  %v2931 = vadd.f32 %v2673, %v2930
  %v2932 = vpop.f32.mrf.mxu0
  %v2933 = vadd.f32 %v2673, %v2932
  %2934 = vmatmul.bf16.gmra.mxu0 %v2696
  %v2935 = vpop.f32.mrf.mxu0
  %v2936 = vadd.f32 %v2673, %v2935
  %v2937 = vpop.f32.mrf.mxu0
  %v2938 = vadd.f32 %v2673, %v2937
  %2939 = vmatmul.bf16.gmra.mxu0 %v2697
  %v2940 = vpop.f32.mrf.mxu0
  %v2941 = vadd.f32 %v2673, %v2940
  %v2942 = vpop.f32.mrf.mxu0
  %v2943 = vadd.f32 %v2673, %v2942
  %2944 = vmatmul.bf16.gmra.mxu0 %v2698
  %v2945 = vpop.f32.mrf.mxu0
  %v2946 = vadd.f32 %v2673, %v2945
  %v2947 = vpop.f32.mrf.mxu0
  %v2948 = vadd.f32 %v2673, %v2947
  %2949 = vdwg.mxu0
  %2950 = vmatpush.bf16.msra.mxu0 %v2830
  %2951 = vmatpush.bf16.msra.mxu0 %v2826
  %2952 = vmatpush.bf16.msra.mxu0 %v2822
  %2953 = vmatpush.bf16.msra.mxu0 %v2818
  %2954 = vmatpush.bf16.msra.mxu0 %v2814
  %2955 = vmatpush.bf16.msra.mxu0 %v2810
  %2956 = vmatpush.bf16.msra.mxu0 %v2806
  %2957 = vmatpush.bf16.msra.mxu0 %v2802
  %2958 = vmatmul.bf16.gmra.mxu0 %v2695
  %v2959 = vpop.f32.mrf.mxu0
  %v2960 = vadd.f32 %v2674, %v2959
  %v2961 = vpop.f32.mrf.mxu0
  %v2962 = vadd.f32 %v2674, %v2961
  %2963 = vmatmul.bf16.gmra.mxu0 %v2696
  %v2964 = vpop.f32.mrf.mxu0
  %v2965 = vadd.f32 %v2674, %v2964
  %v2966 = vpop.f32.mrf.mxu0
  %v2967 = vadd.f32 %v2674, %v2966
  %2968 = vmatmul.bf16.gmra.mxu0 %v2697
  %v2969 = vpop.f32.mrf.mxu0
  %v2970 = vadd.f32 %v2674, %v2969
  %v2971 = vpop.f32.mrf.mxu0
  %v2972 = vadd.f32 %v2674, %v2971
  %2973 = vmatmul.bf16.gmra.mxu0 %v2698
  %v2974 = vpop.f32.mrf.mxu0
  %v2975 = vadd.f32 %v2674, %v2974
  %v2976 = vpop.f32.mrf.mxu0
  %v2977 = vadd.f32 %v2674, %v2976
  %2978 = vdwg.mxu0
  %2979 = vst [vmem:[#allocation3] sm:$0xff] %v2873
  %2980 = vst [vmem:[#allocation3 + $0x8] sm:$0xff] %v2902
  %2981 = vst [vmem:[#allocation3 + $0x10] sm:$0xff] %v2931
  %2982 = vst [vmem:[#allocation3 + $0x18] sm:$0xff] %v2960
  %2983 = vst [vmem:[#allocation3 + $0x20] sm:$0xff] %v2875
  %2984 = vst [vmem:[#allocation3 + $0x28] sm:$0xff] %v2904
  %2985 = vst [vmem:[#allocation3 + $0x30] sm:$0xff] %v2933
  %2986 = vst [vmem:[#allocation3 + $0x38] sm:$0xff] %v2962
  %2987 = vst [vmem:[#allocation3 + $0x40] sm:$0xff] %v2878
  %2988 = vst [vmem:[#allocation3 + $0x48] sm:$0xff] %v2907
  %2989 = vst [vmem:[#allocation3 + $0x50] sm:$0xff] %v2936
  %2990 = vst [vmem:[#allocation3 + $0x58] sm:$0xff] %v2965
  %2991 = vst [vmem:[#allocation3 + $0x60] sm:$0xff] %v2880
  %2992 = vst [vmem:[#allocation3 + $0x68] sm:$0xff] %v2909
  %2993 = vst [vmem:[#allocation3 + $0x70] sm:$0xff] %v2938
  %2994 = vst [vmem:[#allocation3 + $0x78] sm:$0xff] %v2967
  %2995 = vst [vmem:[#allocation3 + $0x80] sm:$0xff] %v2883
  %2996 = vst [vmem:[#allocation3 + $0x88] sm:$0xff] %v2912
  %2997 = vst [vmem:[#allocation3 + $0x90] sm:$0xff] %v2941
  %2998 = vst [vmem:[#allocation3 + $0x98] sm:$0xff] %v2970
  %2999 = vst [vmem:[#allocation3 + $0xa0] sm:$0xff] %v2885
  %3000 = vst [vmem:[#allocation3 + $0xa8] sm:$0xff] %v2914
  %3001 = vst [vmem:[#allocation3 + $0xb0] sm:$0xff] %v2943
  %3002 = vst [vmem:[#allocation3 + $0xb8] sm:$0xff] %v2972
  %3003 = vst [vmem:[#allocation3 + $0xc0] sm:$0xff] %v2888
  %3004 = vst [vmem:[#allocation3 + $0xc8] sm:$0xff] %v2917
  %3005 = vst [vmem:[#allocation3 + $0xd0] sm:$0xff] %v2946
  %3006 = vst [vmem:[#allocation3 + $0xd8] sm:$0xff] %v2975
  %3007 = vst [vmem:[#allocation3 + $0xe0] sm:$0xff] %v2890
  %3008 = vst [vmem:[#allocation3 + $0xe8] sm:$0xff] %v2919
  %3009 = vst [vmem:[#allocation3 + $0xf0] sm:$0xff] %v2948
  %3010 = vst [vmem:[#allocation3 + $0xf8] sm:$0xff] %v2977
  %v3011 = vld [vmem:[#allocation3] sm:$0xff]
  %v3012 = vld [vmem:[#allocation3 + $0x8] sm:$0xff]
  %v3013 = vld [vmem:[#allocation3 + $0x10] sm:$0xff]
  %v3014 = vld [vmem:[#allocation3 + $0x18] sm:$0xff]
  %v3015 = vld [vmem:[%s5] sm:$0xff]
  %v3016 = vld [vmem:[%s5 + $0x8] sm:$0xff]
  %v3017 = vld [vmem:[%s5 + $0x10] sm:$0xff]
  %v3018 = vld [vmem:[%s5 + $0x18] sm:$0xff]
  %v3019 = vld [vmem:[%s5 + $0x20] sm:$0xff]
  %v3020 = vld [vmem:[%s5 + $0x28] sm:$0xff]
  %v3021 = vld [vmem:[%s5 + $0x30] sm:$0xff]
  %v3022 = vld [vmem:[%s5 + $0x38] sm:$0xff]
  %v3023 = vld [vmem:[%s5 + $0x40] sm:$0xff]
  %v3024 = vld [vmem:[%s5 + $0x48] sm:$0xff]
  %v3025 = vld [vmem:[%s5 + $0x50] sm:$0xff]
  %v3026 = vld [vmem:[%s5 + $0x58] sm:$0xff]
  %v3027 = vld [vmem:[%s5 + $0x60] sm:$0xff]
  %v3028 = vld [vmem:[%s5 + $0x68] sm:$0xff]
  %v3029 = vld [vmem:[%s5 + $0x70] sm:$0xff]
  %v3030 = vld [vmem:[%s5 + $0x78] sm:$0xff]
  %v3031 = vld [vmem:[%s5 + $0x80] sm:$0xff]
  %v3032 = vld [vmem:[%s5 + $0x88] sm:$0xff]
  %v3033 = vld [vmem:[%s5 + $0x90] sm:$0xff]
  %v3034 = vld [vmem:[%s5 + $0x98] sm:$0xff]
  %v3035 = vld [vmem:[%s5 + $0xa0] sm:$0xff]
  %v3036 = vld [vmem:[%s5 + $0xa8] sm:$0xff]
  %v3037 = vld [vmem:[%s5 + $0xb0] sm:$0xff]
  %v3038 = vld [vmem:[%s5 + $0xb8] sm:$0xff]
  %v3039 = vld [vmem:[%s5 + $0xc0] sm:$0xff]
  %v3040 = vld [vmem:[%s5 + $0xc8] sm:$0xff]
  %v3041 = vld [vmem:[%s5 + $0xd0] sm:$0xff]
  %v3042 = vld [vmem:[%s5 + $0xd8] sm:$0xff]
  %v3043 = vld [vmem:[%s5 + $0xe0] sm:$0xff]
  %v3044 = vld [vmem:[%s5 + $0xe8] sm:$0xff]
  %v3045 = vld [vmem:[%s5 + $0xf0] sm:$0xff]
  %v3046 = vld [vmem:[%s5 + $0xf8] sm:$0xff]
  %v3079 = vunpack.c.l.b16 %v3015
  %v3080 = vunpack.c.h.b16 %v3015
  %v3081 = vunpack.c.l.b16 %v3016
  %v3082 = vunpack.c.h.b16 %v3016
  %v3083 = vunpack.c.l.b16 %v3017
  %v3084 = vunpack.c.h.b16 %v3017
  %v3085 = vunpack.c.l.b16 %v3018
  %v3086 = vunpack.c.h.b16 %v3018
  %v3087 = vunpack.c.l.b16 %v3019
  %v3088 = vunpack.c.h.b16 %v3019
  %v3089 = vunpack.c.l.b16 %v3020
  %v3090 = vunpack.c.h.b16 %v3020
  %v3091 = vunpack.c.l.b16 %v3021
  %v3092 = vunpack.c.h.b16 %v3021
  %v3093 = vunpack.c.l.b16 %v3022
  %v3094 = vunpack.c.h.b16 %v3022
  %v3095 = vunpack.c.l.b16 %v3023
  %v3096 = vunpack.c.h.b16 %v3023
  %v3097 = vunpack.c.l.b16 %v3024
  %v3098 = vunpack.c.h.b16 %v3024
  %v3099 = vunpack.c.l.b16 %v3025
  %v3100 = vunpack.c.h.b16 %v3025
  %v3101 = vunpack.c.l.b16 %v3026
  %v3102 = vunpack.c.h.b16 %v3026
  %v3103 = vunpack.c.l.b16 %v3027
  %v3104 = vunpack.c.h.b16 %v3027
  %v3105 = vunpack.c.l.b16 %v3028
  %v3106 = vunpack.c.h.b16 %v3028
  %v3107 = vunpack.c.l.b16 %v3029
  %v3108 = vunpack.c.h.b16 %v3029
  %v3109 = vunpack.c.l.b16 %v3030
  %v3110 = vunpack.c.h.b16 %v3030
  %v3111 = vunpack.c.l.b16 %v3031
  %v3112 = vunpack.c.h.b16 %v3031
  %v3113 = vunpack.c.l.b16 %v3032
  %v3114 = vunpack.c.h.b16 %v3032
  %v3115 = vunpack.c.l.b16 %v3033
  %v3116 = vunpack.c.h.b16 %v3033
  %v3117 = vunpack.c.l.b16 %v3034
  %v3118 = vunpack.c.h.b16 %v3034
  %v3119 = vunpack.c.l.b16 %v3035
  %v3120 = vunpack.c.h.b16 %v3035
  %v3121 = vunpack.c.l.b16 %v3036
  %v3122 = vunpack.c.h.b16 %v3036
  %v3123 = vunpack.c.l.b16 %v3037
  %v3124 = vunpack.c.h.b16 %v3037
  %v3125 = vunpack.c.l.b16 %v3038
  %v3126 = vunpack.c.h.b16 %v3038
  %v3127 = vunpack.c.l.b16 %v3039
  %v3128 = vunpack.c.h.b16 %v3039
  %v3129 = vunpack.c.l.b16 %v3040
  %v3130 = vunpack.c.h.b16 %v3040
  %v3131 = vunpack.c.l.b16 %v3041
  %v3132 = vunpack.c.h.b16 %v3041
  %v3133 = vunpack.c.l.b16 %v3042
  %v3134 = vunpack.c.h.b16 %v3042
  %v3135 = vunpack.c.l.b16 %v3043
  %v3136 = vunpack.c.h.b16 %v3043
  %v3137 = vunpack.c.l.b16 %v3044
  %v3138 = vunpack.c.h.b16 %v3044
  %v3139 = vunpack.c.l.b16 %v3045
  %v3140 = vunpack.c.h.b16 %v3045
  %v3141 = vunpack.c.l.b16 %v3046
  %v3142 = vunpack.c.h.b16 %v3046
  %v3143 = vpack.c.b16 %v3083, %v3079
  %v3144 = vpack.c.b16 %v3084, %v3080
  %v3145 = vpack.c.b16 %v3085, %v3081
  %v3146 = vpack.c.b16 %v3086, %v3082
  %v3147 = vpack.c.b16 %v3091, %v3087
  %v3148 = vpack.c.b16 %v3092, %v3088
  %v3149 = vpack.c.b16 %v3093, %v3089
  %v3150 = vpack.c.b16 %v3094, %v3090
  %v3151 = vpack.c.b16 %v3099, %v3095
  %v3152 = vpack.c.b16 %v3100, %v3096
  %v3153 = vpack.c.b16 %v3101, %v3097
  %v3154 = vpack.c.b16 %v3102, %v3098
  %v3155 = vpack.c.b16 %v3107, %v3103
  %v3156 = vpack.c.b16 %v3108, %v3104
  %v3157 = vpack.c.b16 %v3109, %v3105
  %v3158 = vpack.c.b16 %v3110, %v3106
  %v3159 = vpack.c.b16 %v3115, %v3111
  %v3160 = vpack.c.b16 %v3116, %v3112
  %v3161 = vpack.c.b16 %v3117, %v3113
  %v3162 = vpack.c.b16 %v3118, %v3114
  %v3163 = vpack.c.b16 %v3123, %v3119
  %v3164 = vpack.c.b16 %v3124, %v3120
  %v3165 = vpack.c.b16 %v3125, %v3121
  %v3166 = vpack.c.b16 %v3126, %v3122
  %v3167 = vpack.c.b16 %v3131, %v3127
  %v3168 = vpack.c.b16 %v3132, %v3128
  %v3169 = vpack.c.b16 %v3133, %v3129
  %v3170 = vpack.c.b16 %v3134, %v3130
  %v3171 = vpack.c.b16 %v3139, %v3135
  %v3172 = vpack.c.b16 %v3140, %v3136
  %v3173 = vpack.c.b16 %v3141, %v3137
  %v3174 = vpack.c.b16 %v3142, %v3138
  %3207 = vmatpush.bf16.msra.mxu0 %v3171
  %3208 = vmatpush.bf16.msra.mxu0 %v3167
  %3209 = vmatpush.bf16.msra.mxu0 %v3163
  %3210 = vmatpush.bf16.msra.mxu0 %v3159
  %3211 = vmatpush.bf16.msra.mxu0 %v3155
  %3212 = vmatpush.bf16.msra.mxu0 %v3151
  %3213 = vmatpush.bf16.msra.mxu0 %v3147
  %3214 = vmatpush.bf16.msra.mxu0 %v3143
  %3215 = vmatmul.bf16.gmra.mxu0 0
  %v3216 = vpop.f32.mrf.mxu0
  %v3217 = vadd.f32 0.0, %v3216
  %v3218 = vpop.f32.mrf.mxu0
  %3219 = vdwg.mxu0
  %3220 = vmatpush.bf16.msra.mxu0 %v3172
  %3221 = vmatpush.bf16.msra.mxu0 %v3168
  %3222 = vmatpush.bf16.msra.mxu0 %v3164
  %3223 = vmatpush.bf16.msra.mxu0 %v3160
  %3224 = vmatpush.bf16.msra.mxu0 %v3156
  %3225 = vmatpush.bf16.msra.mxu0 %v3152
  %3226 = vmatpush.bf16.msra.mxu0 %v3148
  %3227 = vmatpush.bf16.msra.mxu0 %v3144
  %3228 = vmatmul.bf16.gmra.mxu0 0
  %v3229 = vpop.f32.mrf.mxu0
  %v3230 = vadd.f32 0.0, %v3229
  %v3231 = vpop.f32.mrf.mxu0
  %3232 = vdwg.mxu0
  %3233 = vmatpush.bf16.msra.mxu0 %v3173
  %3234 = vmatpush.bf16.msra.mxu0 %v3169
  %3235 = vmatpush.bf16.msra.mxu0 %v3165
  %3236 = vmatpush.bf16.msra.mxu0 %v3161
  %3237 = vmatpush.bf16.msra.mxu0 %v3157
  %3238 = vmatpush.bf16.msra.mxu0 %v3153
  %3239 = vmatpush.bf16.msra.mxu0 %v3149
  %3240 = vmatpush.bf16.msra.mxu0 %v3145
  %3241 = vmatmul.bf16.gmra.mxu0 0
  %v3242 = vpop.f32.mrf.mxu0
  %v3243 = vadd.f32 0.0, %v3242
  %v3244 = vpop.f32.mrf.mxu0
  %3245 = vdwg.mxu0
  %3246 = vmatpush.bf16.msra.mxu0 %v3174
  %3247 = vmatpush.bf16.msra.mxu0 %v3170
  %3248 = vmatpush.bf16.msra.mxu0 %v3166
  %3249 = vmatpush.bf16.msra.mxu0 %v3162
  %3250 = vmatpush.bf16.msra.mxu0 %v3158
  %3251 = vmatpush.bf16.msra.mxu0 %v3154
  %3252 = vmatpush.bf16.msra.mxu0 %v3150
  %3253 = vmatpush.bf16.msra.mxu0 %v3146
  %3254 = vmatmul.bf16.gmra.mxu0 0
  %v3255 = vpop.f32.mrf.mxu0
  %v3256 = vadd.f32 0.0, %v3255
  %v3257 = vpop.f32.mrf.mxu0
  %3258 = vdwg.mxu0
  %v3259 = vadd.f32 %v3011, %v3217
  %v3260 = vadd.f32 %v3012, %v3230
  %v3261 = vadd.f32 %v3013, %v3243
  %v3262 = vadd.f32 %v3014, %v3256
  %v3263 = vsub.f32 0.0, %v3259
  %v3264 = vmul.f32 %v3263, 1.442695
  %v3265 = vpow.pop %v3264
  %v3266 = vadd.f32 %v3265, 1.0
  %v3267 = vrcp.pop %v3266
  %v3268 = vsub.f32 0.0, %v3260
  %v3269 = vmul.f32 %v3268, 1.442695
  %v3270 = vpow.pop %v3269
  %v3271 = vadd.f32 %v3270, 1.0
  %v3272 = vrcp.pop %v3271
  %v3273 = vtanh.pop %v3261
  %v3274 = vsub.f32 0.0, %v3262
  %v3275 = vmul.f32 %v3274, 1.442695
  %v3276 = vpow.pop %v3275
  %v3277 = vadd.f32 %v3276, 1.0
  %v3278 = vrcp.pop %v3277
  %v3279 = vmul.f32 %v3272, 0.0
  %v3280 = vmul.f32 %v3267, %v3273
  %v3281 = vadd.f32 %v3279, %v3280
  %v3282 = vtanh.pop %v3281
  %v3283 = vmul.f32 %v3278, %v3282
  %v3284 = vld [vmem:[%s690] sm:$0xff]
  %v3285 = vld [vmem:[%s690 + $0x8] sm:$0xff]
  %v3286 = vld [vmem:[%s690 + $0x10] sm:$0xff]
  %v3287 = vld [vmem:[%s690 + $0x18] sm:$0xff]
  %v3288 = vpack.c.bf16 %v3283, %v3283
  %3289 = vmatpush.bf16.msra.mxu0 %v3171
  %3290 = vmatpush.bf16.msra.mxu0 %v3167
  %3291 = vmatpush.bf16.msra.mxu0 %v3163
  %3292 = vmatpush.bf16.msra.mxu0 %v3159
  %3293 = vmatpush.bf16.msra.mxu0 %v3155
  %3294 = vmatpush.bf16.msra.mxu0 %v3151
  %3295 = vmatpush.bf16.msra.mxu0 %v3147
  %3296 = vmatpush.bf16.msra.mxu0 %v3143
  %3297 = vmatmul.bf16.gmra.mxu0 %v3288
  %v3298 = vpop.f32.mrf.mxu0
  %v3299 = vadd.f32 0.0, %v3298
  %v3300 = vpop.f32.mrf.mxu0
  %3301 = vdwg.mxu0
  %3302 = vmatpush.bf16.msra.mxu0 %v3172
  %3303 = vmatpush.bf16.msra.mxu0 %v3168
  %3304 = vmatpush.bf16.msra.mxu0 %v3164
  %3305 = vmatpush.bf16.msra.mxu0 %v3160
  %3306 = vmatpush.bf16.msra.mxu0 %v3156
  %3307 = vmatpush.bf16.msra.mxu0 %v3152
  %3308 = vmatpush.bf16.msra.mxu0 %v3148
  %3309 = vmatpush.bf16.msra.mxu0 %v3144
  %3310 = vmatmul.bf16.gmra.mxu0 %v3288
  %v3311 = vpop.f32.mrf.mxu0
  %v3312 = vadd.f32 0.0, %v3311
  %v3313 = vpop.f32.mrf.mxu0
  %3314 = vdwg.mxu0
  %3315 = vmatpush.bf16.msra.mxu0 %v3173
  %3316 = vmatpush.bf16.msra.mxu0 %v3169
  %3317 = vmatpush.bf16.msra.mxu0 %v3165
  %3318 = vmatpush.bf16.msra.mxu0 %v3161
  %3319 = vmatpush.bf16.msra.mxu0 %v3157
  %3320 = vmatpush.bf16.msra.mxu0 %v3153
  %3321 = vmatpush.bf16.msra.mxu0 %v3149
  %3322 = vmatpush.bf16.msra.mxu0 %v3145
  %3323 = vmatmul.bf16.gmra.mxu0 %v3288
  %v3324 = vpop.f32.mrf.mxu0
  %v3325 = vadd.f32 0.0, %v3324
  %v3326 = vpop.f32.mrf.mxu0
  %3327 = vdwg.mxu0
  %3328 = vmatpush.bf16.msra.mxu0 %v3174
  %3329 = vmatpush.bf16.msra.mxu0 %v3170
  %3330 = vmatpush.bf16.msra.mxu0 %v3166
  %3331 = vmatpush.bf16.msra.mxu0 %v3162
  %3332 = vmatpush.bf16.msra.mxu0 %v3158
  %3333 = vmatpush.bf16.msra.mxu0 %v3154
  %3334 = vmatpush.bf16.msra.mxu0 %v3150
  %3335 = vmatpush.bf16.msra.mxu0 %v3146
  %3336 = vmatmul.bf16.gmra.mxu0 %v3288
  %v3337 = vpop.f32.mrf.mxu0
  %v3338 = vadd.f32 0.0, %v3337
  %v3339 = vpop.f32.mrf.mxu0
  %3340 = vdwg.mxu0
  %v3341 = vadd.f32 %v3284, %v3299
  %v3342 = vadd.f32 %v3285, %v3312
  %v3343 = vadd.f32 %v3286, %v3325
  %v3344 = vadd.f32 %v3287, %v3338
  %v3345 = vsub.f32 0.0, %v3341
  %v3346 = vmul.f32 %v3345, 1.442695
  %v3347 = vpow.pop %v3346
  %v3348 = vadd.f32 %v3347, 1.0
  %v3349 = vrcp.pop %v3348
  %v3350 = vsub.f32 0.0, %v3342
  %v3351 = vmul.f32 %v3350, 1.442695
  %v3352 = vpow.pop %v3351
  %v3353 = vadd.f32 %v3352, 1.0
  %v3354 = vrcp.pop %v3353
  %v3355 = vtanh.pop %v3343
  %v3356 = vsub.f32 0.0, %v3344
  %v3357 = vmul.f32 %v3356, 1.442695
  %v3358 = vpow.pop %v3357
  %v3359 = vadd.f32 %v3358, 1.0
  %v3360 = vrcp.pop %v3359
  %v3361 = vmul.f32 %v3354, %v3281
  %v3362 = vmul.f32 %v3349, %v3355
  %v3363 = vadd.f32 %v3361, %v3362
  %v3364 = vtanh.pop %v3363
  %v3365 = vmul.f32 %v3360, %v3364
  %v3366 = vld [vmem:[%s967] sm:$0xff]
  %v3367 = vld [vmem:[%s967 + $0x8] sm:$0xff]
  %v3368 = vld [vmem:[%s967 + $0x10] sm:$0xff]
  %v3369 = vld [vmem:[%s967 + $0x18] sm:$0xff]
  %v3370 = vpack.c.bf16 %v3365, %v3365
  %3371 = vmatpush.bf16.msra.mxu0 %v3171
  %3372 = vmatpush.bf16.msra.mxu0 %v3167
  %3373 = vmatpush.bf16.msra.mxu0 %v3163
  %3374 = vmatpush.bf16.msra.mxu0 %v3159
  %3375 = vmatpush.bf16.msra.mxu0 %v3155
  %3376 = vmatpush.bf16.msra.mxu0 %v3151
  %3377 = vmatpush.bf16.msra.mxu0 %v3147
  %3378 = vmatpush.bf16.msra.mxu0 %v3143
  %3379 = vmatmul.bf16.gmra.mxu0 %v3370
  %v3380 = vpop.f32.mrf.mxu0
  %v3381 = vadd.f32 0.0, %v3380
  %v3382 = vpop.f32.mrf.mxu0
  %3383 = vdwg.mxu0
  %3384 = vmatpush.bf16.msra.mxu0 %v3172
  %3385 = vmatpush.bf16.msra.mxu0 %v3168
  %3386 = vmatpush.bf16.msra.mxu0 %v3164
  %3387 = vmatpush.bf16.msra.mxu0 %v3160
  %3388 = vmatpush.bf16.msra.mxu0 %v3156
  %3389 = vmatpush.bf16.msra.mxu0 %v3152
  %3390 = vmatpush.bf16.msra.mxu0 %v3148
  %3391 = vmatpush.bf16.msra.mxu0 %v3144
  %3392 = vmatmul.bf16.gmra.mxu0 %v3370
  %v3393 = vpop.f32.mrf.mxu0
  %v3394 = vadd.f32 0.0, %v3393
  %v3395 = vpop.f32.mrf.mxu0
  %3396 = vdwg.mxu0
  %3397 = vmatpush.bf16.msra.mxu0 %v3173
  %3398 = vmatpush.bf16.msra.mxu0 %v3169
  %3399 = vmatpush.bf16.msra.mxu0 %v3165
  %3400 = vmatpush.bf16.msra.mxu0 %v3161
  %3401 = vmatpush.bf16.msra.mxu0 %v3157
  %3402 = vmatpush.bf16.msra.mxu0 %v3153
  %3403 = vmatpush.bf16.msra.mxu0 %v3149
  %3404 = vmatpush.bf16.msra.mxu0 %v3145
  %3405 = vmatmul.bf16.gmra.mxu0 %v3370
  %v3406 = vpop.f32.mrf.mxu0
  %v3407 = vadd.f32 0.0, %v3406
  %v3408 = vpop.f32.mrf.mxu0
  %3409 = vdwg.mxu0
  %3410 = vmatpush.bf16.msra.mxu0 %v3174
  %3411 = vmatpush.bf16.msra.mxu0 %v3170
  %3412 = vmatpush.bf16.msra.mxu0 %v3166
  %3413 = vmatpush.bf16.msra.mxu0 %v3162
  %3414 = vmatpush.bf16.msra.mxu0 %v3158
  %3415 = vmatpush.bf16.msra.mxu0 %v3154
  %3416 = vmatpush.bf16.msra.mxu0 %v3150
  %3417 = vmatpush.bf16.msra.mxu0 %v3146
  %3418 = vmatmul.bf16.gmra.mxu0 %v3370
  %v3419 = vpop.f32.mrf.mxu0
  %v3420 = vadd.f32 0.0, %v3419
  %v3421 = vpop.f32.mrf.mxu0
  %3422 = vdwg.mxu0
  %v3423 = vadd.f32 %v3366, %v3381
  %v3424 = vadd.f32 %v3367, %v3394
  %v3425 = vadd.f32 %v3368, %v3407
  %v3426 = vadd.f32 %v3369, %v3420
  %v3427 = vsub.f32 0.0, %v3423
  %v3428 = vmul.f32 %v3427, 1.442695
  %v3429 = vpow.pop %v3428
  %v3430 = vadd.f32 %v3429, 1.0
  %v3431 = vrcp.pop %v3430
  %v3432 = vsub.f32 0.0, %v3424
  %v3433 = vmul.f32 %v3432, 1.442695
  %v3434 = vpow.pop %v3433
  %v3435 = vadd.f32 %v3434, 1.0
  %v3436 = vrcp.pop %v3435
  %v3437 = vtanh.pop %v3425
  %v3438 = vsub.f32 0.0, %v3426
  %v3439 = vmul.f32 %v3438, 1.442695
  %v3440 = vpow.pop %v3439
  %v3441 = vadd.f32 %v3440, 1.0
  %v3442 = vrcp.pop %v3441
  %v3443 = vmul.f32 %v3436, %v3363
  %v3444 = vmul.f32 %v3431, %v3437
  %v3445 = vadd.f32 %v3443, %v3444
  %v3446 = vtanh.pop %v3445
  %v3447 = vmul.f32 %v3442, %v3446
  %v3448 = vld [vmem:[%s1244] sm:$0xff]
  %v3449 = vld [vmem:[%s1244 + $0x8] sm:$0xff]
  %v3450 = vld [vmem:[%s1244 + $0x10] sm:$0xff]
  %v3451 = vld [vmem:[%s1244 + $0x18] sm:$0xff]
  %v3452 = vpack.c.bf16 %v3447, %v3447
  %3453 = vmatpush.bf16.msra.mxu0 %v3171
  %3454 = vmatpush.bf16.msra.mxu0 %v3167
  %3455 = vmatpush.bf16.msra.mxu0 %v3163
  %3456 = vmatpush.bf16.msra.mxu0 %v3159
  %3457 = vmatpush.bf16.msra.mxu0 %v3155
  %3458 = vmatpush.bf16.msra.mxu0 %v3151
  %3459 = vmatpush.bf16.msra.mxu0 %v3147
  %3460 = vmatpush.bf16.msra.mxu0 %v3143
  %3461 = vmatmul.bf16.gmra.mxu0 %v3452
  %v3462 = vpop.f32.mrf.mxu0
  %v3463 = vadd.f32 0.0, %v3462
  %v3464 = vpop.f32.mrf.mxu0
  %3465 = vdwg.mxu0
  %3466 = vmatpush.bf16.msra.mxu0 %v3172
  %3467 = vmatpush.bf16.msra.mxu0 %v3168
  %3468 = vmatpush.bf16.msra.mxu0 %v3164
  %3469 = vmatpush.bf16.msra.mxu0 %v3160
  %3470 = vmatpush.bf16.msra.mxu0 %v3156
  %3471 = vmatpush.bf16.msra.mxu0 %v3152
  %3472 = vmatpush.bf16.msra.mxu0 %v3148
  %3473 = vmatpush.bf16.msra.mxu0 %v3144
  %3474 = vmatmul.bf16.gmra.mxu0 %v3452
  %v3475 = vpop.f32.mrf.mxu0
  %v3476 = vadd.f32 0.0, %v3475
  %v3477 = vpop.f32.mrf.mxu0
  %3478 = vdwg.mxu0
  %3479 = vmatpush.bf16.msra.mxu0 %v3173
  %3480 = vmatpush.bf16.msra.mxu0 %v3169
  %3481 = vmatpush.bf16.msra.mxu0 %v3165
  %3482 = vmatpush.bf16.msra.mxu0 %v3161
  %3483 = vmatpush.bf16.msra.mxu0 %v3157
  %3484 = vmatpush.bf16.msra.mxu0 %v3153
  %3485 = vmatpush.bf16.msra.mxu0 %v3149
  %3486 = vmatpush.bf16.msra.mxu0 %v3145
  %3487 = vmatmul.bf16.gmra.mxu0 %v3452
  %v3488 = vpop.f32.mrf.mxu0
  %v3489 = vadd.f32 0.0, %v3488
  %v3490 = vpop.f32.mrf.mxu0
  %3491 = vdwg.mxu0
  %3492 = vmatpush.bf16.msra.mxu0 %v3174
  %3493 = vmatpush.bf16.msra.mxu0 %v3170
  %3494 = vmatpush.bf16.msra.mxu0 %v3166
  %3495 = vmatpush.bf16.msra.mxu0 %v3162
  %3496 = vmatpush.bf16.msra.mxu0 %v3158
  %3497 = vmatpush.bf16.msra.mxu0 %v3154
  %3498 = vmatpush.bf16.msra.mxu0 %v3150
  %3499 = vmatpush.bf16.msra.mxu0 %v3146
  %3500 = vmatmul.bf16.gmra.mxu0 %v3452
  %v3501 = vpop.f32.mrf.mxu0
  %v3502 = vadd.f32 0.0, %v3501
  %v3503 = vpop.f32.mrf.mxu0
  %3504 = vdwg.mxu0
  %v3505 = vadd.f32 %v3448, %v3463
  %v3506 = vadd.f32 %v3449, %v3476
  %v3507 = vadd.f32 %v3450, %v3489
  %v3508 = vadd.f32 %v3451, %v3502
  %v3509 = vsub.f32 0.0, %v3505
  %v3510 = vmul.f32 %v3509, 1.442695
  %v3511 = vpow.pop %v3510
  %v3512 = vadd.f32 %v3511, 1.0
  %v3513 = vrcp.pop %v3512
  %v3514 = vsub.f32 0.0, %v3506
  %v3515 = vmul.f32 %v3514, 1.442695
  %v3516 = vpow.pop %v3515
  %v3517 = vadd.f32 %v3516, 1.0
  %v3518 = vrcp.pop %v3517
  %v3519 = vtanh.pop %v3507
  %v3520 = vsub.f32 0.0, %v3508
  %v3521 = vmul.f32 %v3520, 1.442695
  %v3522 = vpow.pop %v3521
  %v3523 = vadd.f32 %v3522, 1.0
  %v3524 = vrcp.pop %v3523
  %v3525 = vmul.f32 %v3518, %v3445
  %v3526 = vmul.f32 %v3513, %v3519
  %v3527 = vadd.f32 %v3525, %v3526
  %v3528 = vtanh.pop %v3527
  %v3529 = vmul.f32 %v3524, %v3528
  %v3530 = vld [vmem:[%s1521] sm:$0xff]
  %v3531 = vld [vmem:[%s1521 + $0x8] sm:$0xff]
  %v3532 = vld [vmem:[%s1521 + $0x10] sm:$0xff]
  %v3533 = vld [vmem:[%s1521 + $0x18] sm:$0xff]
  %v3534 = vpack.c.bf16 %v3529, %v3529
  %3535 = vmatpush.bf16.msra.mxu0 %v3171
  %3536 = vmatpush.bf16.msra.mxu0 %v3167
  %3537 = vmatpush.bf16.msra.mxu0 %v3163
  %3538 = vmatpush.bf16.msra.mxu0 %v3159
  %3539 = vmatpush.bf16.msra.mxu0 %v3155
  %3540 = vmatpush.bf16.msra.mxu0 %v3151
  %3541 = vmatpush.bf16.msra.mxu0 %v3147
  %3542 = vmatpush.bf16.msra.mxu0 %v3143
  %3543 = vmatmul.bf16.gmra.mxu0 %v3534
  %v3544 = vpop.f32.mrf.mxu0
  %v3545 = vadd.f32 0.0, %v3544
  %v3546 = vpop.f32.mrf.mxu0
  %3547 = vdwg.mxu0
  %3548 = vmatpush.bf16.msra.mxu0 %v3172
  %3549 = vmatpush.bf16.msra.mxu0 %v3168
  %3550 = vmatpush.bf16.msra.mxu0 %v3164
  %3551 = vmatpush.bf16.msra.mxu0 %v3160
  %3552 = vmatpush.bf16.msra.mxu0 %v3156
  %3553 = vmatpush.bf16.msra.mxu0 %v3152
  %3554 = vmatpush.bf16.msra.mxu0 %v3148
  %3555 = vmatpush.bf16.msra.mxu0 %v3144
  %3556 = vmatmul.bf16.gmra.mxu0 %v3534
  %v3557 = vpop.f32.mrf.mxu0
  %v3558 = vadd.f32 0.0, %v3557
  %v3559 = vpop.f32.mrf.mxu0
  %3560 = vdwg.mxu0
  %3561 = vmatpush.bf16.msra.mxu0 %v3173
  %3562 = vmatpush.bf16.msra.mxu0 %v3169
  %3563 = vmatpush.bf16.msra.mxu0 %v3165
  %3564 = vmatpush.bf16.msra.mxu0 %v3161
  %3565 = vmatpush.bf16.msra.mxu0 %v3157
  %3566 = vmatpush.bf16.msra.mxu0 %v3153
  %3567 = vmatpush.bf16.msra.mxu0 %v3149
  %3568 = vmatpush.bf16.msra.mxu0 %v3145
  %3569 = vmatmul.bf16.gmra.mxu0 %v3534
  %v3570 = vpop.f32.mrf.mxu0
  %v3571 = vadd.f32 0.0, %v3570
  %v3572 = vpop.f32.mrf.mxu0
  %3573 = vdwg.mxu0
  %3574 = vmatpush.bf16.msra.mxu0 %v3174
  %3575 = vmatpush.bf16.msra.mxu0 %v3170
  %3576 = vmatpush.bf16.msra.mxu0 %v3166
  %3577 = vmatpush.bf16.msra.mxu0 %v3162
  %3578 = vmatpush.bf16.msra.mxu0 %v3158
  %3579 = vmatpush.bf16.msra.mxu0 %v3154
  %3580 = vmatpush.bf16.msra.mxu0 %v3150
  %3581 = vmatpush.bf16.msra.mxu0 %v3146
  %3582 = vmatmul.bf16.gmra.mxu0 %v3534
  %v3583 = vpop.f32.mrf.mxu0
  %v3584 = vadd.f32 0.0, %v3583
  %v3585 = vpop.f32.mrf.mxu0
  %3586 = vdwg.mxu0
  %v3587 = vadd.f32 %v3530, %v3545
  %v3588 = vadd.f32 %v3531, %v3558
  %v3589 = vadd.f32 %v3532, %v3571
  %v3590 = vadd.f32 %v3533, %v3584
  %v3591 = vsub.f32 0.0, %v3587
  %v3592 = vmul.f32 %v3591, 1.442695
  %v3593 = vpow.pop %v3592
  %v3594 = vadd.f32 %v3593, 1.0
  %v3595 = vrcp.pop %v3594
  %v3596 = vsub.f32 0.0, %v3588
  %v3597 = vmul.f32 %v3596, 1.442695
  %v3598 = vpow.pop %v3597
  %v3599 = vadd.f32 %v3598, 1.0
  %v3600 = vrcp.pop %v3599
  %v3601 = vtanh.pop %v3589
  %v3602 = vsub.f32 0.0, %v3590
  %v3603 = vmul.f32 %v3602, 1.442695
  %v3604 = vpow.pop %v3603
  %v3605 = vadd.f32 %v3604, 1.0
  %v3606 = vrcp.pop %v3605
  %v3607 = vmul.f32 %v3600, %v3527
  %v3608 = vmul.f32 %v3595, %v3601
  %v3609 = vadd.f32 %v3607, %v3608
  %v3610 = vtanh.pop %v3609
  %v3611 = vmul.f32 %v3606, %v3610
  %v3612 = vld [vmem:[%s1798] sm:$0xff]
  %v3613 = vld [vmem:[%s1798 + $0x8] sm:$0xff]
  %v3614 = vld [vmem:[%s1798 + $0x10] sm:$0xff]
  %v3615 = vld [vmem:[%s1798 + $0x18] sm:$0xff]
  %v3616 = vpack.c.bf16 %v3611, %v3611
  %3617 = vmatpush.bf16.msra.mxu0 %v3171
  %3618 = vmatpush.bf16.msra.mxu0 %v3167
  %3619 = vmatpush.bf16.msra.mxu0 %v3163
  %3620 = vmatpush.bf16.msra.mxu0 %v3159
  %3621 = vmatpush.bf16.msra.mxu0 %v3155
  %3622 = vmatpush.bf16.msra.mxu0 %v3151
  %3623 = vmatpush.bf16.msra.mxu0 %v3147
  %3624 = vmatpush.bf16.msra.mxu0 %v3143
  %3625 = vmatmul.bf16.gmra.mxu0 %v3616
  %v3626 = vpop.f32.mrf.mxu0
  %v3627 = vadd.f32 0.0, %v3626
  %v3628 = vpop.f32.mrf.mxu0
  %3629 = vdwg.mxu0
  %3630 = vmatpush.bf16.msra.mxu0 %v3172
  %3631 = vmatpush.bf16.msra.mxu0 %v3168
  %3632 = vmatpush.bf16.msra.mxu0 %v3164
  %3633 = vmatpush.bf16.msra.mxu0 %v3160
  %3634 = vmatpush.bf16.msra.mxu0 %v3156
  %3635 = vmatpush.bf16.msra.mxu0 %v3152
  %3636 = vmatpush.bf16.msra.mxu0 %v3148
  %3637 = vmatpush.bf16.msra.mxu0 %v3144
  %3638 = vmatmul.bf16.gmra.mxu0 %v3616
  %v3639 = vpop.f32.mrf.mxu0
  %v3640 = vadd.f32 0.0, %v3639
  %v3641 = vpop.f32.mrf.mxu0
  %3642 = vdwg.mxu0
  %3643 = vmatpush.bf16.msra.mxu0 %v3173
  %3644 = vmatpush.bf16.msra.mxu0 %v3169
  %3645 = vmatpush.bf16.msra.mxu0 %v3165
  %3646 = vmatpush.bf16.msra.mxu0 %v3161
  %3647 = vmatpush.bf16.msra.mxu0 %v3157
  %3648 = vmatpush.bf16.msra.mxu0 %v3153
  %3649 = vmatpush.bf16.msra.mxu0 %v3149
  %3650 = vmatpush.bf16.msra.mxu0 %v3145
  %3651 = vmatmul.bf16.gmra.mxu0 %v3616
  %v3652 = vpop.f32.mrf.mxu0
  %v3653 = vadd.f32 0.0, %v3652
  %v3654 = vpop.f32.mrf.mxu0
  %3655 = vdwg.mxu0
  %3656 = vmatpush.bf16.msra.mxu0 %v3174
  %3657 = vmatpush.bf16.msra.mxu0 %v3170
  %3658 = vmatpush.bf16.msra.mxu0 %v3166
  %3659 = vmatpush.bf16.msra.mxu0 %v3162
  %3660 = vmatpush.bf16.msra.mxu0 %v3158
  %3661 = vmatpush.bf16.msra.mxu0 %v3154
  %3662 = vmatpush.bf16.msra.mxu0 %v3150
  %3663 = vmatpush.bf16.msra.mxu0 %v3146
  %3664 = vmatmul.bf16.gmra.mxu0 %v3616
  %v3665 = vpop.f32.mrf.mxu0
  %v3666 = vadd.f32 0.0, %v3665
  %v3667 = vpop.f32.mrf.mxu0
  %3668 = vdwg.mxu0
  %v3669 = vadd.f32 %v3612, %v3627
  %v3670 = vadd.f32 %v3613, %v3640
  %v3671 = vadd.f32 %v3614, %v3653
  %v3672 = vadd.f32 %v3615, %v3666
  %v3673 = vsub.f32 0.0, %v3669
  %v3674 = vmul.f32 %v3673, 1.442695
  %v3675 = vpow.pop %v3674
  %v3676 = vadd.f32 %v3675, 1.0
  %v3677 = vrcp.pop %v3676
  %v3678 = vsub.f32 0.0, %v3670
  %v3679 = vmul.f32 %v3678, 1.442695
  %v3680 = vpow.pop %v3679
  %v3681 = vadd.f32 %v3680, 1.0
  %v3682 = vrcp.pop %v3681
  %v3683 = vtanh.pop %v3671
  %v3684 = vsub.f32 0.0, %v3672
  %v3685 = vmul.f32 %v3684, 1.442695
  %v3686 = vpow.pop %v3685
  %v3687 = vadd.f32 %v3686, 1.0
  %v3688 = vrcp.pop %v3687
  %v3689 = vmul.f32 %v3682, %v3609
  %v3690 = vmul.f32 %v3677, %v3683
  %v3691 = vadd.f32 %v3689, %v3690
  %v3692 = vtanh.pop %v3691
  %v3693 = vmul.f32 %v3688, %v3692
  %v3694 = vld [vmem:[%s2075] sm:$0xff]
  %v3695 = vld [vmem:[%s2075 + $0x8] sm:$0xff]
  %v3696 = vld [vmem:[%s2075 + $0x10] sm:$0xff]
  %v3697 = vld [vmem:[%s2075 + $0x18] sm:$0xff]
  %v3698 = vpack.c.bf16 %v3693, %v3693
  %3699 = vmatpush.bf16.msra.mxu0 %v3171
  %3700 = vmatpush.bf16.msra.mxu0 %v3167
  %3701 = vmatpush.bf16.msra.mxu0 %v3163
  %3702 = vmatpush.bf16.msra.mxu0 %v3159
  %3703 = vmatpush.bf16.msra.mxu0 %v3155
  %3704 = vmatpush.bf16.msra.mxu0 %v3151
  %3705 = vmatpush.bf16.msra.mxu0 %v3147
  %3706 = vmatpush.bf16.msra.mxu0 %v3143
  %3707 = vmatmul.bf16.gmra.mxu0 %v3698
  %v3708 = vpop.f32.mrf.mxu0
  %v3709 = vadd.f32 0.0, %v3708
  %v3710 = vpop.f32.mrf.mxu0
  %3711 = vdwg.mxu0
  %3712 = vmatpush.bf16.msra.mxu0 %v3172
  %3713 = vmatpush.bf16.msra.mxu0 %v3168
  %3714 = vmatpush.bf16.msra.mxu0 %v3164
  %3715 = vmatpush.bf16.msra.mxu0 %v3160
  %3716 = vmatpush.bf16.msra.mxu0 %v3156
  %3717 = vmatpush.bf16.msra.mxu0 %v3152
  %3718 = vmatpush.bf16.msra.mxu0 %v3148
  %3719 = vmatpush.bf16.msra.mxu0 %v3144
  %3720 = vmatmul.bf16.gmra.mxu0 %v3698
  %v3721 = vpop.f32.mrf.mxu0
  %v3722 = vadd.f32 0.0, %v3721
  %v3723 = vpop.f32.mrf.mxu0
  %3724 = vdwg.mxu0
  %3725 = vmatpush.bf16.msra.mxu0 %v3173
  %3726 = vmatpush.bf16.msra.mxu0 %v3169
  %3727 = vmatpush.bf16.msra.mxu0 %v3165
  %3728 = vmatpush.bf16.msra.mxu0 %v3161
  %3729 = vmatpush.bf16.msra.mxu0 %v3157
  %3730 = vmatpush.bf16.msra.mxu0 %v3153
  %3731 = vmatpush.bf16.msra.mxu0 %v3149
  %3732 = vmatpush.bf16.msra.mxu0 %v3145
  %3733 = vmatmul.bf16.gmra.mxu0 %v3698
  %v3734 = vpop.f32.mrf.mxu0
  %v3735 = vadd.f32 0.0, %v3734
  %v3736 = vpop.f32.mrf.mxu0
  %3737 = vdwg.mxu0
  %3738 = vmatpush.bf16.msra.mxu0 %v3174
  %3739 = vmatpush.bf16.msra.mxu0 %v3170
  %3740 = vmatpush.bf16.msra.mxu0 %v3166
  %3741 = vmatpush.bf16.msra.mxu0 %v3162
  %3742 = vmatpush.bf16.msra.mxu0 %v3158
  %3743 = vmatpush.bf16.msra.mxu0 %v3154
  %3744 = vmatpush.bf16.msra.mxu0 %v3150
  %3745 = vmatpush.bf16.msra.mxu0 %v3146
  %3746 = vmatmul.bf16.gmra.mxu0 %v3698
  %v3747 = vpop.f32.mrf.mxu0
  %v3748 = vadd.f32 0.0, %v3747
  %v3749 = vpop.f32.mrf.mxu0
  %3750 = vdwg.mxu0
  %v3751 = vadd.f32 %v3694, %v3709
  %v3752 = vadd.f32 %v3695, %v3722
  %v3753 = vadd.f32 %v3696, %v3735
  %v3754 = vadd.f32 %v3697, %v3748
  %v3755 = vsub.f32 0.0, %v3751
  %v3756 = vmul.f32 %v3755, 1.442695
  %v3757 = vpow.pop %v3756
  %v3758 = vadd.f32 %v3757, 1.0
  %v3759 = vrcp.pop %v3758
  %v3760 = vsub.f32 0.0, %v3752
  %v3761 = vmul.f32 %v3760, 1.442695
  %v3762 = vpow.pop %v3761
  %v3763 = vadd.f32 %v3762, 1.0
  %v3764 = vrcp.pop %v3763
  %v3765 = vtanh.pop %v3753
  %v3766 = vsub.f32 0.0, %v3754
  %v3767 = vmul.f32 %v3766, 1.442695
  %v3768 = vpow.pop %v3767
  %v3769 = vadd.f32 %v3768, 1.0
  %v3770 = vrcp.pop %v3769
  %v3771 = vmul.f32 %v3764, %v3691
  %v3772 = vmul.f32 %v3759, %v3765
  %v3773 = vadd.f32 %v3771, %v3772
  %v3774 = vtanh.pop %v3773
  %v3775 = vmul.f32 %v3770, %v3774
  %v3776 = vld [vmem:[%s2352] sm:$0xff]
  %v3777 = vld [vmem:[%s2352 + $0x8] sm:$0xff]
  %v3778 = vld [vmem:[%s2352 + $0x10] sm:$0xff]
  %v3779 = vld [vmem:[%s2352 + $0x18] sm:$0xff]
  %v3780 = vpack.c.bf16 %v3775, %v3775
  %3781 = vmatpush.bf16.msra.mxu0 %v3171
  %3782 = vmatpush.bf16.msra.mxu0 %v3167
  %3783 = vmatpush.bf16.msra.mxu0 %v3163
  %3784 = vmatpush.bf16.msra.mxu0 %v3159
  %3785 = vmatpush.bf16.msra.mxu0 %v3155
  %3786 = vmatpush.bf16.msra.mxu0 %v3151
  %3787 = vmatpush.bf16.msra.mxu0 %v3147
  %3788 = vmatpush.bf16.msra.mxu0 %v3143
  %3789 = vmatmul.bf16.gmra.mxu0 %v3780
  %v3790 = vpop.f32.mrf.mxu0
  %v3791 = vadd.f32 0.0, %v3790
  %v3792 = vpop.f32.mrf.mxu0
  %3793 = vdwg.mxu0
  %3794 = vmatpush.bf16.msra.mxu0 %v3172
  %3795 = vmatpush.bf16.msra.mxu0 %v3168
  %3796 = vmatpush.bf16.msra.mxu0 %v3164
  %3797 = vmatpush.bf16.msra.mxu0 %v3160
  %3798 = vmatpush.bf16.msra.mxu0 %v3156
  %3799 = vmatpush.bf16.msra.mxu0 %v3152
  %3800 = vmatpush.bf16.msra.mxu0 %v3148
  %3801 = vmatpush.bf16.msra.mxu0 %v3144
  %3802 = vmatmul.bf16.gmra.mxu0 %v3780
  %v3803 = vpop.f32.mrf.mxu0
  %v3804 = vadd.f32 0.0, %v3803
  %v3805 = vpop.f32.mrf.mxu0
  %3806 = vdwg.mxu0
  %3807 = vmatpush.bf16.msra.mxu0 %v3173
  %3808 = vmatpush.bf16.msra.mxu0 %v3169
  %3809 = vmatpush.bf16.msra.mxu0 %v3165
  %3810 = vmatpush.bf16.msra.mxu0 %v3161
  %3811 = vmatpush.bf16.msra.mxu0 %v3157
  %3812 = vmatpush.bf16.msra.mxu0 %v3153
  %3813 = vmatpush.bf16.msra.mxu0 %v3149
  %3814 = vmatpush.bf16.msra.mxu0 %v3145
  %3815 = vmatmul.bf16.gmra.mxu0 %v3780
  %v3816 = vpop.f32.mrf.mxu0
  %v3817 = vadd.f32 0.0, %v3816
  %v3818 = vpop.f32.mrf.mxu0
  %3819 = vdwg.mxu0
  %3820 = vmatpush.bf16.msra.mxu0 %v3174
  %3821 = vmatpush.bf16.msra.mxu0 %v3170
  %3822 = vmatpush.bf16.msra.mxu0 %v3166
  %3823 = vmatpush.bf16.msra.mxu0 %v3162
  %3824 = vmatpush.bf16.msra.mxu0 %v3158
  %3825 = vmatpush.bf16.msra.mxu0 %v3154
  %3826 = vmatpush.bf16.msra.mxu0 %v3150
  %3827 = vmatpush.bf16.msra.mxu0 %v3146
  %3828 = vmatmul.bf16.gmra.mxu0 %v3780
  %v3829 = vpop.f32.mrf.mxu0
  %v3830 = vadd.f32 0.0, %v3829
  %v3831 = vpop.f32.mrf.mxu0
  %3832 = vdwg.mxu0
  %v3833 = vadd.f32 %v3776, %v3791
  %v3834 = vadd.f32 %v3777, %v3804
  %v3835 = vadd.f32 %v3778, %v3817
  %v3836 = vadd.f32 %v3779, %v3830
  %v3837 = vsub.f32 0.0, %v3833
  %v3838 = vmul.f32 %v3837, 1.442695
  %v3839 = vpow.pop %v3838
  %v3840 = vadd.f32 %v3839, 1.0
  %v3841 = vrcp.pop %v3840
  %v3842 = vsub.f32 0.0, %v3834
  %v3843 = vmul.f32 %v3842, 1.442695
  %v3844 = vpow.pop %v3843
  %v3845 = vadd.f32 %v3844, 1.0
  %v3846 = vrcp.pop %v3845
  %v3847 = vtanh.pop %v3835
  %v3848 = vsub.f32 0.0, %v3836
  %v3849 = vmul.f32 %v3848, 1.442695
  %v3850 = vpow.pop %v3849
  %v3851 = vadd.f32 %v3850, 1.0
  %v3852 = vrcp.pop %v3851
  %v3853 = vmul.f32 %v3846, %v3773
  %v3854 = vmul.f32 %v3841, %v3847
  %v3855 = vadd.f32 %v3853, %v3854
  %v3856 = vtanh.pop %v3855
  %v3857 = vmul.f32 %v3852, %v3856
  %v3858 = vld [vmem:[%s7] sm:$0xff]
  %v3859 = vld [vmem:[%s7 + $0x8] sm:$0xff]
  %v3860 = vld [vmem:[%s7 + $0x10] sm:$0xff]
  %v3861 = vld [vmem:[%s7 + $0x18] sm:$0xff]
  %v3862 = vld [vmem:[%s7 + $0x20] sm:$0xff]
  %v3863 = vld [vmem:[%s7 + $0x28] sm:$0xff]
  %v3864 = vld [vmem:[%s7 + $0x30] sm:$0xff]
  %v3865 = vld [vmem:[%s7 + $0x38] sm:$0xff]
  %v3866 = vld [vmem:[%s7 + $0x40] sm:$0xff]
  %v3867 = vld [vmem:[%s7 + $0x48] sm:$0xff]
  %v3868 = vld [vmem:[%s7 + $0x50] sm:$0xff]
  %v3869 = vld [vmem:[%s7 + $0x58] sm:$0xff]
  %v3870 = vld [vmem:[%s7 + $0x60] sm:$0xff]
  %v3871 = vld [vmem:[%s7 + $0x68] sm:$0xff]
  %v3872 = vld [vmem:[%s7 + $0x70] sm:$0xff]
  %v3873 = vld [vmem:[%s7 + $0x78] sm:$0xff]
  %v3874 = vld [vmem:[%s8] sm:$0x1]
  %v3876 = vperm.slane %v3874, 0
  %3878 = vmatpush.msra.mxu0 %v3873
  %3879 = vmatpush.msra.mxu0 %v3872
  %3880 = vmatpush.msra.mxu0 %v3871
  %3881 = vmatpush.msra.mxu0 %v3870
  %3882 = vmatpush.msra.mxu0 %v3869
  %3883 = vmatpush.msra.mxu0 %v3868
  %3884 = vmatpush.msra.mxu0 %v3867
  %3885 = vmatpush.msra.mxu0 %v3866
  %3886 = vmatpush.msra.mxu0 %v3865
  %3887 = vmatpush.msra.mxu0 %v3864
  %3888 = vmatpush.msra.mxu0 %v3863
  %3889 = vmatpush.msra.mxu0 %v3862
  %3890 = vmatpush.msra.mxu0 %v3861
  %3891 = vmatpush.msra.mxu0 %v3860
  %3892 = vmatpush.msra.mxu0 %v3859
  %3893 = vmatpush.msra.mxu0 %v3858
  %3894 = vmatmul.f32.gmra.mxu0 %v3857
  %v3895 = vpop.f32.mrf.mxu0
  %v3896 = vadd.f32 %v3876, %v3895
  %3897 = vdwg.mxu0
  %3898 = vst [vmem:[%s9] sm:$0xff] %v3896
  // Predicated region
  $region38: #{lstm_model_forward.1} parent=0 // pred_check
    _
  $region39: #{lstm_model_forward.1} parent=0 // pred_check_branch
    %3900 = sbr.rel (0) target = $region41
  $region40: #{lstm_model_forward.1} parent=0 // pred_region
    _
  $region41: #{lstm_model_forward.1} parent=0 // pred_fallthru
    _
  // Predicated region
  $region42: #{lstm_model_forward.1} parent=0 // pred_check
    _
  $region43: #{lstm_model_forward.1} parent=0 // pred_check_branch
    %3902 = sbr.rel (0) target = $region45
  $region44: #{lstm_model_forward.1} parent=0 // pred_region
    _
  $region45: #{lstm_model_forward.1} parent=0 // pred_fallthru
    _

</llo_original>
